<compile_context>
chip_gen: v6e
topology: v6e:2x2x1
jax: 0.10.0
libtpu: 0.0.40
codegen_flags: <defaults>
</compile_context>

<pallas_src>
import numpy as np
import jax
import jax.numpy as jnp
from jax.experimental import pallas as pl
from jax.experimental.pallas import tpu as pltpu

DEPTH = 2          # self.depth
XS = 1             # in_channels of first conv
YS = 10            # output classes
HS = 25            # hidden channels
L = 40             # sequence length (forced by linear_in = hs * 40)
F = L * HS         # 1000 = flattened feature width (t-major, c-minor)
FP = 1024          # lane-padded feature width  (multiple of 128)
YP = 128           # lane-padded output width


# ------------------------------- kernel -------------------------------------

def cnn_kernel(x_ref, w1_ref, b1_ref, wc_ref, bc_ref, wl_ref, bl_ref, out_ref):
    """Entire forward pass; every layer is one lane-dense MXU matmul.

    x_ref  : (B, L)          f32 input
    w1_ref : (L, FP)         banded first-conv matrix
    b1_ref : (1, FP)
    wc_ref : (DEPTH, FP, FP) banded hidden-conv matrices
    bc_ref : (DEPTH, 1, FP)
    wl_ref : (FP, YP)        permuted + padded linear weight
    bl_ref : (1, YP)
    out_ref: (B, YP)         lane-dense output (padding sliced off in wrapper)
    """
    h = jnp.dot(x_ref[...], w1_ref[...], preferred_element_type=jnp.float32)
    h = jnp.maximum(h + b1_ref[...], 0.0)
    for u in range(DEPTH):                      # static unroll (DEPTH is small)
        h = jnp.dot(h, wc_ref[u], preferred_element_type=jnp.float32)
        h = jnp.maximum(h + bc_ref[u], 0.0)
    out_ref[...] = (jnp.dot(h, wl_ref[...], preferred_element_type=jnp.float32)
                    + bl_ref[...])


def cnn_forward(x, params):
    """x: (..., L) float32 (PyTorch forward views input to (-1, 1, L))."""
    assert x.shape[-1] == L, f"trailing dim must be {L}, got {x.shape[-1]}"
    x2 = x.reshape(-1, L).astype(jnp.float32)
    B = x2.shape[0]
    vmem = pl.BlockSpec(memory_space=pltpu.MemorySpace.VMEM)

    flops = 2 * B * (L * FP + DEPTH * FP * FP + FP * YP)
    bytes_accessed = 4 * (x2.size + L * FP + FP + DEPTH * (FP * FP + FP)
                          + FP * YP + YP + B * YP)

    out = pl.pallas_call(
        cnn_kernel,
        out_shape=jax.ShapeDtypeStruct((B, YP), jnp.float32),
        in_specs=[vmem] * 7,
        out_specs=vmem,
        compiler_params=pltpu.CompilerParams(vmem_limit_bytes=32 * 1024 * 1024),
        cost_estimate=pl.CostEstimate(flops=flops, transcendentals=0,
                                      bytes_accessed=bytes_accessed),
    )(x2, params["w1"], params["b1"], params["wc"], params["bc"],
      params["wl"], params["bl"])
    return out[:, :YS]                           # strip lane padding


# ------------------------ parameter setup (glue) ----------------------------

def _banded_first(w1, b1):
    """First conv (Cin=1) as banded matrix: out[t*HS+c] = sum_k w1[c,0,k]*x[t+k-1]."""
    w = np.asarray(w1, np.float32)               # (HS, 1, 3)
    W = np.zeros((L, FP), np.float32)
    for t in range(L):
        for k in (-1, 0, 1):
            ti = t + k
            if 0 <= ti < L:
                W[ti, t * HS:(t + 1) * HS] = w[:, 0, k + 1]
    bias = np.zeros((1, FP), np.float32)
    bias[0, :F] = np.tile(np.asarray(b1, np.float32), L)   # bias[t*HS+c] = b1[c]
    return jnp.asarray(W), jnp.asarray(bias)


def _banded_hidden(wc, bc):
    """Hidden conv as banded matrix: W[ti*HS+cin, t*HS+cout] = w[cout,cin,ti-t+1]."""
    w = np.asarray(wc, np.float32)               # (HS, HS, 3) [out, in, k]
    W = np.zeros((FP, FP), np.float32)
    for t in range(L):
        for k in (-1, 0, 1):
            ti = t + k
            if 0 <= ti < L:
                W[ti * HS:(ti + 1) * HS, t * HS:(t + 1) * HS] = w[:, :, k + 1].T
    bias = np.zeros((1, FP), np.float32)
    bias[0, :F] = np.tile(np.asarray(bc, np.float32), L)
    return jnp.asarray(W), jnp.asarray(bias)


def _linear_permuted(lw, lb):
    """Linear weight: torch flatten index is c*L+t; kernel uses t*HS+c. Pad to (FP, YP)."""
    w = np.asarray(lw, np.float32).reshape(YS, HS, L)        # [y, c, t]
    wp = np.transpose(w, (2, 1, 0)).reshape(F, YS)           # row index = t*HS + c
    W = np.zeros((FP, YP), np.float32)
    W[:F, :YS] = wp                                          # zero padding rows/cols
    bias = np.zeros((1, YP), np.float32)
    bias[0, :YS] = np.asarray(lb, np.float32)
    return jnp.asarray(W), jnp.asarray(bias)


def init_params(key):
    """Deterministic synthetic weights in PyTorch layouts, then folded for kernel."""
    ks = jax.random.split(key, 4 + 2 * DEPTH)
    scale = 0.1
    # PyTorch-layout tensors
    w1 = scale * jax.random.normal(ks[0], (HS, XS, 3), jnp.float32)      # (out,in,k)
    b1 = scale * jax.random.normal(ks[1], (HS,), jnp.float32)
    wcs = [scale * jax.random.normal(ks[2 + 2 * u], (HS, HS, 3), jnp.float32)
           for u in range(DEPTH)]
    bcs = [scale * jax.random.normal(ks[3 + 2 * u], (HS,), jnp.float32)
           for u in range(DEPTH)]
    lw = scale * jax.random.normal(ks[2 + 2 * DEPTH], (YS, HS * L), jnp.float32)
    lb = scale * jax.random.normal(ks[3 + 2 * DEPTH], (YS,), jnp.float32)

    # Kernel-layout (banded + lane-padded) tensors
    w1_b, b1_b = _banded_first(w1, b1)
    hid = [_banded_hidden(w, b) for w, b in zip(wcs, bcs)]
    wc_b = jnp.stack([h[0] for h in hid], axis=0)            # (DEPTH, FP, FP)
    bc_b = jnp.stack([h[1] for h in hid], axis=0)            # (DEPTH, 1, FP)
    wl_b, bl_b = _linear_permuted(lw, lb)

    params = dict(w1=w1_b, b1=b1_b, wc=wc_b, bc=bc_b, wl=wl_b, bl=bl_b)
    torch_layout = dict(w1=w1, b1=b1, wcs=wcs, bcs=bcs, lw=lw, lb=lb)
    return params, torch_layout


def reference_forward(x, p):
    """Pure-JAX replica of the PyTorch forward (NCW conv) for validation."""
    xr = x.reshape(-1, 1, x.shape[-1])                        # (B, 1, L)

    def conv1d_same(h, w, b):
        out = jax.lax.conv_general_dilated(
            h, w, window_strides=(1,), padding=[(1, 1)],
            dimension_numbers=("NCH", "OIH", "NCH"))
        return jax.nn.relu(out + b[None, :, None])

    h = conv1d_same(xr, p["w1"], p["b1"])
    for u in range(DEPTH):
        h = conv1d_same(h, p["wcs"][u], p["bcs"][u])
    flat = h.reshape(h.shape[0], -1)                          # channel-major flatten
    return flat @ p["lw"].T + p["lb"]


if __name__ == "__main__":
    key = jax.random.PRNGKey(0)
    kx, kp = jax.random.split(key)
    B = 2
    x = jax.random.normal(kx, (B, L), jnp.float32)            # forward views to (B,1,L)

    params, torch_p = init_params(kp)

    out = cnn_forward(x, params)
    out = jax.block_until_ready(out)

    ref = reference_forward(x, torch_p)
    assert out.shape == (B, YS)
    assert jnp.allclose(out, ref, rtol=1e-4, atol=1e-4), (
        f"max abs err {jnp.max(jnp.abs(out - ref))}")

    print("KERNEL_OK")
</pallas_src>

<mosaic_0001>
module attributes {stable_mosaic.version = 11 : i64} {
  func.func @cnn_kernel(%arg0: memref<2x40xf32, #tpu.memory_space<vmem>>, %arg1: memref<40x1024xf32, #tpu.memory_space<vmem>>, %arg2: memref<1x1024xf32, #tpu.memory_space<vmem>>, %arg3: memref<2x1024x1024xf32, #tpu.memory_space<vmem>>, %arg4: memref<2x1x1024xf32, #tpu.memory_space<vmem>>, %arg5: memref<1024x128xf32, #tpu.memory_space<vmem>>, %arg6: memref<1x128xf32, #tpu.memory_space<vmem>>, %arg7: memref<2x128xf32, #tpu.memory_space<vmem>>) attributes {dimension_semantics = [], scalar_prefetch = 0 : i64, scratch_operands = 0 : i64, tpu.core_type = #tpu.core_type<tc>} {
    %c0 = arith.constant 0 : index
    %c0_0 = arith.constant 0 : index
    %0 = vector.load %arg0[%c0, %c0_0] : memref<2x40xf32, #tpu.memory_space<vmem>>, vector<2x40xf32>
    %c0_1 = arith.constant 0 : index
    %c0_2 = arith.constant 0 : index
    %1 = vector.load %arg1[%c0_1, %c0_2] : memref<40x1024xf32, #tpu.memory_space<vmem>>, vector<40x1024xf32>
    %cst = arith.constant dense<0.000000e+00> : vector<2x1024xf32>
    %2 = tpu.matmul %0, %1, %cst {dimension_numbers = #tpu.dot_dimension_numbers<[1], [0], [0], [1], [0, 0, 1, 1], [], []>} : vector<2x40xf32>, vector<40x1024xf32>, vector<2x1024xf32> -> vector<2x1024xf32>
    %c0_3 = arith.constant 0 : index
    %c0_4 = arith.constant 0 : index
    %3 = vector.load %arg2[%c0_3, %c0_4] : memref<1x1024xf32, #tpu.memory_space<vmem>>, vector<1x1024xf32>
    %4 = vector.broadcast %3 : vector<1x1024xf32> to vector<2x1024xf32>
    %5 = arith.addf %2, %4 : vector<2x1024xf32>
    %cst_5 = arith.constant 0.000000e+00 : f32
    %6 = vector.broadcast %cst_5 : f32 to vector<2x1024xf32>
    %7 = arith.maximumf %5, %6 : vector<2x1024xf32>
    %c0_6 = arith.constant 0 : index
    %c0_7 = arith.constant 0 : index
    %c0_8 = arith.constant 0 : index
    %8 = vector.load %arg3[%c0_6, %c0_7, %c0_8] : memref<2x1024x1024xf32, #tpu.memory_space<vmem>>, vector<1x1024x1024xf32>
    %9 = vector.shape_cast %8 : vector<1x1024x1024xf32> to vector<1024x1024xf32>
    %cst_9 = arith.constant dense<0.000000e+00> : vector<2x1024xf32>
    %10 = tpu.matmul %7, %9, %cst_9 {dimension_numbers = #tpu.dot_dimension_numbers<[1], [0], [0], [1], [0, 0, 1, 1], [], []>} : vector<2x1024xf32>, vector<1024x1024xf32>, vector<2x1024xf32> -> vector<2x1024xf32>
    %c0_10 = arith.constant 0 : index
    %c0_11 = arith.constant 0 : index
    %c0_12 = arith.constant 0 : index
    %11 = vector.load %arg4[%c0_10, %c0_11, %c0_12] : memref<2x1x1024xf32, #tpu.memory_space<vmem>>, vector<1x1x1024xf32>
    %12 = vector.shape_cast %11 : vector<1x1x1024xf32> to vector<1x1024xf32>
    %13 = vector.broadcast %12 : vector<1x1024xf32> to vector<2x1024xf32>
    %14 = arith.addf %10, %13 : vector<2x1024xf32>
    %cst_13 = arith.constant 0.000000e+00 : f32
    %15 = vector.broadcast %cst_13 : f32 to vector<2x1024xf32>
    %16 = arith.maximumf %14, %15 : vector<2x1024xf32>
    %c1 = arith.constant 1 : index
    %c0_14 = arith.constant 0 : index
    %c0_15 = arith.constant 0 : index
    %17 = vector.load %arg3[%c1, %c0_14, %c0_15] : memref<2x1024x1024xf32, #tpu.memory_space<vmem>>, vector<1x1024x1024xf32>
    %18 = vector.shape_cast %17 : vector<1x1024x1024xf32> to vector<1024x1024xf32>
    %cst_16 = arith.constant dense<0.000000e+00> : vector<2x1024xf32>
    %19 = tpu.matmul %16, %18, %cst_16 {dimension_numbers = #tpu.dot_dimension_numbers<[1], [0], [0], [1], [0, 0, 1, 1], [], []>} : vector<2x1024xf32>, vector<1024x1024xf32>, vector<2x1024xf32> -> vector<2x1024xf32>
    %c1_17 = arith.constant 1 : index
    %c0_18 = arith.constant 0 : index
    %c0_19 = arith.constant 0 : index
    %20 = vector.load %arg4[%c1_17, %c0_18, %c0_19] : memref<2x1x1024xf32, #tpu.memory_space<vmem>>, vector<1x1x1024xf32>
    %21 = vector.shape_cast %20 : vector<1x1x1024xf32> to vector<1x1024xf32>
    %22 = vector.broadcast %21 : vector<1x1024xf32> to vector<2x1024xf32>
    %23 = arith.addf %19, %22 : vector<2x1024xf32>
    %cst_20 = arith.constant 0.000000e+00 : f32
    %24 = vector.broadcast %cst_20 : f32 to vector<2x1024xf32>
    %25 = arith.maximumf %23, %24 : vector<2x1024xf32>
    %c0_21 = arith.constant 0 : index
    %c0_22 = arith.constant 0 : index
    %26 = vector.load %arg5[%c0_21, %c0_22] : memref<1024x128xf32, #tpu.memory_space<vmem>>, vector<1024x128xf32>
    %cst_23 = arith.constant dense<0.000000e+00> : vector<2x128xf32>
    %27 = tpu.matmul %25, %26, %cst_23 {dimension_numbers = #tpu.dot_dimension_numbers<[1], [0], [0], [1], [0, 0, 1, 1], [], []>} : vector<2x1024xf32>, vector<1024x128xf32>, vector<2x128xf32> -> vector<2x128xf32>
    %c0_24 = arith.constant 0 : index
    %c0_25 = arith.constant 0 : index
    %28 = vector.load %arg6[%c0_24, %c0_25] : memref<1x128xf32, #tpu.memory_space<vmem>>, vector<1x128xf32>
    %29 = vector.broadcast %28 : vector<1x128xf32> to vector<2x128xf32>
    %30 = arith.addf %27, %29 : vector<2x128xf32>
    %c0_26 = arith.constant 0 : index
    %c0_27 = arith.constant 0 : index
    %31 = vector.load %arg7[%c0_26, %c0_27] : memref<2x128xf32, #tpu.memory_space<vmem>>, vector<2x128xf32>
    tpu.vector_store %arg7[%c0_26, %c0_27], %30 {strides = array<i32>} : memref<2x128xf32, #tpu.memory_space<vmem>>, vector<2x128xf32>,
    return
  }
}

</mosaic_0001>

<llo_original>
// kernel: tpu_custom_call.1
$region0: #{tpu_custom_call.1}
  #allocation0 [shape = 'u32[]', space=smem, size = 0x4, offset = 0x4, fixed_abs, tag = 'smem constant byte address 0x4 - core index']
  #allocation1 [shape = 'u32[144,128]{1,0:T(1,128)}', space=vmem, size = 0x12000, scoped, tag = 'internal scratch']
  %s0 = inlined_call_operand.hbm [shape: f32[2,40], index: 0, kind: input, shape index: {}]
  %s1 = inlined_call_operand.hbm [shape: f32[40,1024], index: 1, kind: input, shape index: {}]
  %s2 = inlined_call_operand.hbm [shape: f32[1,1024], index: 2, kind: input, shape index: {}]
  %s3 = inlined_call_operand.hbm [shape: f32[2,1024,1024], index: 3, kind: input, shape index: {}]
  %s4 = inlined_call_operand.hbm [shape: f32[2,1,1024], index: 4, kind: input, shape index: {}]
  %s5 = inlined_call_operand.hbm [shape: f32[1024,128], index: 5, kind: input, shape index: {}]
  %s6 = inlined_call_operand.hbm [shape: f32[1,128], index: 6, kind: input, shape index: {}]
  %s7 = inlined_call_operand.hbm [shape: f32[2,128], index: 7, kind: output, shape index: {}]
  %s8 = sld [smem:[#allocation0]]
  $region66: #{tpu_custom_call.1} parent=0
    _
  %s10 = ssub.s32 1, %s8
  %s11 = scalar_select 0, %s10, %s8
  $region1: #{tpu_custom_call.1} parent=0
    #allocation2 [shape = 'u8[1024]{0}', space=vmem, size = 0x400, scoped, tag = 'input window, operand 0, single buffered']
    #allocation3 [shape = 's32[1]{0}', space=sflag, size = 0x4, scoped, tag = 'scoped memory for tpu_custom_call.1']
    #allocation4 [shape = 's32[1]{0}', space=sflag, size = 0x4, scoped, tag = 'scoped memory for tpu_custom_call.1']
    #allocation5 [shape = 'u8[163840]{0}', space=vmem, size = 0x28000, scoped, tag = 'input window, operand 1, single buffered']
    #allocation6 [shape = 's32[1]{0}', space=sflag, size = 0x4, scoped, tag = 'scoped memory for tpu_custom_call.1']
    #allocation7 [shape = 'u8[4096]{0}', space=vmem, size = 0x1000, scoped, tag = 'input window, operand 2, single buffered']
    #allocation8 [shape = 'u8[8388608]{0}', space=vmem, size = 0x800000, scoped, tag = 'input window, operand 3, single buffered']
    #allocation9 [shape = 's32[1]{0}', space=sflag, size = 0x4, scoped, tag = 'scoped memory for tpu_custom_call.1']
    #allocation10 [shape = 'u8[8192]{0}', space=vmem, size = 0x2000, scoped, tag = 'input window, operand 4, single buffered']
    #allocation11 [shape = 'u8[524288]{0}', space=vmem, size = 0x80000, scoped, tag = 'input window, operand 5, single buffered']
    #allocation12 [shape = 's32[1]{0}', space=sflag, size = 0x4, scoped, tag = 'scoped memory for tpu_custom_call.1']
    #allocation13 [shape = 'u8[512]{0}', space=vmem, size = 0x400, scoped, tag = 'input window, operand 6, single buffered']
    #allocation14 [shape = 'u8[1024]{0}', space=vmem, size = 0x400, scoped, tag = 'output window, operand 0, single buffered']
    %12 = vsyncpa [#allocation3], 0
    %13 = vsyncpa [#allocation6], 0
    %14 = vsyncpa [#allocation9], 0
    %15 = vsyncpa [#allocation12], 0
    %16 = vsyncpa [#allocation4], 0
    // Predicated region
    $region2: #{tpu_custom_call.1} parent=1 // pred_check
      _
    $region3: #{tpu_custom_call.1} parent=1 // pred_check_branch
      %18 = sbr.rel (0) target = $region5
    $region4: #{tpu_custom_call.1} parent=1 // pred_region
      %s20 = ssub.s32 32, 32
      %21 = vsyncadd [#allocation3], %s20
      %s23 = sshll.u32 [#allocation2], 4
      %s24 = int_to_ptr.vmem [resolvable:$true] %s23
      %26 = dma.hbm_to_vmem [thread:$0]  %s0, 32, %s24, [#allocation3]
    $region5: #{tpu_custom_call.1} parent=1 // pred_fallthru
      _
    // Predicated region
    $region6: #{tpu_custom_call.1} parent=1 // pred_check
      _
    $region7: #{tpu_custom_call.1} parent=1 // pred_check_branch
      %28 = sbr.rel (0) target = $region9
    $region8: #{tpu_custom_call.1} parent=1 // pred_region
      %s30 = ssub.s32 5120, 5120
      %31 = vsyncadd [#allocation6], %s30
      %s32 = sshll.u32 [#allocation5], 4
      %s33 = int_to_ptr.vmem [resolvable:$true] %s32
      %38 = dma.hbm_to_vmem [thread:$0]  %s1, 5120, %s33, [#allocation6], 1024, 1024, 64
    $region9: #{tpu_custom_call.1} parent=1 // pred_fallthru
      _
    // Predicated region
    $region10: #{tpu_custom_call.1} parent=1 // pred_check
      _
    $region11: #{tpu_custom_call.1} parent=1 // pred_check_branch
      %40 = sbr.rel (0) target = $region13
    $region12: #{tpu_custom_call.1} parent=1 // pred_region
      %s42 = ssub.s32 128, 128
      %43 = vsyncadd [#allocation6], %s42
      %s45 = sshll.u32 [#allocation7], 4
      %s46 = int_to_ptr.vmem [resolvable:$true] %s45
      %48 = dma.hbm_to_vmem [thread:$0]  %s2, 128, %s46, [#allocation6]
    $region13: #{tpu_custom_call.1} parent=1 // pred_fallthru
      _
    // Predicated region
    $region14: #{tpu_custom_call.1} parent=1 // pred_check
      _
    $region15: #{tpu_custom_call.1} parent=1 // pred_check_branch
      %50 = sbr.rel (0) target = $region17
    $region16: #{tpu_custom_call.1} parent=1 // pred_region
      %s52 = ssub.s32 262144, 262144
      %53 = vsyncadd [#allocation9], %s52
      %s54 = sshll.u32 [#allocation8], 4
      %s55 = int_to_ptr.vmem [resolvable:$true] %s54
      %60 = dma.hbm_to_vmem [thread:$0]  %s3, 262144, %s55, [#allocation9], 1024, 1024, 64
    $region17: #{tpu_custom_call.1} parent=1 // pred_fallthru
      _
    // Predicated region
    $region18: #{tpu_custom_call.1} parent=1 // pred_check
      _
    $region19: #{tpu_custom_call.1} parent=1 // pred_check_branch
      %62 = sbr.rel (0) target = $region21
    $region20: #{tpu_custom_call.1} parent=1 // pred_region
      %s64 = ssub.s32 256, 256
      %65 = vsyncadd [#allocation9], %s64
      %s66 = sshll.u32 [#allocation10], 4
      %s67 = int_to_ptr.vmem [resolvable:$true] %s66
      %72 = dma.hbm_to_vmem [thread:$0]  %s4, 256, %s67, [#allocation9], 128, 128, 8
    $region21: #{tpu_custom_call.1} parent=1 // pred_fallthru
      _
    // Predicated region
    $region22: #{tpu_custom_call.1} parent=1 // pred_check
      _
    $region23: #{tpu_custom_call.1} parent=1 // pred_check_branch
      %74 = sbr.rel (0) target = $region25
    $region24: #{tpu_custom_call.1} parent=1 // pred_region
      %s76 = ssub.s32 16384, 16384
      %77 = vsyncadd [#allocation12], %s76
      %s78 = sshll.u32 [#allocation11], 4
      %s79 = int_to_ptr.vmem [resolvable:$true] %s78
      %84 = dma.hbm_to_vmem [thread:$0]  %s5, 16384, %s79, [#allocation12], 128, 128, 8
    $region25: #{tpu_custom_call.1} parent=1 // pred_fallthru
      _
    // Predicated region
    $region26: #{tpu_custom_call.1} parent=1 // pred_check
      _
    $region27: #{tpu_custom_call.1} parent=1 // pred_check_branch
      %86 = sbr.rel (0) target = $region29
    $region28: #{tpu_custom_call.1} parent=1 // pred_region
      %s88 = ssub.s32 16, 16
      %89 = vsyncadd [#allocation12], %s88
      %s91 = sshll.u32 [#allocation13], 4
      %s92 = int_to_ptr.vmem [resolvable:$true] %s91
      %94 = dma.hbm_to_vmem [thread:$0]  %s6, 16, %s92, [#allocation12]
    $region29: #{tpu_custom_call.1} parent=1 // pred_fallthru
      _
    // Predicated region
    $region30: #{tpu_custom_call.1} parent=1 // pred_check
      _
    $region31: #{tpu_custom_call.1} parent=1 // pred_check_branch
      %96 = sbr.rel (0) target = $region33
    $region32: #{tpu_custom_call.1} parent=1 // pred_region
      %97 = dma.done [#allocation3], 32
    $region33: #{tpu_custom_call.1} parent=1 // pred_fallthru
      _
    // Predicated region
    $region34: #{tpu_custom_call.1} parent=1 // pred_check
      _
    $region35: #{tpu_custom_call.1} parent=1 // pred_check_branch
      %99 = sbr.rel (0) target = $region37
    $region36: #{tpu_custom_call.1} parent=1 // pred_region
      %100 = dma.done [#allocation6], 5120
    $region37: #{tpu_custom_call.1} parent=1 // pred_fallthru
      _
    // Predicated region
    $region38: #{tpu_custom_call.1} parent=1 // pred_check
      _
    $region39: #{tpu_custom_call.1} parent=1 // pred_check_branch
      %102 = sbr.rel (0) target = $region41
    $region40: #{tpu_custom_call.1} parent=1 // pred_region
      %103 = dma.done [#allocation6], 128
    $region41: #{tpu_custom_call.1} parent=1 // pred_fallthru
      _
    // Predicated region
    $region42: #{tpu_custom_call.1} parent=1 // pred_check
      _
    $region43: #{tpu_custom_call.1} parent=1 // pred_check_branch
      %105 = sbr.rel (0) target = $region45
    $region44: #{tpu_custom_call.1} parent=1 // pred_region
      %106 = dma.done [#allocation9], 262144
    $region45: #{tpu_custom_call.1} parent=1 // pred_fallthru
      _
    // Predicated region
    $region46: #{tpu_custom_call.1} parent=1 // pred_check
      _
    $region47: #{tpu_custom_call.1} parent=1 // pred_check_branch
      %108 = sbr.rel (0) target = $region49
    $region48: #{tpu_custom_call.1} parent=1 // pred_region
      %109 = dma.done [#allocation9], 256
    $region49: #{tpu_custom_call.1} parent=1 // pred_fallthru
      _
    // Predicated region
    $region50: #{tpu_custom_call.1} parent=1 // pred_check
      _
    $region51: #{tpu_custom_call.1} parent=1 // pred_check_branch
      %111 = sbr.rel (0) target = $region53
    $region52: #{tpu_custom_call.1} parent=1 // pred_region
      %112 = dma.done [#allocation12], 16384
    $region53: #{tpu_custom_call.1} parent=1 // pred_fallthru
      _
    // Predicated region
    $region54: #{tpu_custom_call.1} parent=1 // pred_check
      _
    $region55: #{tpu_custom_call.1} parent=1 // pred_check_branch
      %114 = sbr.rel (0) target = $region57
    $region56: #{tpu_custom_call.1} parent=1 // pred_region
      %115 = dma.done [#allocation12], 16
    $region57: #{tpu_custom_call.1} parent=1 // pred_fallthru
      _
    %v116 = vld [vmem:[#allocation2] sm:$0x3]
    %v117 = vld [vmem:[#allocation5] sm:$0xff]
    %v118 = vld [vmem:[#allocation5 + $0x8] sm:$0xff]
    %v119 = vld [vmem:[#allocation5 + $0x10] sm:$0xff]
    %v120 = vld [vmem:[#allocation5 + $0x18] sm:$0xff]
    %v121 = vld [vmem:[#allocation5 + $0x20] sm:$0xff]
    %v122 = vld [vmem:[#allocation5 + $0x28] sm:$0xff]
    %v123 = vld [vmem:[#allocation5 + $0x30] sm:$0xff]
    %v124 = vld [vmem:[#allocation5 + $0x38] sm:$0xff]
    %v125 = vld [vmem:[#allocation5 + $0x40] sm:$0xff]
    %v126 = vld [vmem:[#allocation5 + $0x48] sm:$0xff]
    %v127 = vld [vmem:[#allocation5 + $0x50] sm:$0xff]
    %v128 = vld [vmem:[#allocation5 + $0x58] sm:$0xff]
    %v129 = vld [vmem:[#allocation5 + $0x60] sm:$0xff]
    %v130 = vld [vmem:[#allocation5 + $0x68] sm:$0xff]
    %v131 = vld [vmem:[#allocation5 + $0x70] sm:$0xff]
    %v132 = vld [vmem:[#allocation5 + $0x78] sm:$0xff]
    %v133 = vld [vmem:[#allocation5 + $0x80] sm:$0xff]
    %v134 = vld [vmem:[#allocation5 + $0x88] sm:$0xff]
    %v135 = vld [vmem:[#allocation5 + $0x90] sm:$0xff]
    %v136 = vld [vmem:[#allocation5 + $0x98] sm:$0xff]
    %v137 = vld [vmem:[#allocation5 + $0xa0] sm:$0xff]
    %v138 = vld [vmem:[#allocation5 + $0xa8] sm:$0xff]
    %v139 = vld [vmem:[#allocation5 + $0xb0] sm:$0xff]
    %v140 = vld [vmem:[#allocation5 + $0xb8] sm:$0xff]
    %v141 = vld [vmem:[#allocation5 + $0xc0] sm:$0xff]
    %v142 = vld [vmem:[#allocation5 + $0xc8] sm:$0xff]
    %v143 = vld [vmem:[#allocation5 + $0xd0] sm:$0xff]
    %v144 = vld [vmem:[#allocation5 + $0xd8] sm:$0xff]
    %v145 = vld [vmem:[#allocation5 + $0xe0] sm:$0xff]
    %v146 = vld [vmem:[#allocation5 + $0xe8] sm:$0xff]
    %v147 = vld [vmem:[#allocation5 + $0xf0] sm:$0xff]
    %v148 = vld [vmem:[#allocation5 + $0xf8] sm:$0xff]
    %v149 = vld [vmem:[#allocation5 + $0x100] sm:$0xff]
    %v150 = vld [vmem:[#allocation5 + $0x108] sm:$0xff]
    %v151 = vld [vmem:[#allocation5 + $0x110] sm:$0xff]
    %v152 = vld [vmem:[#allocation5 + $0x118] sm:$0xff]
    %v153 = vld [vmem:[#allocation5 + $0x120] sm:$0xff]
    %v154 = vld [vmem:[#allocation5 + $0x128] sm:$0xff]
    %v155 = vld [vmem:[#allocation5 + $0x130] sm:$0xff]
    %v156 = vld [vmem:[#allocation5 + $0x138] sm:$0xff]
    %v157 = vld [vmem:[#allocation7] sm:$0xff]
    %v159 = vlaneseq
    %v160 = vshrl.u32 %v159, 7
    %v161 = vsub.s32 0, %v160
    %v162 = vrot.slane %v157, %v161
    %v163 = vlaneseq
    %v164 = vshrl.u32 %v163, 7
    %v165 = vsub.s32 1, %v164
    %v166 = vrot.slane %v157, %v165
    %v167 = vlaneseq
    %v168 = vshrl.u32 %v167, 7
    %v169 = vsub.s32 2, %v168
    %v170 = vrot.slane %v157, %v169
    %v171 = vlaneseq
    %v172 = vshrl.u32 %v171, 7
    %v173 = vsub.s32 3, %v172
    %v174 = vrot.slane %v157, %v173
    %v175 = vlaneseq
    %v176 = vshrl.u32 %v175, 7
    %v177 = vsub.s32 4, %v176
    %v178 = vrot.slane %v157, %v177
    %v179 = vlaneseq
    %v180 = vshrl.u32 %v179, 7
    %v181 = vsub.s32 5, %v180
    %v182 = vrot.slane %v157, %v181
    %v183 = vlaneseq
    %v184 = vshrl.u32 %v183, 7
    %v185 = vsub.s32 6, %v184
    %v186 = vrot.slane %v157, %v185
    %v187 = vlaneseq
    %v188 = vshrl.u32 %v187, 7
    %v189 = vsub.s32 7, %v188
    %v190 = vrot.slane %v157, %v189
    %vm199 = vcmask 326656
    %v201 = vsel %vm199, %v116, 0
    %203 = vmatprep.subr.mxu0 0.0
    %204 = vmatpush1.msra.mxu0 0.0
    %205 = vmatprep.subr.mxu0 0.0
    %206 = vmatpush1.msra.mxu0 0.0
    %207 = vmatprep.subr.mxu0 0.0
    %208 = vmatpush1.msra.mxu0 0.0
    %209 = vmatprep.subr.mxu0 0.0
    %210 = vmatpush1.msra.mxu0 0.0
    %211 = vmatprep.subr.mxu0 0.0
    %212 = vmatpush1.msra.mxu0 0.0
    %213 = vmatprep.subr.mxu0 0.0
    %214 = vmatpush1.msra.mxu0 0.0
    %215 = vmatprep.subr.mxu0 0.0
    %216 = vmatpush1.msra.mxu0 0.0
    %217 = vmatprep.subr.mxu0 0.0
    %218 = vmatpush1.msra.mxu0 0.0
    %219 = vmatprep.subr.mxu0 0.0
    %220 = vmatpush1.msra.mxu0 0.0
    %221 = vmatprep.subr.mxu0 0.0
    %222 = vmatpush1.msra.mxu0 0.0
    %223 = vmatprep.subr.mxu0 0.0
    %224 = vmatpush1.msra.mxu0 0.0
    %225 = vmatprep.subr.mxu0 %v150
    %226 = vmatpush1.msra.mxu0 %v149
    %227 = vmatprep.subr.mxu0 %v142
    %228 = vmatpush1.msra.mxu0 %v141
    %229 = vmatprep.subr.mxu0 %v134
    %230 = vmatpush1.msra.mxu0 %v133
    %231 = vmatprep.subr.mxu0 %v126
    %232 = vmatpush1.msra.mxu0 %v125
    %233 = vmatprep.subr.mxu0 %v118
    %234 = vmatpush1.msra.mxu0 %v117
    %235 = vmatprep.subr.mxu0 0.0
    %236 = vmatpush2.msra.mxu0 0.0
    %237 = vmatprep.subr.mxu0 0.0
    %238 = vmatpush2.msra.mxu0 0.0
    %239 = vmatprep.subr.mxu0 0.0
    %240 = vmatpush2.msra.mxu0 0.0
    %241 = vmatprep.subr.mxu0 0.0
    %242 = vmatpush2.msra.mxu0 0.0
    %243 = vmatprep.subr.mxu0 0.0
    %244 = vmatpush2.msra.mxu0 0.0
    %245 = vmatprep.subr.mxu0 0.0
    %246 = vmatpush2.msra.mxu0 0.0
    %247 = vmatprep.subr.mxu0 0.0
    %248 = vmatpush2.msra.mxu0 0.0
    %249 = vmatprep.subr.mxu0 0.0
    %250 = vmatpush2.msra.mxu0 0.0
    %251 = vmatprep.subr.mxu0 0.0
    %252 = vmatpush2.msra.mxu0 0.0
    %253 = vmatprep.subr.mxu0 0.0
    %254 = vmatpush2.msra.mxu0 0.0
    %255 = vmatprep.subr.mxu0 0.0
    %256 = vmatpush2.msra.mxu0 0.0
    %257 = vmatprep.subr.mxu0 0.0
    %258 = vmatpush2.msra.mxu0 0.0
    %259 = vmatprep.subr.mxu0 0.0
    %260 = vmatpush2.msra.mxu0 0.0
    %261 = vmatprep.subr.mxu0 0.0
    %262 = vmatpush2.msra.mxu0 0.0
    %263 = vmatprep.subr.mxu0 0.0
    %264 = vmatpush2.msra.mxu0 0.0
    %265 = vmatprep.subr.mxu0 0.0
    %266 = vmatpush2.msra.mxu0 0.0
    %267 = vmatprep.mubr.f32.mxu0 0.0
    %268 = vmatmul.mubr.f32.gmra.mxu0 %v201
    %v269 = vpop.f32.mrf.mxu0
    %v270 = vadd.f32 %v162, %v269
    %v271 = vpop.f32.mrf.mxu0
    %v272 = vadd.f32 %v166, %v271
    %273 = vdwg.mxu0
    %274 = vmatprep.subr.mxu0 0.0
    %275 = vmatpush1.msra.mxu0 0.0
    %276 = vmatprep.subr.mxu0 0.0
    %277 = vmatpush1.msra.mxu0 0.0
    %278 = vmatprep.subr.mxu0 0.0
    %279 = vmatpush1.msra.mxu0 0.0
    %280 = vmatprep.subr.mxu0 0.0
    %281 = vmatpush1.msra.mxu0 0.0
    %282 = vmatprep.subr.mxu0 0.0
    %283 = vmatpush1.msra.mxu0 0.0
    %284 = vmatprep.subr.mxu0 0.0
    %285 = vmatpush1.msra.mxu0 0.0
    %286 = vmatprep.subr.mxu0 0.0
    %287 = vmatpush1.msra.mxu0 0.0
    %288 = vmatprep.subr.mxu0 0.0
    %289 = vmatpush1.msra.mxu0 0.0
    %290 = vmatprep.subr.mxu0 0.0
    %291 = vmatpush1.msra.mxu0 0.0
    %292 = vmatprep.subr.mxu0 0.0
    %293 = vmatpush1.msra.mxu0 0.0
    %294 = vmatprep.subr.mxu0 0.0
    %295 = vmatpush1.msra.mxu0 0.0
    %296 = vmatprep.subr.mxu0 %v152
    %297 = vmatpush1.msra.mxu0 %v151
    %298 = vmatprep.subr.mxu0 %v144
    %299 = vmatpush1.msra.mxu0 %v143
    %300 = vmatprep.subr.mxu0 %v136
    %301 = vmatpush1.msra.mxu0 %v135
    %302 = vmatprep.subr.mxu0 %v128
    %303 = vmatpush1.msra.mxu0 %v127
    %304 = vmatprep.subr.mxu0 %v120
    %305 = vmatpush1.msra.mxu0 %v119
    %306 = vmatprep.subr.mxu0 0.0
    %307 = vmatpush2.msra.mxu0 0.0
    %308 = vmatprep.subr.mxu0 0.0
    %309 = vmatpush2.msra.mxu0 0.0
    %310 = vmatprep.subr.mxu0 0.0
    %311 = vmatpush2.msra.mxu0 0.0
    %312 = vmatprep.subr.mxu0 0.0
    %313 = vmatpush2.msra.mxu0 0.0
    %314 = vmatprep.subr.mxu0 0.0
    %315 = vmatpush2.msra.mxu0 0.0
    %316 = vmatprep.subr.mxu0 0.0
    %317 = vmatpush2.msra.mxu0 0.0
    %318 = vmatprep.subr.mxu0 0.0
    %319 = vmatpush2.msra.mxu0 0.0
    %320 = vmatprep.subr.mxu0 0.0
    %321 = vmatpush2.msra.mxu0 0.0
    %322 = vmatprep.subr.mxu0 0.0
    %323 = vmatpush2.msra.mxu0 0.0
    %324 = vmatprep.subr.mxu0 0.0
    %325 = vmatpush2.msra.mxu0 0.0
    %326 = vmatprep.subr.mxu0 0.0
    %327 = vmatpush2.msra.mxu0 0.0
    %328 = vmatprep.subr.mxu0 0.0
    %329 = vmatpush2.msra.mxu0 0.0
    %330 = vmatprep.subr.mxu0 0.0
    %331 = vmatpush2.msra.mxu0 0.0
    %332 = vmatprep.subr.mxu0 0.0
    %333 = vmatpush2.msra.mxu0 0.0
    %334 = vmatprep.subr.mxu0 0.0
    %335 = vmatpush2.msra.mxu0 0.0
    %336 = vmatprep.subr.mxu0 0.0
    %337 = vmatpush2.msra.mxu0 0.0
    %338 = vmatprep.mubr.f32.mxu0 0.0
    %339 = vmatmul.mubr.f32.gmra.mxu0 %v201
    %v340 = vpop.f32.mrf.mxu0
    %v341 = vadd.f32 %v170, %v340
    %v342 = vpop.f32.mrf.mxu0
    %v343 = vadd.f32 %v174, %v342
    %344 = vdwg.mxu0
    %345 = vmatprep.subr.mxu0 0.0
    %346 = vmatpush1.msra.mxu0 0.0
    %347 = vmatprep.subr.mxu0 0.0
    %348 = vmatpush1.msra.mxu0 0.0
    %349 = vmatprep.subr.mxu0 0.0
    %350 = vmatpush1.msra.mxu0 0.0
    %351 = vmatprep.subr.mxu0 0.0
    %352 = vmatpush1.msra.mxu0 0.0
    %353 = vmatprep.subr.mxu0 0.0
    %354 = vmatpush1.msra.mxu0 0.0
    %355 = vmatprep.subr.mxu0 0.0
    %356 = vmatpush1.msra.mxu0 0.0
    %357 = vmatprep.subr.mxu0 0.0
    %358 = vmatpush1.msra.mxu0 0.0
    %359 = vmatprep.subr.mxu0 0.0
    %360 = vmatpush1.msra.mxu0 0.0
    %361 = vmatprep.subr.mxu0 0.0
    %362 = vmatpush1.msra.mxu0 0.0
    %363 = vmatprep.subr.mxu0 0.0
    %364 = vmatpush1.msra.mxu0 0.0
    %365 = vmatprep.subr.mxu0 0.0
    %366 = vmatpush1.msra.mxu0 0.0
    %367 = vmatprep.subr.mxu0 %v154
    %368 = vmatpush1.msra.mxu0 %v153
    %369 = vmatprep.subr.mxu0 %v146
    %370 = vmatpush1.msra.mxu0 %v145
    %371 = vmatprep.subr.mxu0 %v138
    %372 = vmatpush1.msra.mxu0 %v137
    %373 = vmatprep.subr.mxu0 %v130
    %374 = vmatpush1.msra.mxu0 %v129
    %375 = vmatprep.subr.mxu0 %v122
    %376 = vmatpush1.msra.mxu0 %v121
    %377 = vmatprep.subr.mxu0 0.0
    %378 = vmatpush2.msra.mxu0 0.0
    %379 = vmatprep.subr.mxu0 0.0
    %380 = vmatpush2.msra.mxu0 0.0
    %381 = vmatprep.subr.mxu0 0.0
    %382 = vmatpush2.msra.mxu0 0.0
    %383 = vmatprep.subr.mxu0 0.0
    %384 = vmatpush2.msra.mxu0 0.0
    %385 = vmatprep.subr.mxu0 0.0
    %386 = vmatpush2.msra.mxu0 0.0
    %387 = vmatprep.subr.mxu0 0.0
    %388 = vmatpush2.msra.mxu0 0.0
    %389 = vmatprep.subr.mxu0 0.0
    %390 = vmatpush2.msra.mxu0 0.0
    %391 = vmatprep.subr.mxu0 0.0
    %392 = vmatpush2.msra.mxu0 0.0
    %393 = vmatprep.subr.mxu0 0.0
    %394 = vmatpush2.msra.mxu0 0.0
    %395 = vmatprep.subr.mxu0 0.0
    %396 = vmatpush2.msra.mxu0 0.0
    %397 = vmatprep.subr.mxu0 0.0
    %398 = vmatpush2.msra.mxu0 0.0
    %399 = vmatprep.subr.mxu0 0.0
    %400 = vmatpush2.msra.mxu0 0.0
    %401 = vmatprep.subr.mxu0 0.0
    %402 = vmatpush2.msra.mxu0 0.0
    %403 = vmatprep.subr.mxu0 0.0
    %404 = vmatpush2.msra.mxu0 0.0
    %405 = vmatprep.subr.mxu0 0.0
    %406 = vmatpush2.msra.mxu0 0.0
    %407 = vmatprep.subr.mxu0 0.0
    %408 = vmatpush2.msra.mxu0 0.0
    %409 = vmatprep.mubr.f32.mxu0 0.0
    %410 = vmatmul.mubr.f32.gmra.mxu0 %v201
    %v411 = vpop.f32.mrf.mxu0
    %v412 = vadd.f32 %v178, %v411
    %v413 = vpop.f32.mrf.mxu0
    %v414 = vadd.f32 %v182, %v413
    %415 = vdwg.mxu0
    %416 = vmatprep.subr.mxu0 0.0
    %417 = vmatpush1.msra.mxu0 0.0
    %418 = vmatprep.subr.mxu0 0.0
    %419 = vmatpush1.msra.mxu0 0.0
    %420 = vmatprep.subr.mxu0 0.0
    %421 = vmatpush1.msra.mxu0 0.0
    %422 = vmatprep.subr.mxu0 0.0
    %423 = vmatpush1.msra.mxu0 0.0
    %424 = vmatprep.subr.mxu0 0.0
    %425 = vmatpush1.msra.mxu0 0.0
    %426 = vmatprep.subr.mxu0 0.0
    %427 = vmatpush1.msra.mxu0 0.0
    %428 = vmatprep.subr.mxu0 0.0
    %429 = vmatpush1.msra.mxu0 0.0
    %430 = vmatprep.subr.mxu0 0.0
    %431 = vmatpush1.msra.mxu0 0.0
    %432 = vmatprep.subr.mxu0 0.0
    %433 = vmatpush1.msra.mxu0 0.0
    %434 = vmatprep.subr.mxu0 0.0
    %435 = vmatpush1.msra.mxu0 0.0
    %436 = vmatprep.subr.mxu0 0.0
    %437 = vmatpush1.msra.mxu0 0.0
    %438 = vmatprep.subr.mxu0 %v156
    %439 = vmatpush1.msra.mxu0 %v155
    %440 = vmatprep.subr.mxu0 %v148
    %441 = vmatpush1.msra.mxu0 %v147
    %442 = vmatprep.subr.mxu0 %v140
    %443 = vmatpush1.msra.mxu0 %v139
    %444 = vmatprep.subr.mxu0 %v132
    %445 = vmatpush1.msra.mxu0 %v131
    %446 = vmatprep.subr.mxu0 %v124
    %447 = vmatpush1.msra.mxu0 %v123
    %448 = vmatprep.subr.mxu0 0.0
    %449 = vmatpush2.msra.mxu0 0.0
    %450 = vmatprep.subr.mxu0 0.0
    %451 = vmatpush2.msra.mxu0 0.0
    %452 = vmatprep.subr.mxu0 0.0
    %453 = vmatpush2.msra.mxu0 0.0
    %454 = vmatprep.subr.mxu0 0.0
    %455 = vmatpush2.msra.mxu0 0.0
    %456 = vmatprep.subr.mxu0 0.0
    %457 = vmatpush2.msra.mxu0 0.0
    %458 = vmatprep.subr.mxu0 0.0
    %459 = vmatpush2.msra.mxu0 0.0
    %460 = vmatprep.subr.mxu0 0.0
    %461 = vmatpush2.msra.mxu0 0.0
    %462 = vmatprep.subr.mxu0 0.0
    %463 = vmatpush2.msra.mxu0 0.0
    %464 = vmatprep.subr.mxu0 0.0
    %465 = vmatpush2.msra.mxu0 0.0
    %466 = vmatprep.subr.mxu0 0.0
    %467 = vmatpush2.msra.mxu0 0.0
    %468 = vmatprep.subr.mxu0 0.0
    %469 = vmatpush2.msra.mxu0 0.0
    %470 = vmatprep.subr.mxu0 0.0
    %471 = vmatpush2.msra.mxu0 0.0
    %472 = vmatprep.subr.mxu0 0.0
    %473 = vmatpush2.msra.mxu0 0.0
    %474 = vmatprep.subr.mxu0 0.0
    %475 = vmatpush2.msra.mxu0 0.0
    %476 = vmatprep.subr.mxu0 0.0
    %477 = vmatpush2.msra.mxu0 0.0
    %478 = vmatprep.subr.mxu0 0.0
    %479 = vmatpush2.msra.mxu0 0.0
    %480 = vmatprep.mubr.f32.mxu0 0.0
    %481 = vmatmul.mubr.f32.gmra.mxu0 %v201
    %v482 = vpop.f32.mrf.mxu0
    %v483 = vadd.f32 %v186, %v482
    %v484 = vpop.f32.mrf.mxu0
    %v485 = vadd.f32 %v190, %v484
    %486 = vdwg.mxu0
    %v487 = vmax.f32 %v270, 0.0
    %v488 = vmax.f32 %v272, 0.0
    %v489 = vmax.f32 %v341, 0.0
    %v490 = vmax.f32 %v343, 0.0
    %v491 = vmax.f32 %v412, 0.0
    %v492 = vmax.f32 %v414, 0.0
    %v493 = vmax.f32 %v483, 0.0
    %v494 = vmax.f32 %v485, 0.0
    %v495 = vld [vmem:[#allocation8] sm:$0xff]
    %v496 = vld [vmem:[#allocation8 + $0x8] sm:$0xff]
    %v497 = vld [vmem:[#allocation8 + $0x10] sm:$0xff]
    %v498 = vld [vmem:[#allocation8 + $0x18] sm:$0xff]
    %v499 = vld [vmem:[#allocation8 + $0x20] sm:$0xff]
    %v500 = vld [vmem:[#allocation8 + $0x28] sm:$0xff]
    %v501 = vld [vmem:[#allocation8 + $0x30] sm:$0xff]
    %v502 = vld [vmem:[#allocation8 + $0x38] sm:$0xff]
    %v503 = vld [vmem:[#allocation8 + $0x40] sm:$0xff]
    %v504 = vld [vmem:[#allocation8 + $0x48] sm:$0xff]
    %v505 = vld [vmem:[#allocation8 + $0x50] sm:$0xff]
    %v506 = vld [vmem:[#allocation8 + $0x58] sm:$0xff]
    %v507 = vld [vmem:[#allocation8 + $0x60] sm:$0xff]
    %v508 = vld [vmem:[#allocation8 + $0x68] sm:$0xff]
    %v509 = vld [vmem:[#allocation8 + $0x70] sm:$0xff]
    %v510 = vld [vmem:[#allocation8 + $0x78] sm:$0xff]
    %v511 = vld [vmem:[#allocation8 + $0x80] sm:$0xff]
    %v512 = vld [vmem:[#allocation8 + $0x88] sm:$0xff]
    %v513 = vld [vmem:[#allocation8 + $0x90] sm:$0xff]
    %v514 = vld [vmem:[#allocation8 + $0x98] sm:$0xff]
    %v515 = vld [vmem:[#allocation8 + $0xa0] sm:$0xff]
    %v516 = vld [vmem:[#allocation8 + $0xa8] sm:$0xff]
    %v517 = vld [vmem:[#allocation8 + $0xb0] sm:$0xff]
    %v518 = vld [vmem:[#allocation8 + $0xb8] sm:$0xff]
    %v519 = vld [vmem:[#allocation8 + $0xc0] sm:$0xff]
    %v520 = vld [vmem:[#allocation8 + $0xc8] sm:$0xff]
    %v521 = vld [vmem:[#allocation8 + $0xd0] sm:$0xff]
    %v522 = vld [vmem:[#allocation8 + $0xd8] sm:$0xff]
    %v523 = vld [vmem:[#allocation8 + $0xe0] sm:$0xff]
    %v524 = vld [vmem:[#allocation8 + $0xe8] sm:$0xff]
    %v525 = vld [vmem:[#allocation8 + $0xf0] sm:$0xff]
    %v526 = vld [vmem:[#allocation8 + $0xf8] sm:$0xff]
    %v527 = vld [vmem:[#allocation8 + $0x100] sm:$0xff]
    %v528 = vld [vmem:[#allocation8 + $0x108] sm:$0xff]
    %v529 = vld [vmem:[#allocation8 + $0x110] sm:$0xff]
    %v530 = vld [vmem:[#allocation8 + $0x118] sm:$0xff]
    %v531 = vld [vmem:[#allocation8 + $0x120] sm:$0xff]
    %v532 = vld [vmem:[#allocation8 + $0x128] sm:$0xff]
    %v533 = vld [vmem:[#allocation8 + $0x130] sm:$0xff]
    %v534 = vld [vmem:[#allocation8 + $0x138] sm:$0xff]
    %v535 = vld [vmem:[#allocation8 + $0x140] sm:$0xff]
    %v536 = vld [vmem:[#allocation8 + $0x148] sm:$0xff]
    %v537 = vld [vmem:[#allocation8 + $0x150] sm:$0xff]
    %v538 = vld [vmem:[#allocation8 + $0x158] sm:$0xff]
    %v539 = vld [vmem:[#allocation8 + $0x160] sm:$0xff]
    %v540 = vld [vmem:[#allocation8 + $0x168] sm:$0xff]
    %v541 = vld [vmem:[#allocation8 + $0x170] sm:$0xff]
    %v542 = vld [vmem:[#allocation8 + $0x178] sm:$0xff]
    %v543 = vld [vmem:[#allocation8 + $0x180] sm:$0xff]
    %v544 = vld [vmem:[#allocation8 + $0x188] sm:$0xff]
    %v545 = vld [vmem:[#allocation8 + $0x190] sm:$0xff]
    %v546 = vld [vmem:[#allocation8 + $0x198] sm:$0xff]
    %v547 = vld [vmem:[#allocation8 + $0x1a0] sm:$0xff]
    %v548 = vld [vmem:[#allocation8 + $0x1a8] sm:$0xff]
    %v549 = vld [vmem:[#allocation8 + $0x1b0] sm:$0xff]
    %v550 = vld [vmem:[#allocation8 + $0x1b8] sm:$0xff]
    %v551 = vld [vmem:[#allocation8 + $0x1c0] sm:$0xff]
    %v552 = vld [vmem:[#allocation8 + $0x1c8] sm:$0xff]
    %v553 = vld [vmem:[#allocation8 + $0x1d0] sm:$0xff]
    %v554 = vld [vmem:[#allocation8 + $0x1d8] sm:$0xff]
    %v555 = vld [vmem:[#allocation8 + $0x1e0] sm:$0xff]
    %v556 = vld [vmem:[#allocation8 + $0x1e8] sm:$0xff]
    %v557 = vld [vmem:[#allocation8 + $0x1f0] sm:$0xff]
    %v558 = vld [vmem:[#allocation8 + $0x1f8] sm:$0xff]
    %v559 = vld [vmem:[#allocation8 + $0x200] sm:$0xff]
    %v560 = vld [vmem:[#allocation8 + $0x208] sm:$0xff]
    %v561 = vld [vmem:[#allocation8 + $0x210] sm:$0xff]
    %v562 = vld [vmem:[#allocation8 + $0x218] sm:$0xff]
    %v563 = vld [vmem:[#allocation8 + $0x220] sm:$0xff]
    %v564 = vld [vmem:[#allocation8 + $0x228] sm:$0xff]
    %v565 = vld [vmem:[#allocation8 + $0x230] sm:$0xff]
    %v566 = vld [vmem:[#allocation8 + $0x238] sm:$0xff]
    %v567 = vld [vmem:[#allocation8 + $0x240] sm:$0xff]
    %v568 = vld [vmem:[#allocation8 + $0x248] sm:$0xff]
    %v569 = vld [vmem:[#allocation8 + $0x250] sm:$0xff]
    %v570 = vld [vmem:[#allocation8 + $0x258] sm:$0xff]
    %v571 = vld [vmem:[#allocation8 + $0x260] sm:$0xff]
    %v572 = vld [vmem:[#allocation8 + $0x268] sm:$0xff]
    %v573 = vld [vmem:[#allocation8 + $0x270] sm:$0xff]
    %v574 = vld [vmem:[#allocation8 + $0x278] sm:$0xff]
    %v575 = vld [vmem:[#allocation8 + $0x280] sm:$0xff]
    %v576 = vld [vmem:[#allocation8 + $0x288] sm:$0xff]
    %v577 = vld [vmem:[#allocation8 + $0x290] sm:$0xff]
    %v578 = vld [vmem:[#allocation8 + $0x298] sm:$0xff]
    %v579 = vld [vmem:[#allocation8 + $0x2a0] sm:$0xff]
    %v580 = vld [vmem:[#allocation8 + $0x2a8] sm:$0xff]
    %v581 = vld [vmem:[#allocation8 + $0x2b0] sm:$0xff]
    %v582 = vld [vmem:[#allocation8 + $0x2b8] sm:$0xff]
    %v583 = vld [vmem:[#allocation8 + $0x2c0] sm:$0xff]
    %v584 = vld [vmem:[#allocation8 + $0x2c8] sm:$0xff]
    %v585 = vld [vmem:[#allocation8 + $0x2d0] sm:$0xff]
    %v586 = vld [vmem:[#allocation8 + $0x2d8] sm:$0xff]
    %v587 = vld [vmem:[#allocation8 + $0x2e0] sm:$0xff]
    %v588 = vld [vmem:[#allocation8 + $0x2e8] sm:$0xff]
    %v589 = vld [vmem:[#allocation8 + $0x2f0] sm:$0xff]
    %v590 = vld [vmem:[#allocation8 + $0x2f8] sm:$0xff]
    %v591 = vld [vmem:[#allocation8 + $0x300] sm:$0xff]
    %v592 = vld [vmem:[#allocation8 + $0x308] sm:$0xff]
    %v593 = vld [vmem:[#allocation8 + $0x310] sm:$0xff]
    %v594 = vld [vmem:[#allocation8 + $0x318] sm:$0xff]
    %v595 = vld [vmem:[#allocation8 + $0x320] sm:$0xff]
    %v596 = vld [vmem:[#allocation8 + $0x328] sm:$0xff]
    %v597 = vld [vmem:[#allocation8 + $0x330] sm:$0xff]
    %v598 = vld [vmem:[#allocation8 + $0x338] sm:$0xff]
    %v599 = vld [vmem:[#allocation8 + $0x340] sm:$0xff]
    %v600 = vld [vmem:[#allocation8 + $0x348] sm:$0xff]
    %v601 = vld [vmem:[#allocation8 + $0x350] sm:$0xff]
    %v602 = vld [vmem:[#allocation8 + $0x358] sm:$0xff]
    %v603 = vld [vmem:[#allocation8 + $0x360] sm:$0xff]
    %v604 = vld [vmem:[#allocation8 + $0x368] sm:$0xff]
    %v605 = vld [vmem:[#allocation8 + $0x370] sm:$0xff]
    %v606 = vld [vmem:[#allocation8 + $0x378] sm:$0xff]
    %v607 = vld [vmem:[#allocation8 + $0x380] sm:$0xff]
    %v608 = vld [vmem:[#allocation8 + $0x388] sm:$0xff]
    %v609 = vld [vmem:[#allocation8 + $0x390] sm:$0xff]
    %v610 = vld [vmem:[#allocation8 + $0x398] sm:$0xff]
    %v611 = vld [vmem:[#allocation8 + $0x3a0] sm:$0xff]
    %v612 = vld [vmem:[#allocation8 + $0x3a8] sm:$0xff]
    %v613 = vld [vmem:[#allocation8 + $0x3b0] sm:$0xff]
    %v614 = vld [vmem:[#allocation8 + $0x3b8] sm:$0xff]
    %v615 = vld [vmem:[#allocation8 + $0x3c0] sm:$0xff]
    %v616 = vld [vmem:[#allocation8 + $0x3c8] sm:$0xff]
    %v617 = vld [vmem:[#allocation8 + $0x3d0] sm:$0xff]
    %v618 = vld [vmem:[#allocation8 + $0x3d8] sm:$0xff]
    %v619 = vld [vmem:[#allocation8 + $0x3e0] sm:$0xff]
    %v620 = vld [vmem:[#allocation8 + $0x3e8] sm:$0xff]
    %v621 = vld [vmem:[#allocation8 + $0x3f0] sm:$0xff]
    %v622 = vld [vmem:[#allocation8 + $0x3f8] sm:$0xff]
    %v623 = vld [vmem:[#allocation8 + $0x400] sm:$0xff]
    %v624 = vld [vmem:[#allocation8 + $0x408] sm:$0xff]
    %v625 = vld [vmem:[#allocation8 + $0x410] sm:$0xff]
    %v626 = vld [vmem:[#allocation8 + $0x418] sm:$0xff]
    %v627 = vld [vmem:[#allocation8 + $0x420] sm:$0xff]
    %v628 = vld [vmem:[#allocation8 + $0x428] sm:$0xff]
    %v629 = vld [vmem:[#allocation8 + $0x430] sm:$0xff]
    %v630 = vld [vmem:[#allocation8 + $0x438] sm:$0xff]
    %v631 = vld [vmem:[#allocation8 + $0x440] sm:$0xff]
    %v632 = vld [vmem:[#allocation8 + $0x448] sm:$0xff]
    %v633 = vld [vmem:[#allocation8 + $0x450] sm:$0xff]
    %v634 = vld [vmem:[#allocation8 + $0x458] sm:$0xff]
    %v635 = vld [vmem:[#allocation8 + $0x460] sm:$0xff]
    %v636 = vld [vmem:[#allocation8 + $0x468] sm:$0xff]
    %v637 = vld [vmem:[#allocation8 + $0x470] sm:$0xff]
    %v638 = vld [vmem:[#allocation8 + $0x478] sm:$0xff]
    %v639 = vld [vmem:[#allocation8 + $0x480] sm:$0xff]
    %v640 = vld [vmem:[#allocation8 + $0x488] sm:$0xff]
    %v641 = vld [vmem:[#allocation8 + $0x490] sm:$0xff]
    %v642 = vld [vmem:[#allocation8 + $0x498] sm:$0xff]
    %v643 = vld [vmem:[#allocation8 + $0x4a0] sm:$0xff]
    %v644 = vld [vmem:[#allocation8 + $0x4a8] sm:$0xff]
    %v645 = vld [vmem:[#allocation8 + $0x4b0] sm:$0xff]
    %v646 = vld [vmem:[#allocation8 + $0x4b8] sm:$0xff]
    %v647 = vld [vmem:[#allocation8 + $0x4c0] sm:$0xff]
    %v648 = vld [vmem:[#allocation8 + $0x4c8] sm:$0xff]
    %v649 = vld [vmem:[#allocation8 + $0x4d0] sm:$0xff]
    %v650 = vld [vmem:[#allocation8 + $0x4d8] sm:$0xff]
    %v651 = vld [vmem:[#allocation8 + $0x4e0] sm:$0xff]
    %v652 = vld [vmem:[#allocation8 + $0x4e8] sm:$0xff]
    %v653 = vld [vmem:[#allocation8 + $0x4f0] sm:$0xff]
    %v654 = vld [vmem:[#allocation8 + $0x4f8] sm:$0xff]
    %v655 = vld [vmem:[#allocation8 + $0x500] sm:$0xff]
    %v656 = vld [vmem:[#allocation8 + $0x508] sm:$0xff]
    %v657 = vld [vmem:[#allocation8 + $0x510] sm:$0xff]
    %v658 = vld [vmem:[#allocation8 + $0x518] sm:$0xff]
    %v659 = vld [vmem:[#allocation8 + $0x520] sm:$0xff]
    %v660 = vld [vmem:[#allocation8 + $0x528] sm:$0xff]
    %v661 = vld [vmem:[#allocation8 + $0x530] sm:$0xff]
    %v662 = vld [vmem:[#allocation8 + $0x538] sm:$0xff]
    %v663 = vld [vmem:[#allocation8 + $0x540] sm:$0xff]
    %v664 = vld [vmem:[#allocation8 + $0x548] sm:$0xff]
    %v665 = vld [vmem:[#allocation8 + $0x550] sm:$0xff]
    %v666 = vld [vmem:[#allocation8 + $0x558] sm:$0xff]
    %v667 = vld [vmem:[#allocation8 + $0x560] sm:$0xff]
    %v668 = vld [vmem:[#allocation8 + $0x568] sm:$0xff]
    %v669 = vld [vmem:[#allocation8 + $0x570] sm:$0xff]
    %v670 = vld [vmem:[#allocation8 + $0x578] sm:$0xff]
    %v671 = vld [vmem:[#allocation8 + $0x580] sm:$0xff]
    %v672 = vld [vmem:[#allocation8 + $0x588] sm:$0xff]
    %v673 = vld [vmem:[#allocation8 + $0x590] sm:$0xff]
    %v674 = vld [vmem:[#allocation8 + $0x598] sm:$0xff]
    %v675 = vld [vmem:[#allocation8 + $0x5a0] sm:$0xff]
    %v676 = vld [vmem:[#allocation8 + $0x5a8] sm:$0xff]
    %v677 = vld [vmem:[#allocation8 + $0x5b0] sm:$0xff]
    %v678 = vld [vmem:[#allocation8 + $0x5b8] sm:$0xff]
    %v679 = vld [vmem:[#allocation8 + $0x5c0] sm:$0xff]
    %v680 = vld [vmem:[#allocation8 + $0x5c8] sm:$0xff]
    %v681 = vld [vmem:[#allocation8 + $0x5d0] sm:$0xff]
    %v682 = vld [vmem:[#allocation8 + $0x5d8] sm:$0xff]
    %v683 = vld [vmem:[#allocation8 + $0x5e0] sm:$0xff]
    %v684 = vld [vmem:[#allocation8 + $0x5e8] sm:$0xff]
    %v685 = vld [vmem:[#allocation8 + $0x5f0] sm:$0xff]
    %v686 = vld [vmem:[#allocation8 + $0x5f8] sm:$0xff]
    %v687 = vld [vmem:[#allocation8 + $0x600] sm:$0xff]
    %v688 = vld [vmem:[#allocation8 + $0x608] sm:$0xff]
    %v689 = vld [vmem:[#allocation8 + $0x610] sm:$0xff]
    %v690 = vld [vmem:[#allocation8 + $0x618] sm:$0xff]
    %v691 = vld [vmem:[#allocation8 + $0x620] sm:$0xff]
    %v692 = vld [vmem:[#allocation8 + $0x628] sm:$0xff]
    %v693 = vld [vmem:[#allocation8 + $0x630] sm:$0xff]
    %v694 = vld [vmem:[#allocation8 + $0x638] sm:$0xff]
    %v695 = vld [vmem:[#allocation8 + $0x640] sm:$0xff]
    %v696 = vld [vmem:[#allocation8 + $0x648] sm:$0xff]
    %v697 = vld [vmem:[#allocation8 + $0x650] sm:$0xff]
    %v698 = vld [vmem:[#allocation8 + $0x658] sm:$0xff]
    %v699 = vld [vmem:[#allocation8 + $0x660] sm:$0xff]
    %v700 = vld [vmem:[#allocation8 + $0x668] sm:$0xff]
    %v701 = vld [vmem:[#allocation8 + $0x670] sm:$0xff]
    %v702 = vld [vmem:[#allocation8 + $0x678] sm:$0xff]
    %v703 = vld [vmem:[#allocation8 + $0x680] sm:$0xff]
    %v704 = vld [vmem:[#allocation8 + $0x688] sm:$0xff]
    %v705 = vld [vmem:[#allocation8 + $0x690] sm:$0xff]
    %v706 = vld [vmem:[#allocation8 + $0x698] sm:$0xff]
    %v707 = vld [vmem:[#allocation8 + $0x6a0] sm:$0xff]
    %v708 = vld [vmem:[#allocation8 + $0x6a8] sm:$0xff]
    %v709 = vld [vmem:[#allocation8 + $0x6b0] sm:$0xff]
    %v710 = vld [vmem:[#allocation8 + $0x6b8] sm:$0xff]
    %v711 = vld [vmem:[#allocation8 + $0x6c0] sm:$0xff]
    %v712 = vld [vmem:[#allocation8 + $0x6c8] sm:$0xff]
    %v713 = vld [vmem:[#allocation8 + $0x6d0] sm:$0xff]
    %v714 = vld [vmem:[#allocation8 + $0x6d8] sm:$0xff]
    %v715 = vld [vmem:[#allocation8 + $0x6e0] sm:$0xff]
    %v716 = vld [vmem:[#allocation8 + $0x6e8] sm:$0xff]
    %v717 = vld [vmem:[#allocation8 + $0x6f0] sm:$0xff]
    %v718 = vld [vmem:[#allocation8 + $0x6f8] sm:$0xff]
    %v719 = vld [vmem:[#allocation8 + $0x700] sm:$0xff]
    %v720 = vld [vmem:[#allocation8 + $0x708] sm:$0xff]
    %v721 = vld [vmem:[#allocation8 + $0x710] sm:$0xff]
    %v722 = vld [vmem:[#allocation8 + $0x718] sm:$0xff]
    %v723 = vld [vmem:[#allocation8 + $0x720] sm:$0xff]
    %v724 = vld [vmem:[#allocation8 + $0x728] sm:$0xff]
    %v725 = vld [vmem:[#allocation8 + $0x730] sm:$0xff]
    %v726 = vld [vmem:[#allocation8 + $0x738] sm:$0xff]
    %v727 = vld [vmem:[#allocation8 + $0x740] sm:$0xff]
    %v728 = vld [vmem:[#allocation8 + $0x748] sm:$0xff]
    %v729 = vld [vmem:[#allocation8 + $0x750] sm:$0xff]
    %v730 = vld [vmem:[#allocation8 + $0x758] sm:$0xff]
    %v731 = vld [vmem:[#allocation8 + $0x760] sm:$0xff]
    %v732 = vld [vmem:[#allocation8 + $0x768] sm:$0xff]
    %v733 = vld [vmem:[#allocation8 + $0x770] sm:$0xff]
    %v734 = vld [vmem:[#allocation8 + $0x778] sm:$0xff]
    %v735 = vld [vmem:[#allocation8 + $0x780] sm:$0xff]
    %v736 = vld [vmem:[#allocation8 + $0x788] sm:$0xff]
    %v737 = vld [vmem:[#allocation8 + $0x790] sm:$0xff]
    %v738 = vld [vmem:[#allocation8 + $0x798] sm:$0xff]
    %v739 = vld [vmem:[#allocation8 + $0x7a0] sm:$0xff]
    %v740 = vld [vmem:[#allocation8 + $0x7a8] sm:$0xff]
    %v741 = vld [vmem:[#allocation8 + $0x7b0] sm:$0xff]
    %v742 = vld [vmem:[#allocation8 + $0x7b8] sm:$0xff]
    %v743 = vld [vmem:[#allocation8 + $0x7c0] sm:$0xff]
    %v744 = vld [vmem:[#allocation8 + $0x7c8] sm:$0xff]
    %v745 = vld [vmem:[#allocation8 + $0x7d0] sm:$0xff]
    %v746 = vld [vmem:[#allocation8 + $0x7d8] sm:$0xff]
    %v747 = vld [vmem:[#allocation8 + $0x7e0] sm:$0xff]
    %v748 = vld [vmem:[#allocation8 + $0x7e8] sm:$0xff]
    %v749 = vld [vmem:[#allocation8 + $0x7f0] sm:$0xff]
    %v750 = vld [vmem:[#allocation8 + $0x7f8] sm:$0xff]
    %v751 = vld [vmem:[#allocation8 + $0x800] sm:$0xff]
    %v752 = vld [vmem:[#allocation8 + $0x808] sm:$0xff]
    %v753 = vld [vmem:[#allocation8 + $0x810] sm:$0xff]
    %v754 = vld [vmem:[#allocation8 + $0x818] sm:$0xff]
    %v755 = vld [vmem:[#allocation8 + $0x820] sm:$0xff]
    %v756 = vld [vmem:[#allocation8 + $0x828] sm:$0xff]
    %v757 = vld [vmem:[#allocation8 + $0x830] sm:$0xff]
    %v758 = vld [vmem:[#allocation8 + $0x838] sm:$0xff]
    %v759 = vld [vmem:[#allocation8 + $0x840] sm:$0xff]
    %v760 = vld [vmem:[#allocation8 + $0x848] sm:$0xff]
    %v761 = vld [vmem:[#allocation8 + $0x850] sm:$0xff]
    %v762 = vld [vmem:[#allocation8 + $0x858] sm:$0xff]
    %v763 = vld [vmem:[#allocation8 + $0x860] sm:$0xff]
    %v764 = vld [vmem:[#allocation8 + $0x868] sm:$0xff]
    %v765 = vld [vmem:[#allocation8 + $0x870] sm:$0xff]
    %v766 = vld [vmem:[#allocation8 + $0x878] sm:$0xff]
    %v767 = vld [vmem:[#allocation8 + $0x880] sm:$0xff]
    %v768 = vld [vmem:[#allocation8 + $0x888] sm:$0xff]
    %v769 = vld [vmem:[#allocation8 + $0x890] sm:$0xff]
    %v770 = vld [vmem:[#allocation8 + $0x898] sm:$0xff]
    %v771 = vld [vmem:[#allocation8 + $0x8a0] sm:$0xff]
    %v772 = vld [vmem:[#allocation8 + $0x8a8] sm:$0xff]
    %v773 = vld [vmem:[#allocation8 + $0x8b0] sm:$0xff]
    %v774 = vld [vmem:[#allocation8 + $0x8b8] sm:$0xff]
    %v775 = vld [vmem:[#allocation8 + $0x8c0] sm:$0xff]
    %v776 = vld [vmem:[#allocation8 + $0x8c8] sm:$0xff]
    %v777 = vld [vmem:[#allocation8 + $0x8d0] sm:$0xff]
    %v778 = vld [vmem:[#allocation8 + $0x8d8] sm:$0xff]
    %v779 = vld [vmem:[#allocation8 + $0x8e0] sm:$0xff]
    %v780 = vld [vmem:[#allocation8 + $0x8e8] sm:$0xff]
    %v781 = vld [vmem:[#allocation8 + $0x8f0] sm:$0xff]
    %v782 = vld [vmem:[#allocation8 + $0x8f8] sm:$0xff]
    %v783 = vld [vmem:[#allocation8 + $0x900] sm:$0xff]
    %v784 = vld [vmem:[#allocation8 + $0x908] sm:$0xff]
    %v785 = vld [vmem:[#allocation8 + $0x910] sm:$0xff]
    %v786 = vld [vmem:[#allocation8 + $0x918] sm:$0xff]
    %v787 = vld [vmem:[#allocation8 + $0x920] sm:$0xff]
    %v788 = vld [vmem:[#allocation8 + $0x928] sm:$0xff]
    %v789 = vld [vmem:[#allocation8 + $0x930] sm:$0xff]
    %v790 = vld [vmem:[#allocation8 + $0x938] sm:$0xff]
    %v791 = vld [vmem:[#allocation8 + $0x940] sm:$0xff]
    %v792 = vld [vmem:[#allocation8 + $0x948] sm:$0xff]
    %v793 = vld [vmem:[#allocation8 + $0x950] sm:$0xff]
    %v794 = vld [vmem:[#allocation8 + $0x958] sm:$0xff]
    %v795 = vld [vmem:[#allocation8 + $0x960] sm:$0xff]
    %v796 = vld [vmem:[#allocation8 + $0x968] sm:$0xff]
    %v797 = vld [vmem:[#allocation8 + $0x970] sm:$0xff]
    %v798 = vld [vmem:[#allocation8 + $0x978] sm:$0xff]
    %v799 = vld [vmem:[#allocation8 + $0x980] sm:$0xff]
    %v800 = vld [vmem:[#allocation8 + $0x988] sm:$0xff]
    %v801 = vld [vmem:[#allocation8 + $0x990] sm:$0xff]
    %v802 = vld [vmem:[#allocation8 + $0x998] sm:$0xff]
    %v803 = vld [vmem:[#allocation8 + $0x9a0] sm:$0xff]
    %v804 = vld [vmem:[#allocation8 + $0x9a8] sm:$0xff]
    %v805 = vld [vmem:[#allocation8 + $0x9b0] sm:$0xff]
    %v806 = vld [vmem:[#allocation8 + $0x9b8] sm:$0xff]
    %v807 = vld [vmem:[#allocation8 + $0x9c0] sm:$0xff]
    %v808 = vld [vmem:[#allocation8 + $0x9c8] sm:$0xff]
    %v809 = vld [vmem:[#allocation8 + $0x9d0] sm:$0xff]
    %v810 = vld [vmem:[#allocation8 + $0x9d8] sm:$0xff]
    %v811 = vld [vmem:[#allocation8 + $0x9e0] sm:$0xff]
    %v812 = vld [vmem:[#allocation8 + $0x9e8] sm:$0xff]
    %v813 = vld [vmem:[#allocation8 + $0x9f0] sm:$0xff]
    %v814 = vld [vmem:[#allocation8 + $0x9f8] sm:$0xff]
    %v815 = vld [vmem:[#allocation8 + $0xa00] sm:$0xff]
    %v816 = vld [vmem:[#allocation8 + $0xa08] sm:$0xff]
    %v817 = vld [vmem:[#allocation8 + $0xa10] sm:$0xff]
    %v818 = vld [vmem:[#allocation8 + $0xa18] sm:$0xff]
    %v819 = vld [vmem:[#allocation8 + $0xa20] sm:$0xff]
    %v820 = vld [vmem:[#allocation8 + $0xa28] sm:$0xff]
    %v821 = vld [vmem:[#allocation8 + $0xa30] sm:$0xff]
    %v822 = vld [vmem:[#allocation8 + $0xa38] sm:$0xff]
    %v823 = vld [vmem:[#allocation8 + $0xa40] sm:$0xff]
    %v824 = vld [vmem:[#allocation8 + $0xa48] sm:$0xff]
    %v825 = vld [vmem:[#allocation8 + $0xa50] sm:$0xff]
    %v826 = vld [vmem:[#allocation8 + $0xa58] sm:$0xff]
    %v827 = vld [vmem:[#allocation8 + $0xa60] sm:$0xff]
    %v828 = vld [vmem:[#allocation8 + $0xa68] sm:$0xff]
    %v829 = vld [vmem:[#allocation8 + $0xa70] sm:$0xff]
    %v830 = vld [vmem:[#allocation8 + $0xa78] sm:$0xff]
    %v831 = vld [vmem:[#allocation8 + $0xa80] sm:$0xff]
    %v832 = vld [vmem:[#allocation8 + $0xa88] sm:$0xff]
    %v833 = vld [vmem:[#allocation8 + $0xa90] sm:$0xff]
    %v834 = vld [vmem:[#allocation8 + $0xa98] sm:$0xff]
    %v835 = vld [vmem:[#allocation8 + $0xaa0] sm:$0xff]
    %v836 = vld [vmem:[#allocation8 + $0xaa8] sm:$0xff]
    %v837 = vld [vmem:[#allocation8 + $0xab0] sm:$0xff]
    %v838 = vld [vmem:[#allocation8 + $0xab8] sm:$0xff]
    %v839 = vld [vmem:[#allocation8 + $0xac0] sm:$0xff]
    %v840 = vld [vmem:[#allocation8 + $0xac8] sm:$0xff]
    %v841 = vld [vmem:[#allocation8 + $0xad0] sm:$0xff]
    %v842 = vld [vmem:[#allocation8 + $0xad8] sm:$0xff]
    %v843 = vld [vmem:[#allocation8 + $0xae0] sm:$0xff]
    %v844 = vld [vmem:[#allocation8 + $0xae8] sm:$0xff]
    %v845 = vld [vmem:[#allocation8 + $0xaf0] sm:$0xff]
    %v846 = vld [vmem:[#allocation8 + $0xaf8] sm:$0xff]
    %v847 = vld [vmem:[#allocation8 + $0xb00] sm:$0xff]
    %v848 = vld [vmem:[#allocation8 + $0xb08] sm:$0xff]
    %v849 = vld [vmem:[#allocation8 + $0xb10] sm:$0xff]
    %v850 = vld [vmem:[#allocation8 + $0xb18] sm:$0xff]
    %v851 = vld [vmem:[#allocation8 + $0xb20] sm:$0xff]
    %v852 = vld [vmem:[#allocation8 + $0xb28] sm:$0xff]
    %v853 = vld [vmem:[#allocation8 + $0xb30] sm:$0xff]
    %v854 = vld [vmem:[#allocation8 + $0xb38] sm:$0xff]
    %v855 = vld [vmem:[#allocation8 + $0xb40] sm:$0xff]
    %v856 = vld [vmem:[#allocation8 + $0xb48] sm:$0xff]
    %v857 = vld [vmem:[#allocation8 + $0xb50] sm:$0xff]
    %v858 = vld [vmem:[#allocation8 + $0xb58] sm:$0xff]
    %v859 = vld [vmem:[#allocation8 + $0xb60] sm:$0xff]
    %v860 = vld [vmem:[#allocation8 + $0xb68] sm:$0xff]
    %v861 = vld [vmem:[#allocation8 + $0xb70] sm:$0xff]
    %v862 = vld [vmem:[#allocation8 + $0xb78] sm:$0xff]
    %v863 = vld [vmem:[#allocation8 + $0xb80] sm:$0xff]
    %v864 = vld [vmem:[#allocation8 + $0xb88] sm:$0xff]
    %v865 = vld [vmem:[#allocation8 + $0xb90] sm:$0xff]
    %v866 = vld [vmem:[#allocation8 + $0xb98] sm:$0xff]
    %v867 = vld [vmem:[#allocation8 + $0xba0] sm:$0xff]
    %v868 = vld [vmem:[#allocation8 + $0xba8] sm:$0xff]
    %v869 = vld [vmem:[#allocation8 + $0xbb0] sm:$0xff]
    %v870 = vld [vmem:[#allocation8 + $0xbb8] sm:$0xff]
    %v871 = vld [vmem:[#allocation8 + $0xbc0] sm:$0xff]
    %v872 = vld [vmem:[#allocation8 + $0xbc8] sm:$0xff]
    %v873 = vld [vmem:[#allocation8 + $0xbd0] sm:$0xff]
    %v874 = vld [vmem:[#allocation8 + $0xbd8] sm:$0xff]
    %v875 = vld [vmem:[#allocation8 + $0xbe0] sm:$0xff]
    %v876 = vld [vmem:[#allocation8 + $0xbe8] sm:$0xff]
    %v877 = vld [vmem:[#allocation8 + $0xbf0] sm:$0xff]
    %v878 = vld [vmem:[#allocation8 + $0xbf8] sm:$0xff]
    %v879 = vld [vmem:[#allocation8 + $0xc00] sm:$0xff]
    %v880 = vld [vmem:[#allocation8 + $0xc08] sm:$0xff]
    %v881 = vld [vmem:[#allocation8 + $0xc10] sm:$0xff]
    %v882 = vld [vmem:[#allocation8 + $0xc18] sm:$0xff]
    %v883 = vld [vmem:[#allocation8 + $0xc20] sm:$0xff]
    %v884 = vld [vmem:[#allocation8 + $0xc28] sm:$0xff]
    %v885 = vld [vmem:[#allocation8 + $0xc30] sm:$0xff]
    %v886 = vld [vmem:[#allocation8 + $0xc38] sm:$0xff]
    %v887 = vld [vmem:[#allocation8 + $0xc40] sm:$0xff]
    %v888 = vld [vmem:[#allocation8 + $0xc48] sm:$0xff]
    %v889 = vld [vmem:[#allocation8 + $0xc50] sm:$0xff]
    %v890 = vld [vmem:[#allocation8 + $0xc58] sm:$0xff]
    %v891 = vld [vmem:[#allocation8 + $0xc60] sm:$0xff]
    %v892 = vld [vmem:[#allocation8 + $0xc68] sm:$0xff]
    %v893 = vld [vmem:[#allocation8 + $0xc70] sm:$0xff]
    %v894 = vld [vmem:[#allocation8 + $0xc78] sm:$0xff]
    %v895 = vld [vmem:[#allocation8 + $0xc80] sm:$0xff]
    %v896 = vld [vmem:[#allocation8 + $0xc88] sm:$0xff]
    %v897 = vld [vmem:[#allocation8 + $0xc90] sm:$0xff]
    %v898 = vld [vmem:[#allocation8 + $0xc98] sm:$0xff]
    %v899 = vld [vmem:[#allocation8 + $0xca0] sm:$0xff]
    %v900 = vld [vmem:[#allocation8 + $0xca8] sm:$0xff]
    %v901 = vld [vmem:[#allocation8 + $0xcb0] sm:$0xff]
    %v902 = vld [vmem:[#allocation8 + $0xcb8] sm:$0xff]
    %v903 = vld [vmem:[#allocation8 + $0xcc0] sm:$0xff]
    %v904 = vld [vmem:[#allocation8 + $0xcc8] sm:$0xff]
    %v905 = vld [vmem:[#allocation8 + $0xcd0] sm:$0xff]
    %v906 = vld [vmem:[#allocation8 + $0xcd8] sm:$0xff]
    %v907 = vld [vmem:[#allocation8 + $0xce0] sm:$0xff]
    %v908 = vld [vmem:[#allocation8 + $0xce8] sm:$0xff]
    %v909 = vld [vmem:[#allocation8 + $0xcf0] sm:$0xff]
    %v910 = vld [vmem:[#allocation8 + $0xcf8] sm:$0xff]
    %v911 = vld [vmem:[#allocation8 + $0xd00] sm:$0xff]
    %v912 = vld [vmem:[#allocation8 + $0xd08] sm:$0xff]
    %v913 = vld [vmem:[#allocation8 + $0xd10] sm:$0xff]
    %v914 = vld [vmem:[#allocation8 + $0xd18] sm:$0xff]
    %v915 = vld [vmem:[#allocation8 + $0xd20] sm:$0xff]
    %v916 = vld [vmem:[#allocation8 + $0xd28] sm:$0xff]
    %v917 = vld [vmem:[#allocation8 + $0xd30] sm:$0xff]
    %v918 = vld [vmem:[#allocation8 + $0xd38] sm:$0xff]
    %v919 = vld [vmem:[#allocation8 + $0xd40] sm:$0xff]
    %v920 = vld [vmem:[#allocation8 + $0xd48] sm:$0xff]
    %v921 = vld [vmem:[#allocation8 + $0xd50] sm:$0xff]
    %v922 = vld [vmem:[#allocation8 + $0xd58] sm:$0xff]
    %v923 = vld [vmem:[#allocation8 + $0xd60] sm:$0xff]
    %v924 = vld [vmem:[#allocation8 + $0xd68] sm:$0xff]
    %v925 = vld [vmem:[#allocation8 + $0xd70] sm:$0xff]
    %v926 = vld [vmem:[#allocation8 + $0xd78] sm:$0xff]
    %v927 = vld [vmem:[#allocation8 + $0xd80] sm:$0xff]
    %v928 = vld [vmem:[#allocation8 + $0xd88] sm:$0xff]
    %v929 = vld [vmem:[#allocation8 + $0xd90] sm:$0xff]
    %v930 = vld [vmem:[#allocation8 + $0xd98] sm:$0xff]
    %v931 = vld [vmem:[#allocation8 + $0xda0] sm:$0xff]
    %v932 = vld [vmem:[#allocation8 + $0xda8] sm:$0xff]
    %v933 = vld [vmem:[#allocation8 + $0xdb0] sm:$0xff]
    %v934 = vld [vmem:[#allocation8 + $0xdb8] sm:$0xff]
    %v935 = vld [vmem:[#allocation8 + $0xdc0] sm:$0xff]
    %v936 = vld [vmem:[#allocation8 + $0xdc8] sm:$0xff]
    %v937 = vld [vmem:[#allocation8 + $0xdd0] sm:$0xff]
    %v938 = vld [vmem:[#allocation8 + $0xdd8] sm:$0xff]
    %v939 = vld [vmem:[#allocation8 + $0xde0] sm:$0xff]
    %v940 = vld [vmem:[#allocation8 + $0xde8] sm:$0xff]
    %v941 = vld [vmem:[#allocation8 + $0xdf0] sm:$0xff]
    %v942 = vld [vmem:[#allocation8 + $0xdf8] sm:$0xff]
    %v943 = vld [vmem:[#allocation8 + $0xe00] sm:$0xff]
    %v944 = vld [vmem:[#allocation8 + $0xe08] sm:$0xff]
    %v945 = vld [vmem:[#allocation8 + $0xe10] sm:$0xff]
    %v946 = vld [vmem:[#allocation8 + $0xe18] sm:$0xff]
    %v947 = vld [vmem:[#allocation8 + $0xe20] sm:$0xff]
    %v948 = vld [vmem:[#allocation8 + $0xe28] sm:$0xff]
    %v949 = vld [vmem:[#allocation8 + $0xe30] sm:$0xff]
    %v950 = vld [vmem:[#allocation8 + $0xe38] sm:$0xff]
    %v951 = vld [vmem:[#allocation8 + $0xe40] sm:$0xff]
    %v952 = vld [vmem:[#allocation8 + $0xe48] sm:$0xff]
    %v953 = vld [vmem:[#allocation8 + $0xe50] sm:$0xff]
    %v954 = vld [vmem:[#allocation8 + $0xe58] sm:$0xff]
    %v955 = vld [vmem:[#allocation8 + $0xe60] sm:$0xff]
    %v956 = vld [vmem:[#allocation8 + $0xe68] sm:$0xff]
    %v957 = vld [vmem:[#allocation8 + $0xe70] sm:$0xff]
    %v958 = vld [vmem:[#allocation8 + $0xe78] sm:$0xff]
    %v959 = vld [vmem:[#allocation8 + $0xe80] sm:$0xff]
    %v960 = vld [vmem:[#allocation8 + $0xe88] sm:$0xff]
    %v961 = vld [vmem:[#allocation8 + $0xe90] sm:$0xff]
    %v962 = vld [vmem:[#allocation8 + $0xe98] sm:$0xff]
    %v963 = vld [vmem:[#allocation8 + $0xea0] sm:$0xff]
    %v964 = vld [vmem:[#allocation8 + $0xea8] sm:$0xff]
    %v965 = vld [vmem:[#allocation8 + $0xeb0] sm:$0xff]
    %v966 = vld [vmem:[#allocation8 + $0xeb8] sm:$0xff]
    %v967 = vld [vmem:[#allocation8 + $0xec0] sm:$0xff]
    %v968 = vld [vmem:[#allocation8 + $0xec8] sm:$0xff]
    %v969 = vld [vmem:[#allocation8 + $0xed0] sm:$0xff]
    %v970 = vld [vmem:[#allocation8 + $0xed8] sm:$0xff]
    %v971 = vld [vmem:[#allocation8 + $0xee0] sm:$0xff]
    %v972 = vld [vmem:[#allocation8 + $0xee8] sm:$0xff]
    %v973 = vld [vmem:[#allocation8 + $0xef0] sm:$0xff]
    %v974 = vld [vmem:[#allocation8 + $0xef8] sm:$0xff]
    %v975 = vld [vmem:[#allocation8 + $0xf00] sm:$0xff]
    %v976 = vld [vmem:[#allocation8 + $0xf08] sm:$0xff]
    %v977 = vld [vmem:[#allocation8 + $0xf10] sm:$0xff]
    %v978 = vld [vmem:[#allocation8 + $0xf18] sm:$0xff]
    %v979 = vld [vmem:[#allocation8 + $0xf20] sm:$0xff]
    %v980 = vld [vmem:[#allocation8 + $0xf28] sm:$0xff]
    %v981 = vld [vmem:[#allocation8 + $0xf30] sm:$0xff]
    %v982 = vld [vmem:[#allocation8 + $0xf38] sm:$0xff]
    %v983 = vld [vmem:[#allocation8 + $0xf40] sm:$0xff]
    %v984 = vld [vmem:[#allocation8 + $0xf48] sm:$0xff]
    %v985 = vld [vmem:[#allocation8 + $0xf50] sm:$0xff]
    %v986 = vld [vmem:[#allocation8 + $0xf58] sm:$0xff]
    %v987 = vld [vmem:[#allocation8 + $0xf60] sm:$0xff]
    %v988 = vld [vmem:[#allocation8 + $0xf68] sm:$0xff]
    %v989 = vld [vmem:[#allocation8 + $0xf70] sm:$0xff]
    %v990 = vld [vmem:[#allocation8 + $0xf78] sm:$0xff]
    %v991 = vld [vmem:[#allocation8 + $0xf80] sm:$0xff]
    %v992 = vld [vmem:[#allocation8 + $0xf88] sm:$0xff]
    %v993 = vld [vmem:[#allocation8 + $0xf90] sm:$0xff]
    %v994 = vld [vmem:[#allocation8 + $0xf98] sm:$0xff]
    %v995 = vld [vmem:[#allocation8 + $0xfa0] sm:$0xff]
    %v996 = vld [vmem:[#allocation8 + $0xfa8] sm:$0xff]
    %v997 = vld [vmem:[#allocation8 + $0xfb0] sm:$0xff]
    %v998 = vld [vmem:[#allocation8 + $0xfb8] sm:$0xff]
    %v999 = vld [vmem:[#allocation8 + $0xfc0] sm:$0xff]
    %v1000 = vld [vmem:[#allocation8 + $0xfc8] sm:$0xff]
    %v1001 = vld [vmem:[#allocation8 + $0xfd0] sm:$0xff]
    %v1002 = vld [vmem:[#allocation8 + $0xfd8] sm:$0xff]
    %v1003 = vld [vmem:[#allocation8 + $0xfe0] sm:$0xff]
    %v1004 = vld [vmem:[#allocation8 + $0xfe8] sm:$0xff]
    %v1005 = vld [vmem:[#allocation8 + $0xff0] sm:$0xff]
    %v1006 = vld [vmem:[#allocation8 + $0xff8] sm:$0xff]
    %v1007 = vld [vmem:[#allocation8 + $0x1000] sm:$0xff]
    %v1008 = vld [vmem:[#allocation8 + $0x1008] sm:$0xff]
    %v1009 = vld [vmem:[#allocation8 + $0x1010] sm:$0xff]
    %v1010 = vld [vmem:[#allocation8 + $0x1018] sm:$0xff]
    %v1011 = vld [vmem:[#allocation8 + $0x1020] sm:$0xff]
    %v1012 = vld [vmem:[#allocation8 + $0x1028] sm:$0xff]
    %v1013 = vld [vmem:[#allocation8 + $0x1030] sm:$0xff]
    %v1014 = vld [vmem:[#allocation8 + $0x1038] sm:$0xff]
    %v1015 = vld [vmem:[#allocation8 + $0x1040] sm:$0xff]
    %v1016 = vld [vmem:[#allocation8 + $0x1048] sm:$0xff]
    %v1017 = vld [vmem:[#allocation8 + $0x1050] sm:$0xff]
    %v1018 = vld [vmem:[#allocation8 + $0x1058] sm:$0xff]
    %v1019 = vld [vmem:[#allocation8 + $0x1060] sm:$0xff]
    %v1020 = vld [vmem:[#allocation8 + $0x1068] sm:$0xff]
    %v1021 = vld [vmem:[#allocation8 + $0x1070] sm:$0xff]
    %v1022 = vld [vmem:[#allocation8 + $0x1078] sm:$0xff]
    %v1023 = vld [vmem:[#allocation8 + $0x1080] sm:$0xff]
    %v1024 = vld [vmem:[#allocation8 + $0x1088] sm:$0xff]
    %v1025 = vld [vmem:[#allocation8 + $0x1090] sm:$0xff]
    %v1026 = vld [vmem:[#allocation8 + $0x1098] sm:$0xff]
    %v1027 = vld [vmem:[#allocation8 + $0x10a0] sm:$0xff]
    %v1028 = vld [vmem:[#allocation8 + $0x10a8] sm:$0xff]
    %v1029 = vld [vmem:[#allocation8 + $0x10b0] sm:$0xff]
    %v1030 = vld [vmem:[#allocation8 + $0x10b8] sm:$0xff]
    %v1031 = vld [vmem:[#allocation8 + $0x10c0] sm:$0xff]
    %v1032 = vld [vmem:[#allocation8 + $0x10c8] sm:$0xff]
    %v1033 = vld [vmem:[#allocation8 + $0x10d0] sm:$0xff]
    %v1034 = vld [vmem:[#allocation8 + $0x10d8] sm:$0xff]
    %v1035 = vld [vmem:[#allocation8 + $0x10e0] sm:$0xff]
    %v1036 = vld [vmem:[#allocation8 + $0x10e8] sm:$0xff]
    %v1037 = vld [vmem:[#allocation8 + $0x10f0] sm:$0xff]
    %v1038 = vld [vmem:[#allocation8 + $0x10f8] sm:$0xff]
    %v1039 = vld [vmem:[#allocation8 + $0x1100] sm:$0xff]
    %v1040 = vld [vmem:[#allocation8 + $0x1108] sm:$0xff]
    %v1041 = vld [vmem:[#allocation8 + $0x1110] sm:$0xff]
    %v1042 = vld [vmem:[#allocation8 + $0x1118] sm:$0xff]
    %v1043 = vld [vmem:[#allocation8 + $0x1120] sm:$0xff]
    %v1044 = vld [vmem:[#allocation8 + $0x1128] sm:$0xff]
    %v1045 = vld [vmem:[#allocation8 + $0x1130] sm:$0xff]
    %v1046 = vld [vmem:[#allocation8 + $0x1138] sm:$0xff]
    %v1047 = vld [vmem:[#allocation8 + $0x1140] sm:$0xff]
    %v1048 = vld [vmem:[#allocation8 + $0x1148] sm:$0xff]
    %v1049 = vld [vmem:[#allocation8 + $0x1150] sm:$0xff]
    %v1050 = vld [vmem:[#allocation8 + $0x1158] sm:$0xff]
    %v1051 = vld [vmem:[#allocation8 + $0x1160] sm:$0xff]
    %v1052 = vld [vmem:[#allocation8 + $0x1168] sm:$0xff]
    %v1053 = vld [vmem:[#allocation8 + $0x1170] sm:$0xff]
    %v1054 = vld [vmem:[#allocation8 + $0x1178] sm:$0xff]
    %v1055 = vld [vmem:[#allocation8 + $0x1180] sm:$0xff]
    %v1056 = vld [vmem:[#allocation8 + $0x1188] sm:$0xff]
    %v1057 = vld [vmem:[#allocation8 + $0x1190] sm:$0xff]
    %v1058 = vld [vmem:[#allocation8 + $0x1198] sm:$0xff]
    %v1059 = vld [vmem:[#allocation8 + $0x11a0] sm:$0xff]
    %v1060 = vld [vmem:[#allocation8 + $0x11a8] sm:$0xff]
    %v1061 = vld [vmem:[#allocation8 + $0x11b0] sm:$0xff]
    %v1062 = vld [vmem:[#allocation8 + $0x11b8] sm:$0xff]
    %v1063 = vld [vmem:[#allocation8 + $0x11c0] sm:$0xff]
    %v1064 = vld [vmem:[#allocation8 + $0x11c8] sm:$0xff]
    %v1065 = vld [vmem:[#allocation8 + $0x11d0] sm:$0xff]
    %v1066 = vld [vmem:[#allocation8 + $0x11d8] sm:$0xff]
    %v1067 = vld [vmem:[#allocation8 + $0x11e0] sm:$0xff]
    %v1068 = vld [vmem:[#allocation8 + $0x11e8] sm:$0xff]
    %v1069 = vld [vmem:[#allocation8 + $0x11f0] sm:$0xff]
    %v1070 = vld [vmem:[#allocation8 + $0x11f8] sm:$0xff]
    %v1071 = vld [vmem:[#allocation8 + $0x1200] sm:$0xff]
    %v1072 = vld [vmem:[#allocation8 + $0x1208] sm:$0xff]
    %v1073 = vld [vmem:[#allocation8 + $0x1210] sm:$0xff]
    %v1074 = vld [vmem:[#allocation8 + $0x1218] sm:$0xff]
    %v1075 = vld [vmem:[#allocation8 + $0x1220] sm:$0xff]
    %v1076 = vld [vmem:[#allocation8 + $0x1228] sm:$0xff]
    %v1077 = vld [vmem:[#allocation8 + $0x1230] sm:$0xff]
    %v1078 = vld [vmem:[#allocation8 + $0x1238] sm:$0xff]
    %v1079 = vld [vmem:[#allocation8 + $0x1240] sm:$0xff]
    %v1080 = vld [vmem:[#allocation8 + $0x1248] sm:$0xff]
    %v1081 = vld [vmem:[#allocation8 + $0x1250] sm:$0xff]
    %v1082 = vld [vmem:[#allocation8 + $0x1258] sm:$0xff]
    %v1083 = vld [vmem:[#allocation8 + $0x1260] sm:$0xff]
    %v1084 = vld [vmem:[#allocation8 + $0x1268] sm:$0xff]
    %v1085 = vld [vmem:[#allocation8 + $0x1270] sm:$0xff]
    %v1086 = vld [vmem:[#allocation8 + $0x1278] sm:$0xff]
    %v1087 = vld [vmem:[#allocation8 + $0x1280] sm:$0xff]
    %v1088 = vld [vmem:[#allocation8 + $0x1288] sm:$0xff]
    %v1089 = vld [vmem:[#allocation8 + $0x1290] sm:$0xff]
    %v1090 = vld [vmem:[#allocation8 + $0x1298] sm:$0xff]
    %v1091 = vld [vmem:[#allocation8 + $0x12a0] sm:$0xff]
    %v1092 = vld [vmem:[#allocation8 + $0x12a8] sm:$0xff]
    %v1093 = vld [vmem:[#allocation8 + $0x12b0] sm:$0xff]
    %v1094 = vld [vmem:[#allocation8 + $0x12b8] sm:$0xff]
    %v1095 = vld [vmem:[#allocation8 + $0x12c0] sm:$0xff]
    %v1096 = vld [vmem:[#allocation8 + $0x12c8] sm:$0xff]
    %v1097 = vld [vmem:[#allocation8 + $0x12d0] sm:$0xff]
    %v1098 = vld [vmem:[#allocation8 + $0x12d8] sm:$0xff]
    %v1099 = vld [vmem:[#allocation8 + $0x12e0] sm:$0xff]
    %v1100 = vld [vmem:[#allocation8 + $0x12e8] sm:$0xff]
    %v1101 = vld [vmem:[#allocation8 + $0x12f0] sm:$0xff]
    %v1102 = vld [vmem:[#allocation8 + $0x12f8] sm:$0xff]
    %v1103 = vld [vmem:[#allocation8 + $0x1300] sm:$0xff]
    %v1104 = vld [vmem:[#allocation8 + $0x1308] sm:$0xff]
    %v1105 = vld [vmem:[#allocation8 + $0x1310] sm:$0xff]
    %v1106 = vld [vmem:[#allocation8 + $0x1318] sm:$0xff]
    %v1107 = vld [vmem:[#allocation8 + $0x1320] sm:$0xff]
    %v1108 = vld [vmem:[#allocation8 + $0x1328] sm:$0xff]
    %v1109 = vld [vmem:[#allocation8 + $0x1330] sm:$0xff]
    %v1110 = vld [vmem:[#allocation8 + $0x1338] sm:$0xff]
    %v1111 = vld [vmem:[#allocation8 + $0x1340] sm:$0xff]
    %v1112 = vld [vmem:[#allocation8 + $0x1348] sm:$0xff]
    %v1113 = vld [vmem:[#allocation8 + $0x1350] sm:$0xff]
    %v1114 = vld [vmem:[#allocation8 + $0x1358] sm:$0xff]
    %v1115 = vld [vmem:[#allocation8 + $0x1360] sm:$0xff]
    %v1116 = vld [vmem:[#allocation8 + $0x1368] sm:$0xff]
    %v1117 = vld [vmem:[#allocation8 + $0x1370] sm:$0xff]
    %v1118 = vld [vmem:[#allocation8 + $0x1378] sm:$0xff]
    %v1119 = vld [vmem:[#allocation8 + $0x1380] sm:$0xff]
    %v1120 = vld [vmem:[#allocation8 + $0x1388] sm:$0xff]
    %v1121 = vld [vmem:[#allocation8 + $0x1390] sm:$0xff]
    %v1122 = vld [vmem:[#allocation8 + $0x1398] sm:$0xff]
    %v1123 = vld [vmem:[#allocation8 + $0x13a0] sm:$0xff]
    %v1124 = vld [vmem:[#allocation8 + $0x13a8] sm:$0xff]
    %v1125 = vld [vmem:[#allocation8 + $0x13b0] sm:$0xff]
    %v1126 = vld [vmem:[#allocation8 + $0x13b8] sm:$0xff]
    %v1127 = vld [vmem:[#allocation8 + $0x13c0] sm:$0xff]
    %v1128 = vld [vmem:[#allocation8 + $0x13c8] sm:$0xff]
    %v1129 = vld [vmem:[#allocation8 + $0x13d0] sm:$0xff]
    %v1130 = vld [vmem:[#allocation8 + $0x13d8] sm:$0xff]
    %v1131 = vld [vmem:[#allocation8 + $0x13e0] sm:$0xff]
    %v1132 = vld [vmem:[#allocation8 + $0x13e8] sm:$0xff]
    %v1133 = vld [vmem:[#allocation8 + $0x13f0] sm:$0xff]
    %v1134 = vld [vmem:[#allocation8 + $0x13f8] sm:$0xff]
    %v1135 = vld [vmem:[#allocation8 + $0x1400] sm:$0xff]
    %v1136 = vld [vmem:[#allocation8 + $0x1408] sm:$0xff]
    %v1137 = vld [vmem:[#allocation8 + $0x1410] sm:$0xff]
    %v1138 = vld [vmem:[#allocation8 + $0x1418] sm:$0xff]
    %v1139 = vld [vmem:[#allocation8 + $0x1420] sm:$0xff]
    %v1140 = vld [vmem:[#allocation8 + $0x1428] sm:$0xff]
    %v1141 = vld [vmem:[#allocation8 + $0x1430] sm:$0xff]
    %v1142 = vld [vmem:[#allocation8 + $0x1438] sm:$0xff]
    %v1143 = vld [vmem:[#allocation8 + $0x1440] sm:$0xff]
    %v1144 = vld [vmem:[#allocation8 + $0x1448] sm:$0xff]
    %v1145 = vld [vmem:[#allocation8 + $0x1450] sm:$0xff]
    %v1146 = vld [vmem:[#allocation8 + $0x1458] sm:$0xff]
    %v1147 = vld [vmem:[#allocation8 + $0x1460] sm:$0xff]
    %v1148 = vld [vmem:[#allocation8 + $0x1468] sm:$0xff]
    %v1149 = vld [vmem:[#allocation8 + $0x1470] sm:$0xff]
    %v1150 = vld [vmem:[#allocation8 + $0x1478] sm:$0xff]
    %v1151 = vld [vmem:[#allocation8 + $0x1480] sm:$0xff]
    %v1152 = vld [vmem:[#allocation8 + $0x1488] sm:$0xff]
    %v1153 = vld [vmem:[#allocation8 + $0x1490] sm:$0xff]
    %v1154 = vld [vmem:[#allocation8 + $0x1498] sm:$0xff]
    %v1155 = vld [vmem:[#allocation8 + $0x14a0] sm:$0xff]
    %v1156 = vld [vmem:[#allocation8 + $0x14a8] sm:$0xff]
    %v1157 = vld [vmem:[#allocation8 + $0x14b0] sm:$0xff]
    %v1158 = vld [vmem:[#allocation8 + $0x14b8] sm:$0xff]
    %v1159 = vld [vmem:[#allocation8 + $0x14c0] sm:$0xff]
    %v1160 = vld [vmem:[#allocation8 + $0x14c8] sm:$0xff]
    %v1161 = vld [vmem:[#allocation8 + $0x14d0] sm:$0xff]
    %v1162 = vld [vmem:[#allocation8 + $0x14d8] sm:$0xff]
    %v1163 = vld [vmem:[#allocation8 + $0x14e0] sm:$0xff]
    %v1164 = vld [vmem:[#allocation8 + $0x14e8] sm:$0xff]
    %v1165 = vld [vmem:[#allocation8 + $0x14f0] sm:$0xff]
    %v1166 = vld [vmem:[#allocation8 + $0x14f8] sm:$0xff]
    %v1167 = vld [vmem:[#allocation8 + $0x1500] sm:$0xff]
    %v1168 = vld [vmem:[#allocation8 + $0x1508] sm:$0xff]
    %v1169 = vld [vmem:[#allocation8 + $0x1510] sm:$0xff]
    %v1170 = vld [vmem:[#allocation8 + $0x1518] sm:$0xff]
    %v1171 = vld [vmem:[#allocation8 + $0x1520] sm:$0xff]
    %v1172 = vld [vmem:[#allocation8 + $0x1528] sm:$0xff]
    %v1173 = vld [vmem:[#allocation8 + $0x1530] sm:$0xff]
    %v1174 = vld [vmem:[#allocation8 + $0x1538] sm:$0xff]
    %v1175 = vld [vmem:[#allocation8 + $0x1540] sm:$0xff]
    %v1176 = vld [vmem:[#allocation8 + $0x1548] sm:$0xff]
    %v1177 = vld [vmem:[#allocation8 + $0x1550] sm:$0xff]
    %v1178 = vld [vmem:[#allocation8 + $0x1558] sm:$0xff]
    %v1179 = vld [vmem:[#allocation8 + $0x1560] sm:$0xff]
    %v1180 = vld [vmem:[#allocation8 + $0x1568] sm:$0xff]
    %v1181 = vld [vmem:[#allocation8 + $0x1570] sm:$0xff]
    %v1182 = vld [vmem:[#allocation8 + $0x1578] sm:$0xff]
    %v1183 = vld [vmem:[#allocation8 + $0x1580] sm:$0xff]
    %v1184 = vld [vmem:[#allocation8 + $0x1588] sm:$0xff]
    %v1185 = vld [vmem:[#allocation8 + $0x1590] sm:$0xff]
    %v1186 = vld [vmem:[#allocation8 + $0x1598] sm:$0xff]
    %v1187 = vld [vmem:[#allocation8 + $0x15a0] sm:$0xff]
    %v1188 = vld [vmem:[#allocation8 + $0x15a8] sm:$0xff]
    %v1189 = vld [vmem:[#allocation8 + $0x15b0] sm:$0xff]
    %v1190 = vld [vmem:[#allocation8 + $0x15b8] sm:$0xff]
    %v1191 = vld [vmem:[#allocation8 + $0x15c0] sm:$0xff]
    %v1192 = vld [vmem:[#allocation8 + $0x15c8] sm:$0xff]
    %v1193 = vld [vmem:[#allocation8 + $0x15d0] sm:$0xff]
    %v1194 = vld [vmem:[#allocation8 + $0x15d8] sm:$0xff]
    %v1195 = vld [vmem:[#allocation8 + $0x15e0] sm:$0xff]
    %v1196 = vld [vmem:[#allocation8 + $0x15e8] sm:$0xff]
    %v1197 = vld [vmem:[#allocation8 + $0x15f0] sm:$0xff]
    %v1198 = vld [vmem:[#allocation8 + $0x15f8] sm:$0xff]
    %v1199 = vld [vmem:[#allocation8 + $0x1600] sm:$0xff]
    %v1200 = vld [vmem:[#allocation8 + $0x1608] sm:$0xff]
    %v1201 = vld [vmem:[#allocation8 + $0x1610] sm:$0xff]
    %v1202 = vld [vmem:[#allocation8 + $0x1618] sm:$0xff]
    %v1203 = vld [vmem:[#allocation8 + $0x1620] sm:$0xff]
    %v1204 = vld [vmem:[#allocation8 + $0x1628] sm:$0xff]
    %v1205 = vld [vmem:[#allocation8 + $0x1630] sm:$0xff]
    %v1206 = vld [vmem:[#allocation8 + $0x1638] sm:$0xff]
    %v1207 = vld [vmem:[#allocation8 + $0x1640] sm:$0xff]
    %v1208 = vld [vmem:[#allocation8 + $0x1648] sm:$0xff]
    %v1209 = vld [vmem:[#allocation8 + $0x1650] sm:$0xff]
    %v1210 = vld [vmem:[#allocation8 + $0x1658] sm:$0xff]
    %v1211 = vld [vmem:[#allocation8 + $0x1660] sm:$0xff]
    %v1212 = vld [vmem:[#allocation8 + $0x1668] sm:$0xff]
    %v1213 = vld [vmem:[#allocation8 + $0x1670] sm:$0xff]
    %v1214 = vld [vmem:[#allocation8 + $0x1678] sm:$0xff]
    %v1215 = vld [vmem:[#allocation8 + $0x1680] sm:$0xff]
    %v1216 = vld [vmem:[#allocation8 + $0x1688] sm:$0xff]
    %v1217 = vld [vmem:[#allocation8 + $0x1690] sm:$0xff]
    %v1218 = vld [vmem:[#allocation8 + $0x1698] sm:$0xff]
    %v1219 = vld [vmem:[#allocation8 + $0x16a0] sm:$0xff]
    %v1220 = vld [vmem:[#allocation8 + $0x16a8] sm:$0xff]
    %v1221 = vld [vmem:[#allocation8 + $0x16b0] sm:$0xff]
    %v1222 = vld [vmem:[#allocation8 + $0x16b8] sm:$0xff]
    %v1223 = vld [vmem:[#allocation8 + $0x16c0] sm:$0xff]
    %v1224 = vld [vmem:[#allocation8 + $0x16c8] sm:$0xff]
    %v1225 = vld [vmem:[#allocation8 + $0x16d0] sm:$0xff]
    %v1226 = vld [vmem:[#allocation8 + $0x16d8] sm:$0xff]
    %v1227 = vld [vmem:[#allocation8 + $0x16e0] sm:$0xff]
    %v1228 = vld [vmem:[#allocation8 + $0x16e8] sm:$0xff]
    %v1229 = vld [vmem:[#allocation8 + $0x16f0] sm:$0xff]
    %v1230 = vld [vmem:[#allocation8 + $0x16f8] sm:$0xff]
    %v1231 = vld [vmem:[#allocation8 + $0x1700] sm:$0xff]
    %v1232 = vld [vmem:[#allocation8 + $0x1708] sm:$0xff]
    %v1233 = vld [vmem:[#allocation8 + $0x1710] sm:$0xff]
    %v1234 = vld [vmem:[#allocation8 + $0x1718] sm:$0xff]
    %v1235 = vld [vmem:[#allocation8 + $0x1720] sm:$0xff]
    %v1236 = vld [vmem:[#allocation8 + $0x1728] sm:$0xff]
    %v1237 = vld [vmem:[#allocation8 + $0x1730] sm:$0xff]
    %v1238 = vld [vmem:[#allocation8 + $0x1738] sm:$0xff]
    %v1239 = vld [vmem:[#allocation8 + $0x1740] sm:$0xff]
    %v1240 = vld [vmem:[#allocation8 + $0x1748] sm:$0xff]
    %v1241 = vld [vmem:[#allocation8 + $0x1750] sm:$0xff]
    %v1242 = vld [vmem:[#allocation8 + $0x1758] sm:$0xff]
    %v1243 = vld [vmem:[#allocation8 + $0x1760] sm:$0xff]
    %v1244 = vld [vmem:[#allocation8 + $0x1768] sm:$0xff]
    %v1245 = vld [vmem:[#allocation8 + $0x1770] sm:$0xff]
    %v1246 = vld [vmem:[#allocation8 + $0x1778] sm:$0xff]
    %v1247 = vld [vmem:[#allocation8 + $0x1780] sm:$0xff]
    %v1248 = vld [vmem:[#allocation8 + $0x1788] sm:$0xff]
    %v1249 = vld [vmem:[#allocation8 + $0x1790] sm:$0xff]
    %v1250 = vld [vmem:[#allocation8 + $0x1798] sm:$0xff]
    %v1251 = vld [vmem:[#allocation8 + $0x17a0] sm:$0xff]
    %v1252 = vld [vmem:[#allocation8 + $0x17a8] sm:$0xff]
    %v1253 = vld [vmem:[#allocation8 + $0x17b0] sm:$0xff]
    %v1254 = vld [vmem:[#allocation8 + $0x17b8] sm:$0xff]
    %v1255 = vld [vmem:[#allocation8 + $0x17c0] sm:$0xff]
    %v1256 = vld [vmem:[#allocation8 + $0x17c8] sm:$0xff]
    %v1257 = vld [vmem:[#allocation8 + $0x17d0] sm:$0xff]
    %v1258 = vld [vmem:[#allocation8 + $0x17d8] sm:$0xff]
    %v1259 = vld [vmem:[#allocation8 + $0x17e0] sm:$0xff]
    %v1260 = vld [vmem:[#allocation8 + $0x17e8] sm:$0xff]
    %v1261 = vld [vmem:[#allocation8 + $0x17f0] sm:$0xff]
    %v1262 = vld [vmem:[#allocation8 + $0x17f8] sm:$0xff]
    %v1263 = vld [vmem:[#allocation8 + $0x1800] sm:$0xff]
    %v1264 = vld [vmem:[#allocation8 + $0x1808] sm:$0xff]
    %v1265 = vld [vmem:[#allocation8 + $0x1810] sm:$0xff]
    %v1266 = vld [vmem:[#allocation8 + $0x1818] sm:$0xff]
    %v1267 = vld [vmem:[#allocation8 + $0x1820] sm:$0xff]
    %v1268 = vld [vmem:[#allocation8 + $0x1828] sm:$0xff]
    %v1269 = vld [vmem:[#allocation8 + $0x1830] sm:$0xff]
    %v1270 = vld [vmem:[#allocation8 + $0x1838] sm:$0xff]
    %v1271 = vld [vmem:[#allocation8 + $0x1840] sm:$0xff]
    %v1272 = vld [vmem:[#allocation8 + $0x1848] sm:$0xff]
    %v1273 = vld [vmem:[#allocation8 + $0x1850] sm:$0xff]
    %v1274 = vld [vmem:[#allocation8 + $0x1858] sm:$0xff]
    %v1275 = vld [vmem:[#allocation8 + $0x1860] sm:$0xff]
    %v1276 = vld [vmem:[#allocation8 + $0x1868] sm:$0xff]
    %v1277 = vld [vmem:[#allocation8 + $0x1870] sm:$0xff]
    %v1278 = vld [vmem:[#allocation8 + $0x1878] sm:$0xff]
    %v1279 = vld [vmem:[#allocation8 + $0x1880] sm:$0xff]
    %v1280 = vld [vmem:[#allocation8 + $0x1888] sm:$0xff]
    %v1281 = vld [vmem:[#allocation8 + $0x1890] sm:$0xff]
    %v1282 = vld [vmem:[#allocation8 + $0x1898] sm:$0xff]
    %v1283 = vld [vmem:[#allocation8 + $0x18a0] sm:$0xff]
    %v1284 = vld [vmem:[#allocation8 + $0x18a8] sm:$0xff]
    %v1285 = vld [vmem:[#allocation8 + $0x18b0] sm:$0xff]
    %v1286 = vld [vmem:[#allocation8 + $0x18b8] sm:$0xff]
    %v1287 = vld [vmem:[#allocation8 + $0x18c0] sm:$0xff]
    %v1288 = vld [vmem:[#allocation8 + $0x18c8] sm:$0xff]
    %v1289 = vld [vmem:[#allocation8 + $0x18d0] sm:$0xff]
    %v1290 = vld [vmem:[#allocation8 + $0x18d8] sm:$0xff]
    %v1291 = vld [vmem:[#allocation8 + $0x18e0] sm:$0xff]
    %v1292 = vld [vmem:[#allocation8 + $0x18e8] sm:$0xff]
    %v1293 = vld [vmem:[#allocation8 + $0x18f0] sm:$0xff]
    %v1294 = vld [vmem:[#allocation8 + $0x18f8] sm:$0xff]
    %v1295 = vld [vmem:[#allocation8 + $0x1900] sm:$0xff]
    %v1296 = vld [vmem:[#allocation8 + $0x1908] sm:$0xff]
    %v1297 = vld [vmem:[#allocation8 + $0x1910] sm:$0xff]
    %v1298 = vld [vmem:[#allocation8 + $0x1918] sm:$0xff]
    %v1299 = vld [vmem:[#allocation8 + $0x1920] sm:$0xff]
    %v1300 = vld [vmem:[#allocation8 + $0x1928] sm:$0xff]
    %v1301 = vld [vmem:[#allocation8 + $0x1930] sm:$0xff]
    %v1302 = vld [vmem:[#allocation8 + $0x1938] sm:$0xff]
    %v1303 = vld [vmem:[#allocation8 + $0x1940] sm:$0xff]
    %v1304 = vld [vmem:[#allocation8 + $0x1948] sm:$0xff]
    %v1305 = vld [vmem:[#allocation8 + $0x1950] sm:$0xff]
    %v1306 = vld [vmem:[#allocation8 + $0x1958] sm:$0xff]
    %v1307 = vld [vmem:[#allocation8 + $0x1960] sm:$0xff]
    %v1308 = vld [vmem:[#allocation8 + $0x1968] sm:$0xff]
    %v1309 = vld [vmem:[#allocation8 + $0x1970] sm:$0xff]
    %v1310 = vld [vmem:[#allocation8 + $0x1978] sm:$0xff]
    %v1311 = vld [vmem:[#allocation8 + $0x1980] sm:$0xff]
    %v1312 = vld [vmem:[#allocation8 + $0x1988] sm:$0xff]
    %v1313 = vld [vmem:[#allocation8 + $0x1990] sm:$0xff]
    %v1314 = vld [vmem:[#allocation8 + $0x1998] sm:$0xff]
    %v1315 = vld [vmem:[#allocation8 + $0x19a0] sm:$0xff]
    %v1316 = vld [vmem:[#allocation8 + $0x19a8] sm:$0xff]
    %v1317 = vld [vmem:[#allocation8 + $0x19b0] sm:$0xff]
    %v1318 = vld [vmem:[#allocation8 + $0x19b8] sm:$0xff]
    %v1319 = vld [vmem:[#allocation8 + $0x19c0] sm:$0xff]
    %v1320 = vld [vmem:[#allocation8 + $0x19c8] sm:$0xff]
    %v1321 = vld [vmem:[#allocation8 + $0x19d0] sm:$0xff]
    %v1322 = vld [vmem:[#allocation8 + $0x19d8] sm:$0xff]
    %v1323 = vld [vmem:[#allocation8 + $0x19e0] sm:$0xff]
    %v1324 = vld [vmem:[#allocation8 + $0x19e8] sm:$0xff]
    %v1325 = vld [vmem:[#allocation8 + $0x19f0] sm:$0xff]
    %v1326 = vld [vmem:[#allocation8 + $0x19f8] sm:$0xff]
    %v1327 = vld [vmem:[#allocation8 + $0x1a00] sm:$0xff]
    %v1328 = vld [vmem:[#allocation8 + $0x1a08] sm:$0xff]
    %v1329 = vld [vmem:[#allocation8 + $0x1a10] sm:$0xff]
    %v1330 = vld [vmem:[#allocation8 + $0x1a18] sm:$0xff]
    %v1331 = vld [vmem:[#allocation8 + $0x1a20] sm:$0xff]
    %v1332 = vld [vmem:[#allocation8 + $0x1a28] sm:$0xff]
    %v1333 = vld [vmem:[#allocation8 + $0x1a30] sm:$0xff]
    %v1334 = vld [vmem:[#allocation8 + $0x1a38] sm:$0xff]
    %v1335 = vld [vmem:[#allocation8 + $0x1a40] sm:$0xff]
    %v1336 = vld [vmem:[#allocation8 + $0x1a48] sm:$0xff]
    %v1337 = vld [vmem:[#allocation8 + $0x1a50] sm:$0xff]
    %v1338 = vld [vmem:[#allocation8 + $0x1a58] sm:$0xff]
    %v1339 = vld [vmem:[#allocation8 + $0x1a60] sm:$0xff]
    %v1340 = vld [vmem:[#allocation8 + $0x1a68] sm:$0xff]
    %v1341 = vld [vmem:[#allocation8 + $0x1a70] sm:$0xff]
    %v1342 = vld [vmem:[#allocation8 + $0x1a78] sm:$0xff]
    %v1343 = vld [vmem:[#allocation8 + $0x1a80] sm:$0xff]
    %v1344 = vld [vmem:[#allocation8 + $0x1a88] sm:$0xff]
    %v1345 = vld [vmem:[#allocation8 + $0x1a90] sm:$0xff]
    %v1346 = vld [vmem:[#allocation8 + $0x1a98] sm:$0xff]
    %v1347 = vld [vmem:[#allocation8 + $0x1aa0] sm:$0xff]
    %v1348 = vld [vmem:[#allocation8 + $0x1aa8] sm:$0xff]
    %v1349 = vld [vmem:[#allocation8 + $0x1ab0] sm:$0xff]
    %v1350 = vld [vmem:[#allocation8 + $0x1ab8] sm:$0xff]
    %v1351 = vld [vmem:[#allocation8 + $0x1ac0] sm:$0xff]
    %v1352 = vld [vmem:[#allocation8 + $0x1ac8] sm:$0xff]
    %v1353 = vld [vmem:[#allocation8 + $0x1ad0] sm:$0xff]
    %v1354 = vld [vmem:[#allocation8 + $0x1ad8] sm:$0xff]
    %v1355 = vld [vmem:[#allocation8 + $0x1ae0] sm:$0xff]
    %v1356 = vld [vmem:[#allocation8 + $0x1ae8] sm:$0xff]
    %v1357 = vld [vmem:[#allocation8 + $0x1af0] sm:$0xff]
    %v1358 = vld [vmem:[#allocation8 + $0x1af8] sm:$0xff]
    %v1359 = vld [vmem:[#allocation8 + $0x1b00] sm:$0xff]
    %v1360 = vld [vmem:[#allocation8 + $0x1b08] sm:$0xff]
    %v1361 = vld [vmem:[#allocation8 + $0x1b10] sm:$0xff]
    %v1362 = vld [vmem:[#allocation8 + $0x1b18] sm:$0xff]
    %v1363 = vld [vmem:[#allocation8 + $0x1b20] sm:$0xff]
    %v1364 = vld [vmem:[#allocation8 + $0x1b28] sm:$0xff]
    %v1365 = vld [vmem:[#allocation8 + $0x1b30] sm:$0xff]
    %v1366 = vld [vmem:[#allocation8 + $0x1b38] sm:$0xff]
    %v1367 = vld [vmem:[#allocation8 + $0x1b40] sm:$0xff]
    %v1368 = vld [vmem:[#allocation8 + $0x1b48] sm:$0xff]
    %v1369 = vld [vmem:[#allocation8 + $0x1b50] sm:$0xff]
    %v1370 = vld [vmem:[#allocation8 + $0x1b58] sm:$0xff]
    %v1371 = vld [vmem:[#allocation8 + $0x1b60] sm:$0xff]
    %v1372 = vld [vmem:[#allocation8 + $0x1b68] sm:$0xff]
    %v1373 = vld [vmem:[#allocation8 + $0x1b70] sm:$0xff]
    %v1374 = vld [vmem:[#allocation8 + $0x1b78] sm:$0xff]
    %v1375 = vld [vmem:[#allocation8 + $0x1b80] sm:$0xff]
    %v1376 = vld [vmem:[#allocation8 + $0x1b88] sm:$0xff]
    %v1377 = vld [vmem:[#allocation8 + $0x1b90] sm:$0xff]
    %v1378 = vld [vmem:[#allocation8 + $0x1b98] sm:$0xff]
    %v1379 = vld [vmem:[#allocation8 + $0x1ba0] sm:$0xff]
    %v1380 = vld [vmem:[#allocation8 + $0x1ba8] sm:$0xff]
    %v1381 = vld [vmem:[#allocation8 + $0x1bb0] sm:$0xff]
    %v1382 = vld [vmem:[#allocation8 + $0x1bb8] sm:$0xff]
    %v1383 = vld [vmem:[#allocation8 + $0x1bc0] sm:$0xff]
    %v1384 = vld [vmem:[#allocation8 + $0x1bc8] sm:$0xff]
    %v1385 = vld [vmem:[#allocation8 + $0x1bd0] sm:$0xff]
    %v1386 = vld [vmem:[#allocation8 + $0x1bd8] sm:$0xff]
    %v1387 = vld [vmem:[#allocation8 + $0x1be0] sm:$0xff]
    %v1388 = vld [vmem:[#allocation8 + $0x1be8] sm:$0xff]
    %v1389 = vld [vmem:[#allocation8 + $0x1bf0] sm:$0xff]
    %v1390 = vld [vmem:[#allocation8 + $0x1bf8] sm:$0xff]
    %v1391 = vld [vmem:[#allocation8 + $0x1c00] sm:$0xff]
    %v1392 = vld [vmem:[#allocation8 + $0x1c08] sm:$0xff]
    %v1393 = vld [vmem:[#allocation8 + $0x1c10] sm:$0xff]
    %v1394 = vld [vmem:[#allocation8 + $0x1c18] sm:$0xff]
    %v1395 = vld [vmem:[#allocation8 + $0x1c20] sm:$0xff]
    %v1396 = vld [vmem:[#allocation8 + $0x1c28] sm:$0xff]
    %v1397 = vld [vmem:[#allocation8 + $0x1c30] sm:$0xff]
    %v1398 = vld [vmem:[#allocation8 + $0x1c38] sm:$0xff]
    %v1399 = vld [vmem:[#allocation8 + $0x1c40] sm:$0xff]
    %v1400 = vld [vmem:[#allocation8 + $0x1c48] sm:$0xff]
    %v1401 = vld [vmem:[#allocation8 + $0x1c50] sm:$0xff]
    %v1402 = vld [vmem:[#allocation8 + $0x1c58] sm:$0xff]
    %v1403 = vld [vmem:[#allocation8 + $0x1c60] sm:$0xff]
    %v1404 = vld [vmem:[#allocation8 + $0x1c68] sm:$0xff]
    %v1405 = vld [vmem:[#allocation8 + $0x1c70] sm:$0xff]
    %v1406 = vld [vmem:[#allocation8 + $0x1c78] sm:$0xff]
    %v1407 = vld [vmem:[#allocation8 + $0x1c80] sm:$0xff]
    %v1408 = vld [vmem:[#allocation8 + $0x1c88] sm:$0xff]
    %v1409 = vld [vmem:[#allocation8 + $0x1c90] sm:$0xff]
    %v1410 = vld [vmem:[#allocation8 + $0x1c98] sm:$0xff]
    %v1411 = vld [vmem:[#allocation8 + $0x1ca0] sm:$0xff]
    %v1412 = vld [vmem:[#allocation8 + $0x1ca8] sm:$0xff]
    %v1413 = vld [vmem:[#allocation8 + $0x1cb0] sm:$0xff]
    %v1414 = vld [vmem:[#allocation8 + $0x1cb8] sm:$0xff]
    %v1415 = vld [vmem:[#allocation8 + $0x1cc0] sm:$0xff]
    %v1416 = vld [vmem:[#allocation8 + $0x1cc8] sm:$0xff]
    %v1417 = vld [vmem:[#allocation8 + $0x1cd0] sm:$0xff]
    %v1418 = vld [vmem:[#allocation8 + $0x1cd8] sm:$0xff]
    %v1419 = vld [vmem:[#allocation8 + $0x1ce0] sm:$0xff]
    %v1420 = vld [vmem:[#allocation8 + $0x1ce8] sm:$0xff]
    %v1421 = vld [vmem:[#allocation8 + $0x1cf0] sm:$0xff]
    %v1422 = vld [vmem:[#allocation8 + $0x1cf8] sm:$0xff]
    %v1423 = vld [vmem:[#allocation8 + $0x1d00] sm:$0xff]
    %v1424 = vld [vmem:[#allocation8 + $0x1d08] sm:$0xff]
    %v1425 = vld [vmem:[#allocation8 + $0x1d10] sm:$0xff]
    %v1426 = vld [vmem:[#allocation8 + $0x1d18] sm:$0xff]
    %v1427 = vld [vmem:[#allocation8 + $0x1d20] sm:$0xff]
    %v1428 = vld [vmem:[#allocation8 + $0x1d28] sm:$0xff]
    %v1429 = vld [vmem:[#allocation8 + $0x1d30] sm:$0xff]
    %v1430 = vld [vmem:[#allocation8 + $0x1d38] sm:$0xff]
    %v1431 = vld [vmem:[#allocation8 + $0x1d40] sm:$0xff]
    %v1432 = vld [vmem:[#allocation8 + $0x1d48] sm:$0xff]
    %v1433 = vld [vmem:[#allocation8 + $0x1d50] sm:$0xff]
    %v1434 = vld [vmem:[#allocation8 + $0x1d58] sm:$0xff]
    %v1435 = vld [vmem:[#allocation8 + $0x1d60] sm:$0xff]
    %v1436 = vld [vmem:[#allocation8 + $0x1d68] sm:$0xff]
    %v1437 = vld [vmem:[#allocation8 + $0x1d70] sm:$0xff]
    %v1438 = vld [vmem:[#allocation8 + $0x1d78] sm:$0xff]
    %v1439 = vld [vmem:[#allocation8 + $0x1d80] sm:$0xff]
    %v1440 = vld [vmem:[#allocation8 + $0x1d88] sm:$0xff]
    %v1441 = vld [vmem:[#allocation8 + $0x1d90] sm:$0xff]
    %v1442 = vld [vmem:[#allocation8 + $0x1d98] sm:$0xff]
    %v1443 = vld [vmem:[#allocation8 + $0x1da0] sm:$0xff]
    %v1444 = vld [vmem:[#allocation8 + $0x1da8] sm:$0xff]
    %v1445 = vld [vmem:[#allocation8 + $0x1db0] sm:$0xff]
    %v1446 = vld [vmem:[#allocation8 + $0x1db8] sm:$0xff]
    %v1447 = vld [vmem:[#allocation8 + $0x1dc0] sm:$0xff]
    %v1448 = vld [vmem:[#allocation8 + $0x1dc8] sm:$0xff]
    %v1449 = vld [vmem:[#allocation8 + $0x1dd0] sm:$0xff]
    %v1450 = vld [vmem:[#allocation8 + $0x1dd8] sm:$0xff]
    %v1451 = vld [vmem:[#allocation8 + $0x1de0] sm:$0xff]
    %v1452 = vld [vmem:[#allocation8 + $0x1de8] sm:$0xff]
    %v1453 = vld [vmem:[#allocation8 + $0x1df0] sm:$0xff]
    %v1454 = vld [vmem:[#allocation8 + $0x1df8] sm:$0xff]
    %v1455 = vld [vmem:[#allocation8 + $0x1e00] sm:$0xff]
    %v1456 = vld [vmem:[#allocation8 + $0x1e08] sm:$0xff]
    %v1457 = vld [vmem:[#allocation8 + $0x1e10] sm:$0xff]
    %v1458 = vld [vmem:[#allocation8 + $0x1e18] sm:$0xff]
    %v1459 = vld [vmem:[#allocation8 + $0x1e20] sm:$0xff]
    %v1460 = vld [vmem:[#allocation8 + $0x1e28] sm:$0xff]
    %v1461 = vld [vmem:[#allocation8 + $0x1e30] sm:$0xff]
    %v1462 = vld [vmem:[#allocation8 + $0x1e38] sm:$0xff]
    %v1463 = vld [vmem:[#allocation8 + $0x1e40] sm:$0xff]
    %v1464 = vld [vmem:[#allocation8 + $0x1e48] sm:$0xff]
    %v1465 = vld [vmem:[#allocation8 + $0x1e50] sm:$0xff]
    %v1466 = vld [vmem:[#allocation8 + $0x1e58] sm:$0xff]
    %v1467 = vld [vmem:[#allocation8 + $0x1e60] sm:$0xff]
    %v1468 = vld [vmem:[#allocation8 + $0x1e68] sm:$0xff]
    %v1469 = vld [vmem:[#allocation8 + $0x1e70] sm:$0xff]
    %v1470 = vld [vmem:[#allocation8 + $0x1e78] sm:$0xff]
    %v1471 = vld [vmem:[#allocation8 + $0x1e80] sm:$0xff]
    %v1472 = vld [vmem:[#allocation8 + $0x1e88] sm:$0xff]
    %v1473 = vld [vmem:[#allocation8 + $0x1e90] sm:$0xff]
    %v1474 = vld [vmem:[#allocation8 + $0x1e98] sm:$0xff]
    %v1475 = vld [vmem:[#allocation8 + $0x1ea0] sm:$0xff]
    %v1476 = vld [vmem:[#allocation8 + $0x1ea8] sm:$0xff]
    %v1477 = vld [vmem:[#allocation8 + $0x1eb0] sm:$0xff]
    %v1478 = vld [vmem:[#allocation8 + $0x1eb8] sm:$0xff]
    %v1479 = vld [vmem:[#allocation8 + $0x1ec0] sm:$0xff]
    %v1480 = vld [vmem:[#allocation8 + $0x1ec8] sm:$0xff]
    %v1481 = vld [vmem:[#allocation8 + $0x1ed0] sm:$0xff]
    %v1482 = vld [vmem:[#allocation8 + $0x1ed8] sm:$0xff]
    %v1483 = vld [vmem:[#allocation8 + $0x1ee0] sm:$0xff]
    %v1484 = vld [vmem:[#allocation8 + $0x1ee8] sm:$0xff]
    %v1485 = vld [vmem:[#allocation8 + $0x1ef0] sm:$0xff]
    %v1486 = vld [vmem:[#allocation8 + $0x1ef8] sm:$0xff]
    %v1487 = vld [vmem:[#allocation8 + $0x1f00] sm:$0xff]
    %v1488 = vld [vmem:[#allocation8 + $0x1f08] sm:$0xff]
    %v1489 = vld [vmem:[#allocation8 + $0x1f10] sm:$0xff]
    %v1490 = vld [vmem:[#allocation8 + $0x1f18] sm:$0xff]
    %v1491 = vld [vmem:[#allocation8 + $0x1f20] sm:$0xff]
    %v1492 = vld [vmem:[#allocation8 + $0x1f28] sm:$0xff]
    %v1493 = vld [vmem:[#allocation8 + $0x1f30] sm:$0xff]
    %v1494 = vld [vmem:[#allocation8 + $0x1f38] sm:$0xff]
    %v1495 = vld [vmem:[#allocation8 + $0x1f40] sm:$0xff]
    %v1496 = vld [vmem:[#allocation8 + $0x1f48] sm:$0xff]
    %v1497 = vld [vmem:[#allocation8 + $0x1f50] sm:$0xff]
    %v1498 = vld [vmem:[#allocation8 + $0x1f58] sm:$0xff]
    %v1499 = vld [vmem:[#allocation8 + $0x1f60] sm:$0xff]
    %v1500 = vld [vmem:[#allocation8 + $0x1f68] sm:$0xff]
    %v1501 = vld [vmem:[#allocation8 + $0x1f70] sm:$0xff]
    %v1502 = vld [vmem:[#allocation8 + $0x1f78] sm:$0xff]
    %v1503 = vld [vmem:[#allocation8 + $0x1f80] sm:$0xff]
    %v1504 = vld [vmem:[#allocation8 + $0x1f88] sm:$0xff]
    %v1505 = vld [vmem:[#allocation8 + $0x1f90] sm:$0xff]
    %v1506 = vld [vmem:[#allocation8 + $0x1f98] sm:$0xff]
    %v1507 = vld [vmem:[#allocation8 + $0x1fa0] sm:$0xff]
    %v1508 = vld [vmem:[#allocation8 + $0x1fa8] sm:$0xff]
    %v1509 = vld [vmem:[#allocation8 + $0x1fb0] sm:$0xff]
    %v1510 = vld [vmem:[#allocation8 + $0x1fb8] sm:$0xff]
    %v1511 = vld [vmem:[#allocation8 + $0x1fc0] sm:$0xff]
    %v1512 = vld [vmem:[#allocation8 + $0x1fc8] sm:$0xff]
    %v1513 = vld [vmem:[#allocation8 + $0x1fd0] sm:$0xff]
    %v1514 = vld [vmem:[#allocation8 + $0x1fd8] sm:$0xff]
    %v1515 = vld [vmem:[#allocation8 + $0x1fe0] sm:$0xff]
    %v1516 = vld [vmem:[#allocation8 + $0x1fe8] sm:$0xff]
    %v1517 = vld [vmem:[#allocation8 + $0x1ff0] sm:$0xff]
    %v1518 = vld [vmem:[#allocation8 + $0x1ff8] sm:$0xff]
    %v1519 = vld [vmem:[#allocation10] sm:$0xff]
    %v1521 = vlaneseq
    %v1522 = vshrl.u32 %v1521, 7
    %v1523 = vsub.s32 0, %v1522
    %v1524 = vrot.slane %v1519, %v1523
    %v1525 = vlaneseq
    %v1526 = vshrl.u32 %v1525, 7
    %v1527 = vsub.s32 1, %v1526
    %v1528 = vrot.slane %v1519, %v1527
    %v1529 = vlaneseq
    %v1530 = vshrl.u32 %v1529, 7
    %v1531 = vsub.s32 2, %v1530
    %v1532 = vrot.slane %v1519, %v1531
    %v1533 = vlaneseq
    %v1534 = vshrl.u32 %v1533, 7
    %v1535 = vsub.s32 3, %v1534
    %v1536 = vrot.slane %v1519, %v1535
    %v1537 = vlaneseq
    %v1538 = vshrl.u32 %v1537, 7
    %v1539 = vsub.s32 4, %v1538
    %v1540 = vrot.slane %v1519, %v1539
    %v1541 = vlaneseq
    %v1542 = vshrl.u32 %v1541, 7
    %v1543 = vsub.s32 5, %v1542
    %v1544 = vrot.slane %v1519, %v1543
    %v1545 = vlaneseq
    %v1546 = vshrl.u32 %v1545, 7
    %v1547 = vsub.s32 6, %v1546
    %v1548 = vrot.slane %v1519, %v1547
    %v1549 = vlaneseq
    %v1550 = vshrl.u32 %v1549, 7
    %v1551 = vsub.s32 7, %v1550
    %v1552 = vrot.slane %v1519, %v1551
    %1561 = vmatprep.subr.mxu0 %v616
    %1562 = vmatpush1.msra.mxu0 %v615
    %1563 = vmatprep.subr.mxu0 %v608
    %1564 = vmatpush1.msra.mxu0 %v607
    %1565 = vmatprep.subr.mxu0 %v600
    %1566 = vmatpush1.msra.mxu0 %v599
    %1567 = vmatprep.subr.mxu0 %v592
    %1568 = vmatpush1.msra.mxu0 %v591
    %1569 = vmatprep.subr.mxu0 %v584
    %1570 = vmatpush1.msra.mxu0 %v583
    %1571 = vmatprep.subr.mxu0 %v576
    %1572 = vmatpush1.msra.mxu0 %v575
    %1573 = vmatprep.subr.mxu0 %v568
    %1574 = vmatpush1.msra.mxu0 %v567
    %1575 = vmatprep.subr.mxu0 %v560
    %1576 = vmatpush1.msra.mxu0 %v559
    %1577 = vmatprep.subr.mxu0 %v552
    %1578 = vmatpush1.msra.mxu0 %v551
    %1579 = vmatprep.subr.mxu0 %v544
    %1580 = vmatpush1.msra.mxu0 %v543
    %1581 = vmatprep.subr.mxu0 %v536
    %1582 = vmatpush1.msra.mxu0 %v535
    %1583 = vmatprep.subr.mxu0 %v528
    %1584 = vmatpush1.msra.mxu0 %v527
    %1585 = vmatprep.subr.mxu0 %v520
    %1586 = vmatpush1.msra.mxu0 %v519
    %1587 = vmatprep.subr.mxu0 %v512
    %1588 = vmatpush1.msra.mxu0 %v511
    %1589 = vmatprep.subr.mxu0 %v504
    %1590 = vmatpush1.msra.mxu0 %v503
    %1591 = vmatprep.subr.mxu0 %v496
    %1592 = vmatpush1.msra.mxu0 %v495
    %1593 = vmatprep.subr.mxu0 %v744
    %1594 = vmatpush2.msra.mxu0 %v743
    %1595 = vmatprep.subr.mxu0 %v736
    %1596 = vmatpush2.msra.mxu0 %v735
    %1597 = vmatprep.subr.mxu0 %v728
    %1598 = vmatpush2.msra.mxu0 %v727
    %1599 = vmatprep.subr.mxu0 %v720
    %1600 = vmatpush2.msra.mxu0 %v719
    %1601 = vmatprep.subr.mxu0 %v712
    %1602 = vmatpush2.msra.mxu0 %v711
    %1603 = vmatprep.subr.mxu0 %v704
    %1604 = vmatpush2.msra.mxu0 %v703
    %1605 = vmatprep.subr.mxu0 %v696
    %1606 = vmatpush2.msra.mxu0 %v695
    %1607 = vmatprep.subr.mxu0 %v688
    %1608 = vmatpush2.msra.mxu0 %v687
    %1609 = vmatprep.subr.mxu0 %v680
    %1610 = vmatpush2.msra.mxu0 %v679
    %1611 = vmatprep.subr.mxu0 %v672
    %1612 = vmatpush2.msra.mxu0 %v671
    %1613 = vmatprep.subr.mxu0 %v664
    %1614 = vmatpush2.msra.mxu0 %v663
    %1615 = vmatprep.subr.mxu0 %v656
    %1616 = vmatpush2.msra.mxu0 %v655
    %1617 = vmatprep.subr.mxu0 %v648
    %1618 = vmatpush2.msra.mxu0 %v647
    %1619 = vmatprep.subr.mxu0 %v640
    %1620 = vmatpush2.msra.mxu0 %v639
    %1621 = vmatprep.subr.mxu0 %v632
    %1622 = vmatpush2.msra.mxu0 %v631
    %1623 = vmatprep.subr.mxu0 %v624
    %1624 = vmatpush2.msra.mxu0 %v623
    %1625 = vmatprep.mubr.f32.mxu0 %v488
    %1626 = vmatmul.mubr.f32.gmra.mxu0 %v487
    %v1627 = vpop.f32.mrf.mxu0
    %v1628 = vadd.f32 %v1524, %v1627
    %v1629 = vpop.f32.mrf.mxu0
    %v1630 = vadd.f32 %v1528, %v1629
    %1631 = vdwg.mxu0
    %1632 = vmatprep.subr.mxu0 %v872
    %1633 = vmatpush1.msra.mxu0 %v871
    %1634 = vmatprep.subr.mxu0 %v864
    %1635 = vmatpush1.msra.mxu0 %v863
    %1636 = vmatprep.subr.mxu0 %v856
    %1637 = vmatpush1.msra.mxu0 %v855
    %1638 = vmatprep.subr.mxu0 %v848
    %1639 = vmatpush1.msra.mxu0 %v847
    %1640 = vmatprep.subr.mxu0 %v840
    %1641 = vmatpush1.msra.mxu0 %v839
    %1642 = vmatprep.subr.mxu0 %v832
    %1643 = vmatpush1.msra.mxu0 %v831
    %1644 = vmatprep.subr.mxu0 %v824
    %1645 = vmatpush1.msra.mxu0 %v823
    %1646 = vmatprep.subr.mxu0 %v816
    %1647 = vmatpush1.msra.mxu0 %v815
    %1648 = vmatprep.subr.mxu0 %v808
    %1649 = vmatpush1.msra.mxu0 %v807
    %1650 = vmatprep.subr.mxu0 %v800
    %1651 = vmatpush1.msra.mxu0 %v799
    %1652 = vmatprep.subr.mxu0 %v792
    %1653 = vmatpush1.msra.mxu0 %v791
    %1654 = vmatprep.subr.mxu0 %v784
    %1655 = vmatpush1.msra.mxu0 %v783
    %1656 = vmatprep.subr.mxu0 %v776
    %1657 = vmatpush1.msra.mxu0 %v775
    %1658 = vmatprep.subr.mxu0 %v768
    %1659 = vmatpush1.msra.mxu0 %v767
    %1660 = vmatprep.subr.mxu0 %v760
    %1661 = vmatpush1.msra.mxu0 %v759
    %1662 = vmatprep.subr.mxu0 %v752
    %1663 = vmatpush1.msra.mxu0 %v751
    %1664 = vmatprep.subr.mxu0 %v1000
    %1665 = vmatpush2.msra.mxu0 %v999
    %1666 = vmatprep.subr.mxu0 %v992
    %1667 = vmatpush2.msra.mxu0 %v991
    %1668 = vmatprep.subr.mxu0 %v984
    %1669 = vmatpush2.msra.mxu0 %v983
    %1670 = vmatprep.subr.mxu0 %v976
    %1671 = vmatpush2.msra.mxu0 %v975
    %1672 = vmatprep.subr.mxu0 %v968
    %1673 = vmatpush2.msra.mxu0 %v967
    %1674 = vmatprep.subr.mxu0 %v960
    %1675 = vmatpush2.msra.mxu0 %v959
    %1676 = vmatprep.subr.mxu0 %v952
    %1677 = vmatpush2.msra.mxu0 %v951
    %1678 = vmatprep.subr.mxu0 %v944
    %1679 = vmatpush2.msra.mxu0 %v943
    %1680 = vmatprep.subr.mxu0 %v936
    %1681 = vmatpush2.msra.mxu0 %v935
    %1682 = vmatprep.subr.mxu0 %v928
    %1683 = vmatpush2.msra.mxu0 %v927
    %1684 = vmatprep.subr.mxu0 %v920
    %1685 = vmatpush2.msra.mxu0 %v919
    %1686 = vmatprep.subr.mxu0 %v912
    %1687 = vmatpush2.msra.mxu0 %v911
    %1688 = vmatprep.subr.mxu0 %v904
    %1689 = vmatpush2.msra.mxu0 %v903
    %1690 = vmatprep.subr.mxu0 %v896
    %1691 = vmatpush2.msra.mxu0 %v895
    %1692 = vmatprep.subr.mxu0 %v888
    %1693 = vmatpush2.msra.mxu0 %v887
    %1694 = vmatprep.subr.mxu0 %v880
    %1695 = vmatpush2.msra.mxu0 %v879
    %1696 = vmatprep.mubr.f32.mxu0 %v490
    %1697 = vmatmul.mubr.f32.gmra.mxu0 %v489
    %v1698 = vpop.f32.mrf.mxu0
    %v1699 = vadd.f32 %v1628, %v1698
    %v1700 = vpop.f32.mrf.mxu0
    %v1701 = vadd.f32 %v1630, %v1700
    %1702 = vdwg.mxu0
    %1703 = vmatprep.subr.mxu0 %v1128
    %1704 = vmatpush1.msra.mxu0 %v1127
    %1705 = vmatprep.subr.mxu0 %v1120
    %1706 = vmatpush1.msra.mxu0 %v1119
    %1707 = vmatprep.subr.mxu0 %v1112
    %1708 = vmatpush1.msra.mxu0 %v1111
    %1709 = vmatprep.subr.mxu0 %v1104
    %1710 = vmatpush1.msra.mxu0 %v1103
    %1711 = vmatprep.subr.mxu0 %v1096
    %1712 = vmatpush1.msra.mxu0 %v1095
    %1713 = vmatprep.subr.mxu0 %v1088
    %1714 = vmatpush1.msra.mxu0 %v1087
    %1715 = vmatprep.subr.mxu0 %v1080
    %1716 = vmatpush1.msra.mxu0 %v1079
    %1717 = vmatprep.subr.mxu0 %v1072
    %1718 = vmatpush1.msra.mxu0 %v1071
    %1719 = vmatprep.subr.mxu0 %v1064
    %1720 = vmatpush1.msra.mxu0 %v1063
    %1721 = vmatprep.subr.mxu0 %v1056
    %1722 = vmatpush1.msra.mxu0 %v1055
    %1723 = vmatprep.subr.mxu0 %v1048
    %1724 = vmatpush1.msra.mxu0 %v1047
    %1725 = vmatprep.subr.mxu0 %v1040
    %1726 = vmatpush1.msra.mxu0 %v1039
    %1727 = vmatprep.subr.mxu0 %v1032
    %1728 = vmatpush1.msra.mxu0 %v1031
    %1729 = vmatprep.subr.mxu0 %v1024
    %1730 = vmatpush1.msra.mxu0 %v1023
    %1731 = vmatprep.subr.mxu0 %v1016
    %1732 = vmatpush1.msra.mxu0 %v1015
    %1733 = vmatprep.subr.mxu0 %v1008
    %1734 = vmatpush1.msra.mxu0 %v1007
    %1735 = vmatprep.subr.mxu0 %v1256
    %1736 = vmatpush2.msra.mxu0 %v1255
    %1737 = vmatprep.subr.mxu0 %v1248
    %1738 = vmatpush2.msra.mxu0 %v1247
    %1739 = vmatprep.subr.mxu0 %v1240
    %1740 = vmatpush2.msra.mxu0 %v1239
    %1741 = vmatprep.subr.mxu0 %v1232
    %1742 = vmatpush2.msra.mxu0 %v1231
    %1743 = vmatprep.subr.mxu0 %v1224
    %1744 = vmatpush2.msra.mxu0 %v1223
    %1745 = vmatprep.subr.mxu0 %v1216
    %1746 = vmatpush2.msra.mxu0 %v1215
    %1747 = vmatprep.subr.mxu0 %v1208
    %1748 = vmatpush2.msra.mxu0 %v1207
    %1749 = vmatprep.subr.mxu0 %v1200
    %1750 = vmatpush2.msra.mxu0 %v1199
    %1751 = vmatprep.subr.mxu0 %v1192
    %1752 = vmatpush2.msra.mxu0 %v1191
    %1753 = vmatprep.subr.mxu0 %v1184
    %1754 = vmatpush2.msra.mxu0 %v1183
    %1755 = vmatprep.subr.mxu0 %v1176
    %1756 = vmatpush2.msra.mxu0 %v1175
    %1757 = vmatprep.subr.mxu0 %v1168
    %1758 = vmatpush2.msra.mxu0 %v1167
    %1759 = vmatprep.subr.mxu0 %v1160
    %1760 = vmatpush2.msra.mxu0 %v1159
    %1761 = vmatprep.subr.mxu0 %v1152
    %1762 = vmatpush2.msra.mxu0 %v1151
    %1763 = vmatprep.subr.mxu0 %v1144
    %1764 = vmatpush2.msra.mxu0 %v1143
    %1765 = vmatprep.subr.mxu0 %v1136
    %1766 = vmatpush2.msra.mxu0 %v1135
    %1767 = vmatprep.mubr.f32.mxu0 %v492
    %1768 = vmatmul.mubr.f32.gmra.mxu0 %v491
    %v1769 = vpop.f32.mrf.mxu0
    %v1770 = vadd.f32 %v1699, %v1769
    %v1771 = vpop.f32.mrf.mxu0
    %v1772 = vadd.f32 %v1701, %v1771
    %1773 = vdwg.mxu0
    %1774 = vmatprep.subr.mxu0 %v1384
    %1775 = vmatpush1.msra.mxu0 %v1383
    %1776 = vmatprep.subr.mxu0 %v1376
    %1777 = vmatpush1.msra.mxu0 %v1375
    %1778 = vmatprep.subr.mxu0 %v1368
    %1779 = vmatpush1.msra.mxu0 %v1367
    %1780 = vmatprep.subr.mxu0 %v1360
    %1781 = vmatpush1.msra.mxu0 %v1359
    %1782 = vmatprep.subr.mxu0 %v1352
    %1783 = vmatpush1.msra.mxu0 %v1351
    %1784 = vmatprep.subr.mxu0 %v1344
    %1785 = vmatpush1.msra.mxu0 %v1343
    %1786 = vmatprep.subr.mxu0 %v1336
    %1787 = vmatpush1.msra.mxu0 %v1335
    %1788 = vmatprep.subr.mxu0 %v1328
    %1789 = vmatpush1.msra.mxu0 %v1327
    %1790 = vmatprep.subr.mxu0 %v1320
    %1791 = vmatpush1.msra.mxu0 %v1319
    %1792 = vmatprep.subr.mxu0 %v1312
    %1793 = vmatpush1.msra.mxu0 %v1311
    %1794 = vmatprep.subr.mxu0 %v1304
    %1795 = vmatpush1.msra.mxu0 %v1303
    %1796 = vmatprep.subr.mxu0 %v1296
    %1797 = vmatpush1.msra.mxu0 %v1295
    %1798 = vmatprep.subr.mxu0 %v1288
    %1799 = vmatpush1.msra.mxu0 %v1287
    %1800 = vmatprep.subr.mxu0 %v1280
    %1801 = vmatpush1.msra.mxu0 %v1279
    %1802 = vmatprep.subr.mxu0 %v1272
    %1803 = vmatpush1.msra.mxu0 %v1271
    %1804 = vmatprep.subr.mxu0 %v1264
    %1805 = vmatpush1.msra.mxu0 %v1263
    %1806 = vmatprep.subr.mxu0 %v1512
    %1807 = vmatpush2.msra.mxu0 %v1511
    %1808 = vmatprep.subr.mxu0 %v1504
    %1809 = vmatpush2.msra.mxu0 %v1503
    %1810 = vmatprep.subr.mxu0 %v1496
    %1811 = vmatpush2.msra.mxu0 %v1495
    %1812 = vmatprep.subr.mxu0 %v1488
    %1813 = vmatpush2.msra.mxu0 %v1487
    %1814 = vmatprep.subr.mxu0 %v1480
    %1815 = vmatpush2.msra.mxu0 %v1479
    %1816 = vmatprep.subr.mxu0 %v1472
    %1817 = vmatpush2.msra.mxu0 %v1471
    %1818 = vmatprep.subr.mxu0 %v1464
    %1819 = vmatpush2.msra.mxu0 %v1463
    %1820 = vmatprep.subr.mxu0 %v1456
    %1821 = vmatpush2.msra.mxu0 %v1455
    %1822 = vmatprep.subr.mxu0 %v1448
    %1823 = vmatpush2.msra.mxu0 %v1447
    %1824 = vmatprep.subr.mxu0 %v1440
    %1825 = vmatpush2.msra.mxu0 %v1439
    %1826 = vmatprep.subr.mxu0 %v1432
    %1827 = vmatpush2.msra.mxu0 %v1431
    %1828 = vmatprep.subr.mxu0 %v1424
    %1829 = vmatpush2.msra.mxu0 %v1423
    %1830 = vmatprep.subr.mxu0 %v1416
    %1831 = vmatpush2.msra.mxu0 %v1415
    %1832 = vmatprep.subr.mxu0 %v1408
    %1833 = vmatpush2.msra.mxu0 %v1407
    %1834 = vmatprep.subr.mxu0 %v1400
    %1835 = vmatpush2.msra.mxu0 %v1399
    %1836 = vmatprep.subr.mxu0 %v1392
    %1837 = vmatpush2.msra.mxu0 %v1391
    %1838 = vmatprep.mubr.f32.mxu0 %v494
    %1839 = vmatmul.mubr.f32.gmra.mxu0 %v493
    %v1840 = vpop.f32.mrf.mxu0
    %v1841 = vadd.f32 %v1770, %v1840
    %v1842 = vpop.f32.mrf.mxu0
    %v1843 = vadd.f32 %v1772, %v1842
    %1844 = vdwg.mxu0
    %1845 = vmatprep.subr.mxu0 %v618
    %1846 = vmatpush1.msra.mxu0 %v617
    %1847 = vmatprep.subr.mxu0 %v610
    %1848 = vmatpush1.msra.mxu0 %v609
    %1849 = vmatprep.subr.mxu0 %v602
    %1850 = vmatpush1.msra.mxu0 %v601
    %1851 = vmatprep.subr.mxu0 %v594
    %1852 = vmatpush1.msra.mxu0 %v593
    %1853 = vmatprep.subr.mxu0 %v586
    %1854 = vmatpush1.msra.mxu0 %v585
    %1855 = vmatprep.subr.mxu0 %v578
    %1856 = vmatpush1.msra.mxu0 %v577
    %1857 = vmatprep.subr.mxu0 %v570
    %1858 = vmatpush1.msra.mxu0 %v569
    %1859 = vmatprep.subr.mxu0 %v562
    %1860 = vmatpush1.msra.mxu0 %v561
    %1861 = vmatprep.subr.mxu0 %v554
    %1862 = vmatpush1.msra.mxu0 %v553
    %1863 = vmatprep.subr.mxu0 %v546
    %1864 = vmatpush1.msra.mxu0 %v545
    %1865 = vmatprep.subr.mxu0 %v538
    %1866 = vmatpush1.msra.mxu0 %v537
    %1867 = vmatprep.subr.mxu0 %v530
    %1868 = vmatpush1.msra.mxu0 %v529
    %1869 = vmatprep.subr.mxu0 %v522
    %1870 = vmatpush1.msra.mxu0 %v521
    %1871 = vmatprep.subr.mxu0 %v514
    %1872 = vmatpush1.msra.mxu0 %v513
    %1873 = vmatprep.subr.mxu0 %v506
    %1874 = vmatpush1.msra.mxu0 %v505
    %1875 = vmatprep.subr.mxu0 %v498
    %1876 = vmatpush1.msra.mxu0 %v497
    %1877 = vmatprep.subr.mxu0 %v746
    %1878 = vmatpush2.msra.mxu0 %v745
    %1879 = vmatprep.subr.mxu0 %v738
    %1880 = vmatpush2.msra.mxu0 %v737
    %1881 = vmatprep.subr.mxu0 %v730
    %1882 = vmatpush2.msra.mxu0 %v729
    %1883 = vmatprep.subr.mxu0 %v722
    %1884 = vmatpush2.msra.mxu0 %v721
    %1885 = vmatprep.subr.mxu0 %v714
    %1886 = vmatpush2.msra.mxu0 %v713
    %1887 = vmatprep.subr.mxu0 %v706
    %1888 = vmatpush2.msra.mxu0 %v705
    %1889 = vmatprep.subr.mxu0 %v698
    %1890 = vmatpush2.msra.mxu0 %v697
    %1891 = vmatprep.subr.mxu0 %v690
    %1892 = vmatpush2.msra.mxu0 %v689
    %1893 = vmatprep.subr.mxu0 %v682
    %1894 = vmatpush2.msra.mxu0 %v681
    %1895 = vmatprep.subr.mxu0 %v674
    %1896 = vmatpush2.msra.mxu0 %v673
    %1897 = vmatprep.subr.mxu0 %v666
    %1898 = vmatpush2.msra.mxu0 %v665
    %1899 = vmatprep.subr.mxu0 %v658
    %1900 = vmatpush2.msra.mxu0 %v657
    %1901 = vmatprep.subr.mxu0 %v650
    %1902 = vmatpush2.msra.mxu0 %v649
    %1903 = vmatprep.subr.mxu0 %v642
    %1904 = vmatpush2.msra.mxu0 %v641
    %1905 = vmatprep.subr.mxu0 %v634
    %1906 = vmatpush2.msra.mxu0 %v633
    %1907 = vmatprep.subr.mxu0 %v626
    %1908 = vmatpush2.msra.mxu0 %v625
    %1909 = vmatprep.mubr.f32.mxu0 %v488
    %1910 = vmatmul.mubr.f32.gmra.mxu0 %v487
    %v1911 = vpop.f32.mrf.mxu0
    %v1912 = vadd.f32 %v1532, %v1911
    %v1913 = vpop.f32.mrf.mxu0
    %v1914 = vadd.f32 %v1536, %v1913
    %1915 = vdwg.mxu0
    %1916 = vmatprep.subr.mxu0 %v874
    %1917 = vmatpush1.msra.mxu0 %v873
    %1918 = vmatprep.subr.mxu0 %v866
    %1919 = vmatpush1.msra.mxu0 %v865
    %1920 = vmatprep.subr.mxu0 %v858
    %1921 = vmatpush1.msra.mxu0 %v857
    %1922 = vmatprep.subr.mxu0 %v850
    %1923 = vmatpush1.msra.mxu0 %v849
    %1924 = vmatprep.subr.mxu0 %v842
    %1925 = vmatpush1.msra.mxu0 %v841
    %1926 = vmatprep.subr.mxu0 %v834
    %1927 = vmatpush1.msra.mxu0 %v833
    %1928 = vmatprep.subr.mxu0 %v826
    %1929 = vmatpush1.msra.mxu0 %v825
    %1930 = vmatprep.subr.mxu0 %v818
    %1931 = vmatpush1.msra.mxu0 %v817
    %1932 = vmatprep.subr.mxu0 %v810
    %1933 = vmatpush1.msra.mxu0 %v809
    %1934 = vmatprep.subr.mxu0 %v802
    %1935 = vmatpush1.msra.mxu0 %v801
    %1936 = vmatprep.subr.mxu0 %v794
    %1937 = vmatpush1.msra.mxu0 %v793
    %1938 = vmatprep.subr.mxu0 %v786
    %1939 = vmatpush1.msra.mxu0 %v785
    %1940 = vmatprep.subr.mxu0 %v778
    %1941 = vmatpush1.msra.mxu0 %v777
    %1942 = vmatprep.subr.mxu0 %v770
    %1943 = vmatpush1.msra.mxu0 %v769
    %1944 = vmatprep.subr.mxu0 %v762
    %1945 = vmatpush1.msra.mxu0 %v761
    %1946 = vmatprep.subr.mxu0 %v754
    %1947 = vmatpush1.msra.mxu0 %v753
    %1948 = vmatprep.subr.mxu0 %v1002
    %1949 = vmatpush2.msra.mxu0 %v1001
    %1950 = vmatprep.subr.mxu0 %v994
    %1951 = vmatpush2.msra.mxu0 %v993
    %1952 = vmatprep.subr.mxu0 %v986
    %1953 = vmatpush2.msra.mxu0 %v985
    %1954 = vmatprep.subr.mxu0 %v978
    %1955 = vmatpush2.msra.mxu0 %v977
    %1956 = vmatprep.subr.mxu0 %v970
    %1957 = vmatpush2.msra.mxu0 %v969
    %1958 = vmatprep.subr.mxu0 %v962
    %1959 = vmatpush2.msra.mxu0 %v961
    %1960 = vmatprep.subr.mxu0 %v954
    %1961 = vmatpush2.msra.mxu0 %v953
    %1962 = vmatprep.subr.mxu0 %v946
    %1963 = vmatpush2.msra.mxu0 %v945
    %1964 = vmatprep.subr.mxu0 %v938
    %1965 = vmatpush2.msra.mxu0 %v937
    %1966 = vmatprep.subr.mxu0 %v930
    %1967 = vmatpush2.msra.mxu0 %v929
    %1968 = vmatprep.subr.mxu0 %v922
    %1969 = vmatpush2.msra.mxu0 %v921
    %1970 = vmatprep.subr.mxu0 %v914
    %1971 = vmatpush2.msra.mxu0 %v913
    %1972 = vmatprep.subr.mxu0 %v906
    %1973 = vmatpush2.msra.mxu0 %v905
    %1974 = vmatprep.subr.mxu0 %v898
    %1975 = vmatpush2.msra.mxu0 %v897
    %1976 = vmatprep.subr.mxu0 %v890
    %1977 = vmatpush2.msra.mxu0 %v889
    %1978 = vmatprep.subr.mxu0 %v882
    %1979 = vmatpush2.msra.mxu0 %v881
    %1980 = vmatprep.mubr.f32.mxu0 %v490
    %1981 = vmatmul.mubr.f32.gmra.mxu0 %v489
    %v1982 = vpop.f32.mrf.mxu0
    %v1983 = vadd.f32 %v1912, %v1982
    %v1984 = vpop.f32.mrf.mxu0
    %v1985 = vadd.f32 %v1914, %v1984
    %1986 = vdwg.mxu0
    %1987 = vmatprep.subr.mxu0 %v1130
    %1988 = vmatpush1.msra.mxu0 %v1129
    %1989 = vmatprep.subr.mxu0 %v1122
    %1990 = vmatpush1.msra.mxu0 %v1121
    %1991 = vmatprep.subr.mxu0 %v1114
    %1992 = vmatpush1.msra.mxu0 %v1113
    %1993 = vmatprep.subr.mxu0 %v1106
    %1994 = vmatpush1.msra.mxu0 %v1105
    %1995 = vmatprep.subr.mxu0 %v1098
    %1996 = vmatpush1.msra.mxu0 %v1097
    %1997 = vmatprep.subr.mxu0 %v1090
    %1998 = vmatpush1.msra.mxu0 %v1089
    %1999 = vmatprep.subr.mxu0 %v1082
    %2000 = vmatpush1.msra.mxu0 %v1081
    %2001 = vmatprep.subr.mxu0 %v1074
    %2002 = vmatpush1.msra.mxu0 %v1073
    %2003 = vmatprep.subr.mxu0 %v1066
    %2004 = vmatpush1.msra.mxu0 %v1065
    %2005 = vmatprep.subr.mxu0 %v1058
    %2006 = vmatpush1.msra.mxu0 %v1057
    %2007 = vmatprep.subr.mxu0 %v1050
    %2008 = vmatpush1.msra.mxu0 %v1049
    %2009 = vmatprep.subr.mxu0 %v1042
    %2010 = vmatpush1.msra.mxu0 %v1041
    %2011 = vmatprep.subr.mxu0 %v1034
    %2012 = vmatpush1.msra.mxu0 %v1033
    %2013 = vmatprep.subr.mxu0 %v1026
    %2014 = vmatpush1.msra.mxu0 %v1025
    %2015 = vmatprep.subr.mxu0 %v1018
    %2016 = vmatpush1.msra.mxu0 %v1017
    %2017 = vmatprep.subr.mxu0 %v1010
    %2018 = vmatpush1.msra.mxu0 %v1009
    %2019 = vmatprep.subr.mxu0 %v1258
    %2020 = vmatpush2.msra.mxu0 %v1257
    %2021 = vmatprep.subr.mxu0 %v1250
    %2022 = vmatpush2.msra.mxu0 %v1249
    %2023 = vmatprep.subr.mxu0 %v1242
    %2024 = vmatpush2.msra.mxu0 %v1241
    %2025 = vmatprep.subr.mxu0 %v1234
    %2026 = vmatpush2.msra.mxu0 %v1233
    %2027 = vmatprep.subr.mxu0 %v1226
    %2028 = vmatpush2.msra.mxu0 %v1225
    %2029 = vmatprep.subr.mxu0 %v1218
    %2030 = vmatpush2.msra.mxu0 %v1217
    %2031 = vmatprep.subr.mxu0 %v1210
    %2032 = vmatpush2.msra.mxu0 %v1209
    %2033 = vmatprep.subr.mxu0 %v1202
    %2034 = vmatpush2.msra.mxu0 %v1201
    %2035 = vmatprep.subr.mxu0 %v1194
    %2036 = vmatpush2.msra.mxu0 %v1193
    %2037 = vmatprep.subr.mxu0 %v1186
    %2038 = vmatpush2.msra.mxu0 %v1185
    %2039 = vmatprep.subr.mxu0 %v1178
    %2040 = vmatpush2.msra.mxu0 %v1177
    %2041 = vmatprep.subr.mxu0 %v1170
    %2042 = vmatpush2.msra.mxu0 %v1169
    %2043 = vmatprep.subr.mxu0 %v1162
    %2044 = vmatpush2.msra.mxu0 %v1161
    %2045 = vmatprep.subr.mxu0 %v1154
    %2046 = vmatpush2.msra.mxu0 %v1153
    %2047 = vmatprep.subr.mxu0 %v1146
    %2048 = vmatpush2.msra.mxu0 %v1145
    %2049 = vmatprep.subr.mxu0 %v1138
    %2050 = vmatpush2.msra.mxu0 %v1137
    %2051 = vmatprep.mubr.f32.mxu0 %v492
    %2052 = vmatmul.mubr.f32.gmra.mxu0 %v491
    %v2053 = vpop.f32.mrf.mxu0
    %v2054 = vadd.f32 %v1983, %v2053
    %v2055 = vpop.f32.mrf.mxu0
    %v2056 = vadd.f32 %v1985, %v2055
    %2057 = vdwg.mxu0
    %2058 = vmatprep.subr.mxu0 %v1386
    %2059 = vmatpush1.msra.mxu0 %v1385
    %2060 = vmatprep.subr.mxu0 %v1378
    %2061 = vmatpush1.msra.mxu0 %v1377
    %2062 = vmatprep.subr.mxu0 %v1370
    %2063 = vmatpush1.msra.mxu0 %v1369
    %2064 = vmatprep.subr.mxu0 %v1362
    %2065 = vmatpush1.msra.mxu0 %v1361
    %2066 = vmatprep.subr.mxu0 %v1354
    %2067 = vmatpush1.msra.mxu0 %v1353
    %2068 = vmatprep.subr.mxu0 %v1346
    %2069 = vmatpush1.msra.mxu0 %v1345
    %2070 = vmatprep.subr.mxu0 %v1338
    %2071 = vmatpush1.msra.mxu0 %v1337
    %2072 = vmatprep.subr.mxu0 %v1330
    %2073 = vmatpush1.msra.mxu0 %v1329
    %2074 = vmatprep.subr.mxu0 %v1322
    %2075 = vmatpush1.msra.mxu0 %v1321
    %2076 = vmatprep.subr.mxu0 %v1314
    %2077 = vmatpush1.msra.mxu0 %v1313
    %2078 = vmatprep.subr.mxu0 %v1306
    %2079 = vmatpush1.msra.mxu0 %v1305
    %2080 = vmatprep.subr.mxu0 %v1298
    %2081 = vmatpush1.msra.mxu0 %v1297
    %2082 = vmatprep.subr.mxu0 %v1290
    %2083 = vmatpush1.msra.mxu0 %v1289
    %2084 = vmatprep.subr.mxu0 %v1282
    %2085 = vmatpush1.msra.mxu0 %v1281
    %2086 = vmatprep.subr.mxu0 %v1274
    %2087 = vmatpush1.msra.mxu0 %v1273
    %2088 = vmatprep.subr.mxu0 %v1266
    %2089 = vmatpush1.msra.mxu0 %v1265
    %2090 = vmatprep.subr.mxu0 %v1514
    %2091 = vmatpush2.msra.mxu0 %v1513
    %2092 = vmatprep.subr.mxu0 %v1506
    %2093 = vmatpush2.msra.mxu0 %v1505
    %2094 = vmatprep.subr.mxu0 %v1498
    %2095 = vmatpush2.msra.mxu0 %v1497
    %2096 = vmatprep.subr.mxu0 %v1490
    %2097 = vmatpush2.msra.mxu0 %v1489
    %2098 = vmatprep.subr.mxu0 %v1482
    %2099 = vmatpush2.msra.mxu0 %v1481
    %2100 = vmatprep.subr.mxu0 %v1474
    %2101 = vmatpush2.msra.mxu0 %v1473
    %2102 = vmatprep.subr.mxu0 %v1466
    %2103 = vmatpush2.msra.mxu0 %v1465
    %2104 = vmatprep.subr.mxu0 %v1458
    %2105 = vmatpush2.msra.mxu0 %v1457
    %2106 = vmatprep.subr.mxu0 %v1450
    %2107 = vmatpush2.msra.mxu0 %v1449
    %2108 = vmatprep.subr.mxu0 %v1442
    %2109 = vmatpush2.msra.mxu0 %v1441
    %2110 = vmatprep.subr.mxu0 %v1434
    %2111 = vmatpush2.msra.mxu0 %v1433
    %2112 = vmatprep.subr.mxu0 %v1426
    %2113 = vmatpush2.msra.mxu0 %v1425
    %2114 = vmatprep.subr.mxu0 %v1418
    %2115 = vmatpush2.msra.mxu0 %v1417
    %2116 = vmatprep.subr.mxu0 %v1410
    %2117 = vmatpush2.msra.mxu0 %v1409
    %2118 = vmatprep.subr.mxu0 %v1402
    %2119 = vmatpush2.msra.mxu0 %v1401
    %2120 = vmatprep.subr.mxu0 %v1394
    %2121 = vmatpush2.msra.mxu0 %v1393
    %2122 = vmatprep.mubr.f32.mxu0 %v494
    %2123 = vmatmul.mubr.f32.gmra.mxu0 %v493
    %v2124 = vpop.f32.mrf.mxu0
    %v2125 = vadd.f32 %v2054, %v2124
    %v2126 = vpop.f32.mrf.mxu0
    %v2127 = vadd.f32 %v2056, %v2126
    %2128 = vdwg.mxu0
    %2129 = vmatprep.subr.mxu0 %v620
    %2130 = vmatpush1.msra.mxu0 %v619
    %2131 = vmatprep.subr.mxu0 %v612
    %2132 = vmatpush1.msra.mxu0 %v611
    %2133 = vmatprep.subr.mxu0 %v604
    %2134 = vmatpush1.msra.mxu0 %v603
    %2135 = vmatprep.subr.mxu0 %v596
    %2136 = vmatpush1.msra.mxu0 %v595
    %2137 = vmatprep.subr.mxu0 %v588
    %2138 = vmatpush1.msra.mxu0 %v587
    %2139 = vmatprep.subr.mxu0 %v580
    %2140 = vmatpush1.msra.mxu0 %v579
    %2141 = vmatprep.subr.mxu0 %v572
    %2142 = vmatpush1.msra.mxu0 %v571
    %2143 = vmatprep.subr.mxu0 %v564
    %2144 = vmatpush1.msra.mxu0 %v563
    %2145 = vmatprep.subr.mxu0 %v556
    %2146 = vmatpush1.msra.mxu0 %v555
    %2147 = vmatprep.subr.mxu0 %v548
    %2148 = vmatpush1.msra.mxu0 %v547
    %2149 = vmatprep.subr.mxu0 %v540
    %2150 = vmatpush1.msra.mxu0 %v539
    %2151 = vmatprep.subr.mxu0 %v532
    %2152 = vmatpush1.msra.mxu0 %v531
    %2153 = vmatprep.subr.mxu0 %v524
    %2154 = vmatpush1.msra.mxu0 %v523
    %2155 = vmatprep.subr.mxu0 %v516
    %2156 = vmatpush1.msra.mxu0 %v515
    %2157 = vmatprep.subr.mxu0 %v508
    %2158 = vmatpush1.msra.mxu0 %v507
    %2159 = vmatprep.subr.mxu0 %v500
    %2160 = vmatpush1.msra.mxu0 %v499
    %2161 = vmatprep.subr.mxu0 %v748
    %2162 = vmatpush2.msra.mxu0 %v747
    %2163 = vmatprep.subr.mxu0 %v740
    %2164 = vmatpush2.msra.mxu0 %v739
    %2165 = vmatprep.subr.mxu0 %v732
    %2166 = vmatpush2.msra.mxu0 %v731
    %2167 = vmatprep.subr.mxu0 %v724
    %2168 = vmatpush2.msra.mxu0 %v723
    %2169 = vmatprep.subr.mxu0 %v716
    %2170 = vmatpush2.msra.mxu0 %v715
    %2171 = vmatprep.subr.mxu0 %v708
    %2172 = vmatpush2.msra.mxu0 %v707
    %2173 = vmatprep.subr.mxu0 %v700
    %2174 = vmatpush2.msra.mxu0 %v699
    %2175 = vmatprep.subr.mxu0 %v692
    %2176 = vmatpush2.msra.mxu0 %v691
    %2177 = vmatprep.subr.mxu0 %v684
    %2178 = vmatpush2.msra.mxu0 %v683
    %2179 = vmatprep.subr.mxu0 %v676
    %2180 = vmatpush2.msra.mxu0 %v675
    %2181 = vmatprep.subr.mxu0 %v668
    %2182 = vmatpush2.msra.mxu0 %v667
    %2183 = vmatprep.subr.mxu0 %v660
    %2184 = vmatpush2.msra.mxu0 %v659
    %2185 = vmatprep.subr.mxu0 %v652
    %2186 = vmatpush2.msra.mxu0 %v651
    %2187 = vmatprep.subr.mxu0 %v644
    %2188 = vmatpush2.msra.mxu0 %v643
    %2189 = vmatprep.subr.mxu0 %v636
    %2190 = vmatpush2.msra.mxu0 %v635
    %2191 = vmatprep.subr.mxu0 %v628
    %2192 = vmatpush2.msra.mxu0 %v627
    %2193 = vmatprep.mubr.f32.mxu0 %v488
    %2194 = vmatmul.mubr.f32.gmra.mxu0 %v487
    %v2195 = vpop.f32.mrf.mxu0
    %v2196 = vadd.f32 %v1540, %v2195
    %v2197 = vpop.f32.mrf.mxu0
    %v2198 = vadd.f32 %v1544, %v2197
    %2199 = vdwg.mxu0
    %2200 = vmatprep.subr.mxu0 %v876
    %2201 = vmatpush1.msra.mxu0 %v875
    %2202 = vmatprep.subr.mxu0 %v868
    %2203 = vmatpush1.msra.mxu0 %v867
    %2204 = vmatprep.subr.mxu0 %v860
    %2205 = vmatpush1.msra.mxu0 %v859
    %2206 = vmatprep.subr.mxu0 %v852
    %2207 = vmatpush1.msra.mxu0 %v851
    %2208 = vmatprep.subr.mxu0 %v844
    %2209 = vmatpush1.msra.mxu0 %v843
    %2210 = vmatprep.subr.mxu0 %v836
    %2211 = vmatpush1.msra.mxu0 %v835
    %2212 = vmatprep.subr.mxu0 %v828
    %2213 = vmatpush1.msra.mxu0 %v827
    %2214 = vmatprep.subr.mxu0 %v820
    %2215 = vmatpush1.msra.mxu0 %v819
    %2216 = vmatprep.subr.mxu0 %v812
    %2217 = vmatpush1.msra.mxu0 %v811
    %2218 = vmatprep.subr.mxu0 %v804
    %2219 = vmatpush1.msra.mxu0 %v803
    %2220 = vmatprep.subr.mxu0 %v796
    %2221 = vmatpush1.msra.mxu0 %v795
    %2222 = vmatprep.subr.mxu0 %v788
    %2223 = vmatpush1.msra.mxu0 %v787
    %2224 = vmatprep.subr.mxu0 %v780
    %2225 = vmatpush1.msra.mxu0 %v779
    %2226 = vmatprep.subr.mxu0 %v772
    %2227 = vmatpush1.msra.mxu0 %v771
    %2228 = vmatprep.subr.mxu0 %v764
    %2229 = vmatpush1.msra.mxu0 %v763
    %2230 = vmatprep.subr.mxu0 %v756
    %2231 = vmatpush1.msra.mxu0 %v755
    %2232 = vmatprep.subr.mxu0 %v1004
    %2233 = vmatpush2.msra.mxu0 %v1003
    %2234 = vmatprep.subr.mxu0 %v996
    %2235 = vmatpush2.msra.mxu0 %v995
    %2236 = vmatprep.subr.mxu0 %v988
    %2237 = vmatpush2.msra.mxu0 %v987
    %2238 = vmatprep.subr.mxu0 %v980
    %2239 = vmatpush2.msra.mxu0 %v979
    %2240 = vmatprep.subr.mxu0 %v972
    %2241 = vmatpush2.msra.mxu0 %v971
    %2242 = vmatprep.subr.mxu0 %v964
    %2243 = vmatpush2.msra.mxu0 %v963
    %2244 = vmatprep.subr.mxu0 %v956
    %2245 = vmatpush2.msra.mxu0 %v955
    %2246 = vmatprep.subr.mxu0 %v948
    %2247 = vmatpush2.msra.mxu0 %v947
    %2248 = vmatprep.subr.mxu0 %v940
    %2249 = vmatpush2.msra.mxu0 %v939
    %2250 = vmatprep.subr.mxu0 %v932
    %2251 = vmatpush2.msra.mxu0 %v931
    %2252 = vmatprep.subr.mxu0 %v924
    %2253 = vmatpush2.msra.mxu0 %v923
    %2254 = vmatprep.subr.mxu0 %v916
    %2255 = vmatpush2.msra.mxu0 %v915
    %2256 = vmatprep.subr.mxu0 %v908
    %2257 = vmatpush2.msra.mxu0 %v907
    %2258 = vmatprep.subr.mxu0 %v900
    %2259 = vmatpush2.msra.mxu0 %v899
    %2260 = vmatprep.subr.mxu0 %v892
    %2261 = vmatpush2.msra.mxu0 %v891
    %2262 = vmatprep.subr.mxu0 %v884
    %2263 = vmatpush2.msra.mxu0 %v883
    %2264 = vmatprep.mubr.f32.mxu0 %v490
    %2265 = vmatmul.mubr.f32.gmra.mxu0 %v489
    %v2266 = vpop.f32.mrf.mxu0
    %v2267 = vadd.f32 %v2196, %v2266
    %v2268 = vpop.f32.mrf.mxu0
    %v2269 = vadd.f32 %v2198, %v2268
    %2270 = vdwg.mxu0
    %2271 = vmatprep.subr.mxu0 %v1132
    %2272 = vmatpush1.msra.mxu0 %v1131
    %2273 = vmatprep.subr.mxu0 %v1124
    %2274 = vmatpush1.msra.mxu0 %v1123
    %2275 = vmatprep.subr.mxu0 %v1116
    %2276 = vmatpush1.msra.mxu0 %v1115
    %2277 = vmatprep.subr.mxu0 %v1108
    %2278 = vmatpush1.msra.mxu0 %v1107
    %2279 = vmatprep.subr.mxu0 %v1100
    %2280 = vmatpush1.msra.mxu0 %v1099
    %2281 = vmatprep.subr.mxu0 %v1092
    %2282 = vmatpush1.msra.mxu0 %v1091
    %2283 = vmatprep.subr.mxu0 %v1084
    %2284 = vmatpush1.msra.mxu0 %v1083
    %2285 = vmatprep.subr.mxu0 %v1076
    %2286 = vmatpush1.msra.mxu0 %v1075
    %2287 = vmatprep.subr.mxu0 %v1068
    %2288 = vmatpush1.msra.mxu0 %v1067
    %2289 = vmatprep.subr.mxu0 %v1060
    %2290 = vmatpush1.msra.mxu0 %v1059
    %2291 = vmatprep.subr.mxu0 %v1052
    %2292 = vmatpush1.msra.mxu0 %v1051
    %2293 = vmatprep.subr.mxu0 %v1044
    %2294 = vmatpush1.msra.mxu0 %v1043
    %2295 = vmatprep.subr.mxu0 %v1036
    %2296 = vmatpush1.msra.mxu0 %v1035
    %2297 = vmatprep.subr.mxu0 %v1028
    %2298 = vmatpush1.msra.mxu0 %v1027
    %2299 = vmatprep.subr.mxu0 %v1020
    %2300 = vmatpush1.msra.mxu0 %v1019
    %2301 = vmatprep.subr.mxu0 %v1012
    %2302 = vmatpush1.msra.mxu0 %v1011
    %2303 = vmatprep.subr.mxu0 %v1260
    %2304 = vmatpush2.msra.mxu0 %v1259
    %2305 = vmatprep.subr.mxu0 %v1252
    %2306 = vmatpush2.msra.mxu0 %v1251
    %2307 = vmatprep.subr.mxu0 %v1244
    %2308 = vmatpush2.msra.mxu0 %v1243
    %2309 = vmatprep.subr.mxu0 %v1236
    %2310 = vmatpush2.msra.mxu0 %v1235
    %2311 = vmatprep.subr.mxu0 %v1228
    %2312 = vmatpush2.msra.mxu0 %v1227
    %2313 = vmatprep.subr.mxu0 %v1220
    %2314 = vmatpush2.msra.mxu0 %v1219
    %2315 = vmatprep.subr.mxu0 %v1212
    %2316 = vmatpush2.msra.mxu0 %v1211
    %2317 = vmatprep.subr.mxu0 %v1204
    %2318 = vmatpush2.msra.mxu0 %v1203
    %2319 = vmatprep.subr.mxu0 %v1196
    %2320 = vmatpush2.msra.mxu0 %v1195
    %2321 = vmatprep.subr.mxu0 %v1188
    %2322 = vmatpush2.msra.mxu0 %v1187
    %2323 = vmatprep.subr.mxu0 %v1180
    %2324 = vmatpush2.msra.mxu0 %v1179
    %2325 = vmatprep.subr.mxu0 %v1172
    %2326 = vmatpush2.msra.mxu0 %v1171
    %2327 = vmatprep.subr.mxu0 %v1164
    %2328 = vmatpush2.msra.mxu0 %v1163
    %2329 = vmatprep.subr.mxu0 %v1156
    %2330 = vmatpush2.msra.mxu0 %v1155
    %2331 = vmatprep.subr.mxu0 %v1148
    %2332 = vmatpush2.msra.mxu0 %v1147
    %2333 = vmatprep.subr.mxu0 %v1140
    %2334 = vmatpush2.msra.mxu0 %v1139
    %2335 = vmatprep.mubr.f32.mxu0 %v492
    %2336 = vmatmul.mubr.f32.gmra.mxu0 %v491
    %v2337 = vpop.f32.mrf.mxu0
    %v2338 = vadd.f32 %v2267, %v2337
    %v2339 = vpop.f32.mrf.mxu0
    %v2340 = vadd.f32 %v2269, %v2339
    %2341 = vdwg.mxu0
    %2342 = vmatprep.subr.mxu0 %v1388
    %2343 = vmatpush1.msra.mxu0 %v1387
    %2344 = vmatprep.subr.mxu0 %v1380
    %2345 = vmatpush1.msra.mxu0 %v1379
    %2346 = vmatprep.subr.mxu0 %v1372
    %2347 = vmatpush1.msra.mxu0 %v1371
    %2348 = vmatprep.subr.mxu0 %v1364
    %2349 = vmatpush1.msra.mxu0 %v1363
    %2350 = vmatprep.subr.mxu0 %v1356
    %2351 = vmatpush1.msra.mxu0 %v1355
    %2352 = vmatprep.subr.mxu0 %v1348
    %2353 = vmatpush1.msra.mxu0 %v1347
    %2354 = vmatprep.subr.mxu0 %v1340
    %2355 = vmatpush1.msra.mxu0 %v1339
    %2356 = vmatprep.subr.mxu0 %v1332
    %2357 = vmatpush1.msra.mxu0 %v1331
    %2358 = vmatprep.subr.mxu0 %v1324
    %2359 = vmatpush1.msra.mxu0 %v1323
    %2360 = vmatprep.subr.mxu0 %v1316
    %2361 = vmatpush1.msra.mxu0 %v1315
    %2362 = vmatprep.subr.mxu0 %v1308
    %2363 = vmatpush1.msra.mxu0 %v1307
    %2364 = vmatprep.subr.mxu0 %v1300
    %2365 = vmatpush1.msra.mxu0 %v1299
    %2366 = vmatprep.subr.mxu0 %v1292
    %2367 = vmatpush1.msra.mxu0 %v1291
    %2368 = vmatprep.subr.mxu0 %v1284
    %2369 = vmatpush1.msra.mxu0 %v1283
    %2370 = vmatprep.subr.mxu0 %v1276
    %2371 = vmatpush1.msra.mxu0 %v1275
    %2372 = vmatprep.subr.mxu0 %v1268
    %2373 = vmatpush1.msra.mxu0 %v1267
    %2374 = vmatprep.subr.mxu0 %v1516
    %2375 = vmatpush2.msra.mxu0 %v1515
    %2376 = vmatprep.subr.mxu0 %v1508
    %2377 = vmatpush2.msra.mxu0 %v1507
    %2378 = vmatprep.subr.mxu0 %v1500
    %2379 = vmatpush2.msra.mxu0 %v1499
    %2380 = vmatprep.subr.mxu0 %v1492
    %2381 = vmatpush2.msra.mxu0 %v1491
    %2382 = vmatprep.subr.mxu0 %v1484
    %2383 = vmatpush2.msra.mxu0 %v1483
    %2384 = vmatprep.subr.mxu0 %v1476
    %2385 = vmatpush2.msra.mxu0 %v1475
    %2386 = vmatprep.subr.mxu0 %v1468
    %2387 = vmatpush2.msra.mxu0 %v1467
    %2388 = vmatprep.subr.mxu0 %v1460
    %2389 = vmatpush2.msra.mxu0 %v1459
    %2390 = vmatprep.subr.mxu0 %v1452
    %2391 = vmatpush2.msra.mxu0 %v1451
    %2392 = vmatprep.subr.mxu0 %v1444
    %2393 = vmatpush2.msra.mxu0 %v1443
    %2394 = vmatprep.subr.mxu0 %v1436
    %2395 = vmatpush2.msra.mxu0 %v1435
    %2396 = vmatprep.subr.mxu0 %v1428
    %2397 = vmatpush2.msra.mxu0 %v1427
    %2398 = vmatprep.subr.mxu0 %v1420
    %2399 = vmatpush2.msra.mxu0 %v1419
    %2400 = vmatprep.subr.mxu0 %v1412
    %2401 = vmatpush2.msra.mxu0 %v1411
    %2402 = vmatprep.subr.mxu0 %v1404
    %2403 = vmatpush2.msra.mxu0 %v1403
    %2404 = vmatprep.subr.mxu0 %v1396
    %2405 = vmatpush2.msra.mxu0 %v1395
    %2406 = vmatprep.mubr.f32.mxu0 %v494
    %2407 = vmatmul.mubr.f32.gmra.mxu0 %v493
    %v2408 = vpop.f32.mrf.mxu0
    %v2409 = vadd.f32 %v2338, %v2408
    %v2410 = vpop.f32.mrf.mxu0
    %v2411 = vadd.f32 %v2340, %v2410
    %2412 = vdwg.mxu0
    %2413 = vmatprep.subr.mxu0 %v622
    %2414 = vmatpush1.msra.mxu0 %v621
    %2415 = vmatprep.subr.mxu0 %v614
    %2416 = vmatpush1.msra.mxu0 %v613
    %2417 = vmatprep.subr.mxu0 %v606
    %2418 = vmatpush1.msra.mxu0 %v605
    %2419 = vmatprep.subr.mxu0 %v598
    %2420 = vmatpush1.msra.mxu0 %v597
    %2421 = vmatprep.subr.mxu0 %v590
    %2422 = vmatpush1.msra.mxu0 %v589
    %2423 = vmatprep.subr.mxu0 %v582
    %2424 = vmatpush1.msra.mxu0 %v581
    %2425 = vmatprep.subr.mxu0 %v574
    %2426 = vmatpush1.msra.mxu0 %v573
    %2427 = vmatprep.subr.mxu0 %v566
    %2428 = vmatpush1.msra.mxu0 %v565
    %2429 = vmatprep.subr.mxu0 %v558
    %2430 = vmatpush1.msra.mxu0 %v557
    %2431 = vmatprep.subr.mxu0 %v550
    %2432 = vmatpush1.msra.mxu0 %v549
    %2433 = vmatprep.subr.mxu0 %v542
    %2434 = vmatpush1.msra.mxu0 %v541
    %2435 = vmatprep.subr.mxu0 %v534
    %2436 = vmatpush1.msra.mxu0 %v533
    %2437 = vmatprep.subr.mxu0 %v526
    %2438 = vmatpush1.msra.mxu0 %v525
    %2439 = vmatprep.subr.mxu0 %v518
    %2440 = vmatpush1.msra.mxu0 %v517
    %2441 = vmatprep.subr.mxu0 %v510
    %2442 = vmatpush1.msra.mxu0 %v509
    %2443 = vmatprep.subr.mxu0 %v502
    %2444 = vmatpush1.msra.mxu0 %v501
    %2445 = vmatprep.subr.mxu0 %v750
    %2446 = vmatpush2.msra.mxu0 %v749
    %2447 = vmatprep.subr.mxu0 %v742
    %2448 = vmatpush2.msra.mxu0 %v741
    %2449 = vmatprep.subr.mxu0 %v734
    %2450 = vmatpush2.msra.mxu0 %v733
    %2451 = vmatprep.subr.mxu0 %v726
    %2452 = vmatpush2.msra.mxu0 %v725
    %2453 = vmatprep.subr.mxu0 %v718
    %2454 = vmatpush2.msra.mxu0 %v717
    %2455 = vmatprep.subr.mxu0 %v710
    %2456 = vmatpush2.msra.mxu0 %v709
    %2457 = vmatprep.subr.mxu0 %v702
    %2458 = vmatpush2.msra.mxu0 %v701
    %2459 = vmatprep.subr.mxu0 %v694
    %2460 = vmatpush2.msra.mxu0 %v693
    %2461 = vmatprep.subr.mxu0 %v686
    %2462 = vmatpush2.msra.mxu0 %v685
    %2463 = vmatprep.subr.mxu0 %v678
    %2464 = vmatpush2.msra.mxu0 %v677
    %2465 = vmatprep.subr.mxu0 %v670
    %2466 = vmatpush2.msra.mxu0 %v669
    %2467 = vmatprep.subr.mxu0 %v662
    %2468 = vmatpush2.msra.mxu0 %v661
    %2469 = vmatprep.subr.mxu0 %v654
    %2470 = vmatpush2.msra.mxu0 %v653
    %2471 = vmatprep.subr.mxu0 %v646
    %2472 = vmatpush2.msra.mxu0 %v645
    %2473 = vmatprep.subr.mxu0 %v638
    %2474 = vmatpush2.msra.mxu0 %v637
    %2475 = vmatprep.subr.mxu0 %v630
    %2476 = vmatpush2.msra.mxu0 %v629
    %2477 = vmatprep.mubr.f32.mxu0 %v488
    %2478 = vmatmul.mubr.f32.gmra.mxu0 %v487
    %v2479 = vpop.f32.mrf.mxu0
    %v2480 = vadd.f32 %v1548, %v2479
    %v2481 = vpop.f32.mrf.mxu0
    %v2482 = vadd.f32 %v1552, %v2481
    %2483 = vdwg.mxu0
    %2484 = vmatprep.subr.mxu0 %v878
    %2485 = vmatpush1.msra.mxu0 %v877
    %2486 = vmatprep.subr.mxu0 %v870
    %2487 = vmatpush1.msra.mxu0 %v869
    %2488 = vmatprep.subr.mxu0 %v862
    %2489 = vmatpush1.msra.mxu0 %v861
    %2490 = vmatprep.subr.mxu0 %v854
    %2491 = vmatpush1.msra.mxu0 %v853
    %2492 = vmatprep.subr.mxu0 %v846
    %2493 = vmatpush1.msra.mxu0 %v845
    %2494 = vmatprep.subr.mxu0 %v838
    %2495 = vmatpush1.msra.mxu0 %v837
    %2496 = vmatprep.subr.mxu0 %v830
    %2497 = vmatpush1.msra.mxu0 %v829
    %2498 = vmatprep.subr.mxu0 %v822
    %2499 = vmatpush1.msra.mxu0 %v821
    %2500 = vmatprep.subr.mxu0 %v814
    %2501 = vmatpush1.msra.mxu0 %v813
    %2502 = vmatprep.subr.mxu0 %v806
    %2503 = vmatpush1.msra.mxu0 %v805
    %2504 = vmatprep.subr.mxu0 %v798
    %2505 = vmatpush1.msra.mxu0 %v797
    %2506 = vmatprep.subr.mxu0 %v790
    %2507 = vmatpush1.msra.mxu0 %v789
    %2508 = vmatprep.subr.mxu0 %v782
    %2509 = vmatpush1.msra.mxu0 %v781
    %2510 = vmatprep.subr.mxu0 %v774
    %2511 = vmatpush1.msra.mxu0 %v773
    %2512 = vmatprep.subr.mxu0 %v766
    %2513 = vmatpush1.msra.mxu0 %v765
    %2514 = vmatprep.subr.mxu0 %v758
    %2515 = vmatpush1.msra.mxu0 %v757
    %2516 = vmatprep.subr.mxu0 %v1006
    %2517 = vmatpush2.msra.mxu0 %v1005
    %2518 = vmatprep.subr.mxu0 %v998
    %2519 = vmatpush2.msra.mxu0 %v997
    %2520 = vmatprep.subr.mxu0 %v990
    %2521 = vmatpush2.msra.mxu0 %v989
    %2522 = vmatprep.subr.mxu0 %v982
    %2523 = vmatpush2.msra.mxu0 %v981
    %2524 = vmatprep.subr.mxu0 %v974
    %2525 = vmatpush2.msra.mxu0 %v973
    %2526 = vmatprep.subr.mxu0 %v966
    %2527 = vmatpush2.msra.mxu0 %v965
    %2528 = vmatprep.subr.mxu0 %v958
    %2529 = vmatpush2.msra.mxu0 %v957
    %2530 = vmatprep.subr.mxu0 %v950
    %2531 = vmatpush2.msra.mxu0 %v949
    %2532 = vmatprep.subr.mxu0 %v942
    %2533 = vmatpush2.msra.mxu0 %v941
    %2534 = vmatprep.subr.mxu0 %v934
    %2535 = vmatpush2.msra.mxu0 %v933
    %2536 = vmatprep.subr.mxu0 %v926
    %2537 = vmatpush2.msra.mxu0 %v925
    %2538 = vmatprep.subr.mxu0 %v918
    %2539 = vmatpush2.msra.mxu0 %v917
    %2540 = vmatprep.subr.mxu0 %v910
    %2541 = vmatpush2.msra.mxu0 %v909
    %2542 = vmatprep.subr.mxu0 %v902
    %2543 = vmatpush2.msra.mxu0 %v901
    %2544 = vmatprep.subr.mxu0 %v894
    %2545 = vmatpush2.msra.mxu0 %v893
    %2546 = vmatprep.subr.mxu0 %v886
    %2547 = vmatpush2.msra.mxu0 %v885
    %2548 = vmatprep.mubr.f32.mxu0 %v490
    %2549 = vmatmul.mubr.f32.gmra.mxu0 %v489
    %v2550 = vpop.f32.mrf.mxu0
    %v2551 = vadd.f32 %v2480, %v2550
    %v2552 = vpop.f32.mrf.mxu0
    %v2553 = vadd.f32 %v2482, %v2552
    %2554 = vdwg.mxu0
    %2555 = vmatprep.subr.mxu0 %v1134
    %2556 = vmatpush1.msra.mxu0 %v1133
    %2557 = vmatprep.subr.mxu0 %v1126
    %2558 = vmatpush1.msra.mxu0 %v1125
    %2559 = vmatprep.subr.mxu0 %v1118
    %2560 = vmatpush1.msra.mxu0 %v1117
    %2561 = vmatprep.subr.mxu0 %v1110
    %2562 = vmatpush1.msra.mxu0 %v1109
    %2563 = vmatprep.subr.mxu0 %v1102
    %2564 = vmatpush1.msra.mxu0 %v1101
    %2565 = vmatprep.subr.mxu0 %v1094
    %2566 = vmatpush1.msra.mxu0 %v1093
    %2567 = vmatprep.subr.mxu0 %v1086
    %2568 = vmatpush1.msra.mxu0 %v1085
    %2569 = vmatprep.subr.mxu0 %v1078
    %2570 = vmatpush1.msra.mxu0 %v1077
    %2571 = vmatprep.subr.mxu0 %v1070
    %2572 = vmatpush1.msra.mxu0 %v1069
    %2573 = vmatprep.subr.mxu0 %v1062
    %2574 = vmatpush1.msra.mxu0 %v1061
    %2575 = vmatprep.subr.mxu0 %v1054
    %2576 = vmatpush1.msra.mxu0 %v1053
    %2577 = vmatprep.subr.mxu0 %v1046
    %2578 = vmatpush1.msra.mxu0 %v1045
    %2579 = vmatprep.subr.mxu0 %v1038
    %2580 = vmatpush1.msra.mxu0 %v1037
    %2581 = vmatprep.subr.mxu0 %v1030
    %2582 = vmatpush1.msra.mxu0 %v1029
    %2583 = vmatprep.subr.mxu0 %v1022
    %2584 = vmatpush1.msra.mxu0 %v1021
    %2585 = vmatprep.subr.mxu0 %v1014
    %2586 = vmatpush1.msra.mxu0 %v1013
    %2587 = vmatprep.subr.mxu0 %v1262
    %2588 = vmatpush2.msra.mxu0 %v1261
    %2589 = vmatprep.subr.mxu0 %v1254
    %2590 = vmatpush2.msra.mxu0 %v1253
    %2591 = vmatprep.subr.mxu0 %v1246
    %2592 = vmatpush2.msra.mxu0 %v1245
    %2593 = vmatprep.subr.mxu0 %v1238
    %2594 = vmatpush2.msra.mxu0 %v1237
    %2595 = vmatprep.subr.mxu0 %v1230
    %2596 = vmatpush2.msra.mxu0 %v1229
    %2597 = vmatprep.subr.mxu0 %v1222
    %2598 = vmatpush2.msra.mxu0 %v1221
    %2599 = vmatprep.subr.mxu0 %v1214
    %2600 = vmatpush2.msra.mxu0 %v1213
    %2601 = vmatprep.subr.mxu0 %v1206
    %2602 = vmatpush2.msra.mxu0 %v1205
    %2603 = vmatprep.subr.mxu0 %v1198
    %2604 = vmatpush2.msra.mxu0 %v1197
    %2605 = vmatprep.subr.mxu0 %v1190
    %2606 = vmatpush2.msra.mxu0 %v1189
    %2607 = vmatprep.subr.mxu0 %v1182
    %2608 = vmatpush2.msra.mxu0 %v1181
    %2609 = vmatprep.subr.mxu0 %v1174
    %2610 = vmatpush2.msra.mxu0 %v1173
    %2611 = vmatprep.subr.mxu0 %v1166
    %2612 = vmatpush2.msra.mxu0 %v1165
    %2613 = vmatprep.subr.mxu0 %v1158
    %2614 = vmatpush2.msra.mxu0 %v1157
    %2615 = vmatprep.subr.mxu0 %v1150
    %2616 = vmatpush2.msra.mxu0 %v1149
    %2617 = vmatprep.subr.mxu0 %v1142
    %2618 = vmatpush2.msra.mxu0 %v1141
    %2619 = vmatprep.mubr.f32.mxu0 %v492
    %2620 = vmatmul.mubr.f32.gmra.mxu0 %v491
    %v2621 = vpop.f32.mrf.mxu0
    %v2622 = vadd.f32 %v2551, %v2621
    %v2623 = vpop.f32.mrf.mxu0
    %v2624 = vadd.f32 %v2553, %v2623
    %2625 = vdwg.mxu0
    %2626 = vmatprep.subr.mxu0 %v1390
    %2627 = vmatpush1.msra.mxu0 %v1389
    %2628 = vmatprep.subr.mxu0 %v1382
    %2629 = vmatpush1.msra.mxu0 %v1381
    %2630 = vmatprep.subr.mxu0 %v1374
    %2631 = vmatpush1.msra.mxu0 %v1373
    %2632 = vmatprep.subr.mxu0 %v1366
    %2633 = vmatpush1.msra.mxu0 %v1365
    %2634 = vmatprep.subr.mxu0 %v1358
    %2635 = vmatpush1.msra.mxu0 %v1357
    %2636 = vmatprep.subr.mxu0 %v1350
    %2637 = vmatpush1.msra.mxu0 %v1349
    %2638 = vmatprep.subr.mxu0 %v1342
    %2639 = vmatpush1.msra.mxu0 %v1341
    %2640 = vmatprep.subr.mxu0 %v1334
    %2641 = vmatpush1.msra.mxu0 %v1333
    %2642 = vmatprep.subr.mxu0 %v1326
    %2643 = vmatpush1.msra.mxu0 %v1325
    %2644 = vmatprep.subr.mxu0 %v1318
    %2645 = vmatpush1.msra.mxu0 %v1317
    %2646 = vmatprep.subr.mxu0 %v1310
    %2647 = vmatpush1.msra.mxu0 %v1309
    %2648 = vmatprep.subr.mxu0 %v1302
    %2649 = vmatpush1.msra.mxu0 %v1301
    %2650 = vmatprep.subr.mxu0 %v1294
    %2651 = vmatpush1.msra.mxu0 %v1293
    %2652 = vmatprep.subr.mxu0 %v1286
    %2653 = vmatpush1.msra.mxu0 %v1285
    %2654 = vmatprep.subr.mxu0 %v1278
    %2655 = vmatpush1.msra.mxu0 %v1277
    %2656 = vmatprep.subr.mxu0 %v1270
    %2657 = vmatpush1.msra.mxu0 %v1269
    %2658 = vmatprep.subr.mxu0 %v1518
    %2659 = vmatpush2.msra.mxu0 %v1517
    %2660 = vmatprep.subr.mxu0 %v1510
    %2661 = vmatpush2.msra.mxu0 %v1509
    %2662 = vmatprep.subr.mxu0 %v1502
    %2663 = vmatpush2.msra.mxu0 %v1501
    %2664 = vmatprep.subr.mxu0 %v1494
    %2665 = vmatpush2.msra.mxu0 %v1493
    %2666 = vmatprep.subr.mxu0 %v1486
    %2667 = vmatpush2.msra.mxu0 %v1485
    %2668 = vmatprep.subr.mxu0 %v1478
    %2669 = vmatpush2.msra.mxu0 %v1477
    %2670 = vmatprep.subr.mxu0 %v1470
    %2671 = vmatpush2.msra.mxu0 %v1469
    %2672 = vmatprep.subr.mxu0 %v1462
    %2673 = vmatpush2.msra.mxu0 %v1461
    %2674 = vmatprep.subr.mxu0 %v1454
    %2675 = vmatpush2.msra.mxu0 %v1453
    %2676 = vmatprep.subr.mxu0 %v1446
    %2677 = vmatpush2.msra.mxu0 %v1445
    %2678 = vmatprep.subr.mxu0 %v1438
    %2679 = vmatpush2.msra.mxu0 %v1437
    %2680 = vmatprep.subr.mxu0 %v1430
    %2681 = vmatpush2.msra.mxu0 %v1429
    %2682 = vmatprep.subr.mxu0 %v1422
    %2683 = vmatpush2.msra.mxu0 %v1421
    %2684 = vmatprep.subr.mxu0 %v1414
    %2685 = vmatpush2.msra.mxu0 %v1413
    %2686 = vmatprep.subr.mxu0 %v1406
    %2687 = vmatpush2.msra.mxu0 %v1405
    %2688 = vmatprep.subr.mxu0 %v1398
    %2689 = vmatpush2.msra.mxu0 %v1397
    %2690 = vmatprep.mubr.f32.mxu0 %v494
    %2691 = vmatmul.mubr.f32.gmra.mxu0 %v493
    %v2692 = vpop.f32.mrf.mxu0
    %v2693 = vadd.f32 %v2622, %v2692
    %v2694 = vpop.f32.mrf.mxu0
    %v2695 = vadd.f32 %v2624, %v2694
    %2696 = vdwg.mxu0
    %v2697 = vmax.f32 %v1841, 0.0
    %v2698 = vmax.f32 %v1843, 0.0
    %v2699 = vmax.f32 %v2125, 0.0
    %v2700 = vmax.f32 %v2127, 0.0
    %v2701 = vmax.f32 %v2409, 0.0
    %v2702 = vmax.f32 %v2411, 0.0
    %v2703 = vmax.f32 %v2693, 0.0
    %v2704 = vmax.f32 %v2695, 0.0
    %s2705 = scalar_lea.vmem [#allocation8], 8192
    %v2706 = vld [vmem:[%s2705] sm:$0xff]
    %v2707 = vld [vmem:[%s2705 + $0x8] sm:$0xff]
    %v2708 = vld [vmem:[%s2705 + $0x10] sm:$0xff]
    %v2709 = vld [vmem:[%s2705 + $0x18] sm:$0xff]
    %v2710 = vld [vmem:[%s2705 + $0x20] sm:$0xff]
    %v2711 = vld [vmem:[%s2705 + $0x28] sm:$0xff]
    %v2712 = vld [vmem:[%s2705 + $0x30] sm:$0xff]
    %v2713 = vld [vmem:[%s2705 + $0x38] sm:$0xff]
    %v2714 = vld [vmem:[%s2705 + $0x40] sm:$0xff]
    %v2715 = vld [vmem:[%s2705 + $0x48] sm:$0xff]
    %v2716 = vld [vmem:[%s2705 + $0x50] sm:$0xff]
    %v2717 = vld [vmem:[%s2705 + $0x58] sm:$0xff]
    %v2718 = vld [vmem:[%s2705 + $0x60] sm:$0xff]
    %v2719 = vld [vmem:[%s2705 + $0x68] sm:$0xff]
    %v2720 = vld [vmem:[%s2705 + $0x70] sm:$0xff]
    %v2721 = vld [vmem:[%s2705 + $0x78] sm:$0xff]
    %v2722 = vld [vmem:[%s2705 + $0x80] sm:$0xff]
    %v2723 = vld [vmem:[%s2705 + $0x88] sm:$0xff]
    %v2724 = vld [vmem:[%s2705 + $0x90] sm:$0xff]
    %v2725 = vld [vmem:[%s2705 + $0x98] sm:$0xff]
    %v2726 = vld [vmem:[%s2705 + $0xa0] sm:$0xff]
    %v2727 = vld [vmem:[%s2705 + $0xa8] sm:$0xff]
    %v2728 = vld [vmem:[%s2705 + $0xb0] sm:$0xff]
    %v2729 = vld [vmem:[%s2705 + $0xb8] sm:$0xff]
    %v2730 = vld [vmem:[%s2705 + $0xc0] sm:$0xff]
    %v2731 = vld [vmem:[%s2705 + $0xc8] sm:$0xff]
    %v2732 = vld [vmem:[%s2705 + $0xd0] sm:$0xff]
    %v2733 = vld [vmem:[%s2705 + $0xd8] sm:$0xff]
    %v2734 = vld [vmem:[%s2705 + $0xe0] sm:$0xff]
    %v2735 = vld [vmem:[%s2705 + $0xe8] sm:$0xff]
    %v2736 = vld [vmem:[%s2705 + $0xf0] sm:$0xff]
    %v2737 = vld [vmem:[%s2705 + $0xf8] sm:$0xff]
    %v2738 = vld [vmem:[%s2705 + $0x100] sm:$0xff]
    %v2739 = vld [vmem:[%s2705 + $0x108] sm:$0xff]
    %v2740 = vld [vmem:[%s2705 + $0x110] sm:$0xff]
    %v2741 = vld [vmem:[%s2705 + $0x118] sm:$0xff]
    %v2742 = vld [vmem:[%s2705 + $0x120] sm:$0xff]
    %v2743 = vld [vmem:[%s2705 + $0x128] sm:$0xff]
    %v2744 = vld [vmem:[%s2705 + $0x130] sm:$0xff]
    %v2745 = vld [vmem:[%s2705 + $0x138] sm:$0xff]
    %v2746 = vld [vmem:[%s2705 + $0x140] sm:$0xff]
    %v2747 = vld [vmem:[%s2705 + $0x148] sm:$0xff]
    %v2748 = vld [vmem:[%s2705 + $0x150] sm:$0xff]
    %v2749 = vld [vmem:[%s2705 + $0x158] sm:$0xff]
    %v2750 = vld [vmem:[%s2705 + $0x160] sm:$0xff]
    %v2751 = vld [vmem:[%s2705 + $0x168] sm:$0xff]
    %v2752 = vld [vmem:[%s2705 + $0x170] sm:$0xff]
    %v2753 = vld [vmem:[%s2705 + $0x178] sm:$0xff]
    %v2754 = vld [vmem:[%s2705 + $0x180] sm:$0xff]
    %v2755 = vld [vmem:[%s2705 + $0x188] sm:$0xff]
    %v2756 = vld [vmem:[%s2705 + $0x190] sm:$0xff]
    %v2757 = vld [vmem:[%s2705 + $0x198] sm:$0xff]
    %v2758 = vld [vmem:[%s2705 + $0x1a0] sm:$0xff]
    %v2759 = vld [vmem:[%s2705 + $0x1a8] sm:$0xff]
    %v2760 = vld [vmem:[%s2705 + $0x1b0] sm:$0xff]
    %v2761 = vld [vmem:[%s2705 + $0x1b8] sm:$0xff]
    %v2762 = vld [vmem:[%s2705 + $0x1c0] sm:$0xff]
    %v2763 = vld [vmem:[%s2705 + $0x1c8] sm:$0xff]
    %v2764 = vld [vmem:[%s2705 + $0x1d0] sm:$0xff]
    %v2765 = vld [vmem:[%s2705 + $0x1d8] sm:$0xff]
    %v2766 = vld [vmem:[%s2705 + $0x1e0] sm:$0xff]
    %v2767 = vld [vmem:[%s2705 + $0x1e8] sm:$0xff]
    %v2768 = vld [vmem:[%s2705 + $0x1f0] sm:$0xff]
    %v2769 = vld [vmem:[%s2705 + $0x1f8] sm:$0xff]
    %v2770 = vld [vmem:[%s2705 + $0x200] sm:$0xff]
    %v2771 = vld [vmem:[%s2705 + $0x208] sm:$0xff]
    %v2772 = vld [vmem:[%s2705 + $0x210] sm:$0xff]
    %v2773 = vld [vmem:[%s2705 + $0x218] sm:$0xff]
    %v2774 = vld [vmem:[%s2705 + $0x220] sm:$0xff]
    %v2775 = vld [vmem:[%s2705 + $0x228] sm:$0xff]
    %v2776 = vld [vmem:[%s2705 + $0x230] sm:$0xff]
    %v2777 = vld [vmem:[%s2705 + $0x238] sm:$0xff]
    %v2778 = vld [vmem:[%s2705 + $0x240] sm:$0xff]
    %v2779 = vld [vmem:[%s2705 + $0x248] sm:$0xff]
    %v2780 = vld [vmem:[%s2705 + $0x250] sm:$0xff]
    %v2781 = vld [vmem:[%s2705 + $0x258] sm:$0xff]
    %v2782 = vld [vmem:[%s2705 + $0x260] sm:$0xff]
    %v2783 = vld [vmem:[%s2705 + $0x268] sm:$0xff]
    %v2784 = vld [vmem:[%s2705 + $0x270] sm:$0xff]
    %v2785 = vld [vmem:[%s2705 + $0x278] sm:$0xff]
    %v2786 = vld [vmem:[%s2705 + $0x280] sm:$0xff]
    %v2787 = vld [vmem:[%s2705 + $0x288] sm:$0xff]
    %v2788 = vld [vmem:[%s2705 + $0x290] sm:$0xff]
    %v2789 = vld [vmem:[%s2705 + $0x298] sm:$0xff]
    %v2790 = vld [vmem:[%s2705 + $0x2a0] sm:$0xff]
    %v2791 = vld [vmem:[%s2705 + $0x2a8] sm:$0xff]
    %v2792 = vld [vmem:[%s2705 + $0x2b0] sm:$0xff]
    %v2793 = vld [vmem:[%s2705 + $0x2b8] sm:$0xff]
    %v2794 = vld [vmem:[%s2705 + $0x2c0] sm:$0xff]
    %v2795 = vld [vmem:[%s2705 + $0x2c8] sm:$0xff]
    %v2796 = vld [vmem:[%s2705 + $0x2d0] sm:$0xff]
    %v2797 = vld [vmem:[%s2705 + $0x2d8] sm:$0xff]
    %v2798 = vld [vmem:[%s2705 + $0x2e0] sm:$0xff]
    %v2799 = vld [vmem:[%s2705 + $0x2e8] sm:$0xff]
    %v2800 = vld [vmem:[%s2705 + $0x2f0] sm:$0xff]
    %v2801 = vld [vmem:[%s2705 + $0x2f8] sm:$0xff]
    %v2802 = vld [vmem:[%s2705 + $0x300] sm:$0xff]
    %v2803 = vld [vmem:[%s2705 + $0x308] sm:$0xff]
    %v2804 = vld [vmem:[%s2705 + $0x310] sm:$0xff]
    %v2805 = vld [vmem:[%s2705 + $0x318] sm:$0xff]
    %v2806 = vld [vmem:[%s2705 + $0x320] sm:$0xff]
    %v2807 = vld [vmem:[%s2705 + $0x328] sm:$0xff]
    %v2808 = vld [vmem:[%s2705 + $0x330] sm:$0xff]
    %v2809 = vld [vmem:[%s2705 + $0x338] sm:$0xff]
    %v2810 = vld [vmem:[%s2705 + $0x340] sm:$0xff]
    %v2811 = vld [vmem:[%s2705 + $0x348] sm:$0xff]
    %v2812 = vld [vmem:[%s2705 + $0x350] sm:$0xff]
    %v2813 = vld [vmem:[%s2705 + $0x358] sm:$0xff]
    %v2814 = vld [vmem:[%s2705 + $0x360] sm:$0xff]
    %v2815 = vld [vmem:[%s2705 + $0x368] sm:$0xff]
    %v2816 = vld [vmem:[%s2705 + $0x370] sm:$0xff]
    %v2817 = vld [vmem:[%s2705 + $0x378] sm:$0xff]
    %v2818 = vld [vmem:[%s2705 + $0x380] sm:$0xff]
    %v2819 = vld [vmem:[%s2705 + $0x388] sm:$0xff]
    %v2820 = vld [vmem:[%s2705 + $0x390] sm:$0xff]
    %v2821 = vld [vmem:[%s2705 + $0x398] sm:$0xff]
    %v2822 = vld [vmem:[%s2705 + $0x3a0] sm:$0xff]
    %v2823 = vld [vmem:[%s2705 + $0x3a8] sm:$0xff]
    %v2824 = vld [vmem:[%s2705 + $0x3b0] sm:$0xff]
    %v2825 = vld [vmem:[%s2705 + $0x3b8] sm:$0xff]
    %v2826 = vld [vmem:[%s2705 + $0x3c0] sm:$0xff]
    %v2827 = vld [vmem:[%s2705 + $0x3c8] sm:$0xff]
    %v2828 = vld [vmem:[%s2705 + $0x3d0] sm:$0xff]
    %v2829 = vld [vmem:[%s2705 + $0x3d8] sm:$0xff]
    %v2830 = vld [vmem:[%s2705 + $0x3e0] sm:$0xff]
    %v2831 = vld [vmem:[%s2705 + $0x3e8] sm:$0xff]
    %v2832 = vld [vmem:[%s2705 + $0x3f0] sm:$0xff]
    %v2833 = vld [vmem:[%s2705 + $0x3f8] sm:$0xff]
    %v2834 = vld [vmem:[%s2705 + $0x400] sm:$0xff]
    %v2835 = vld [vmem:[%s2705 + $0x408] sm:$0xff]
    %v2836 = vld [vmem:[%s2705 + $0x410] sm:$0xff]
    %v2837 = vld [vmem:[%s2705 + $0x418] sm:$0xff]
    %v2838 = vld [vmem:[%s2705 + $0x420] sm:$0xff]
    %v2839 = vld [vmem:[%s2705 + $0x428] sm:$0xff]
    %v2840 = vld [vmem:[%s2705 + $0x430] sm:$0xff]
    %v2841 = vld [vmem:[%s2705 + $0x438] sm:$0xff]
    %v2842 = vld [vmem:[%s2705 + $0x440] sm:$0xff]
    %v2843 = vld [vmem:[%s2705 + $0x448] sm:$0xff]
    %v2844 = vld [vmem:[%s2705 + $0x450] sm:$0xff]
    %v2845 = vld [vmem:[%s2705 + $0x458] sm:$0xff]
    %v2846 = vld [vmem:[%s2705 + $0x460] sm:$0xff]
    %v2847 = vld [vmem:[%s2705 + $0x468] sm:$0xff]
    %v2848 = vld [vmem:[%s2705 + $0x470] sm:$0xff]
    %v2849 = vld [vmem:[%s2705 + $0x478] sm:$0xff]
    %v2850 = vld [vmem:[%s2705 + $0x480] sm:$0xff]
    %v2851 = vld [vmem:[%s2705 + $0x488] sm:$0xff]
    %v2852 = vld [vmem:[%s2705 + $0x490] sm:$0xff]
    %v2853 = vld [vmem:[%s2705 + $0x498] sm:$0xff]
    %v2854 = vld [vmem:[%s2705 + $0x4a0] sm:$0xff]
    %v2855 = vld [vmem:[%s2705 + $0x4a8] sm:$0xff]
    %v2856 = vld [vmem:[%s2705 + $0x4b0] sm:$0xff]
    %v2857 = vld [vmem:[%s2705 + $0x4b8] sm:$0xff]
    %v2858 = vld [vmem:[%s2705 + $0x4c0] sm:$0xff]
    %v2859 = vld [vmem:[%s2705 + $0x4c8] sm:$0xff]
    %v2860 = vld [vmem:[%s2705 + $0x4d0] sm:$0xff]
    %v2861 = vld [vmem:[%s2705 + $0x4d8] sm:$0xff]
    %v2862 = vld [vmem:[%s2705 + $0x4e0] sm:$0xff]
    %v2863 = vld [vmem:[%s2705 + $0x4e8] sm:$0xff]
    %v2864 = vld [vmem:[%s2705 + $0x4f0] sm:$0xff]
    %v2865 = vld [vmem:[%s2705 + $0x4f8] sm:$0xff]
    %v2866 = vld [vmem:[%s2705 + $0x500] sm:$0xff]
    %v2867 = vld [vmem:[%s2705 + $0x508] sm:$0xff]
    %v2868 = vld [vmem:[%s2705 + $0x510] sm:$0xff]
    %v2869 = vld [vmem:[%s2705 + $0x518] sm:$0xff]
    %v2870 = vld [vmem:[%s2705 + $0x520] sm:$0xff]
    %v2871 = vld [vmem:[%s2705 + $0x528] sm:$0xff]
    %v2872 = vld [vmem:[%s2705 + $0x530] sm:$0xff]
    %v2873 = vld [vmem:[%s2705 + $0x538] sm:$0xff]
    %v2874 = vld [vmem:[%s2705 + $0x540] sm:$0xff]
    %v2875 = vld [vmem:[%s2705 + $0x548] sm:$0xff]
    %v2876 = vld [vmem:[%s2705 + $0x550] sm:$0xff]
    %v2877 = vld [vmem:[%s2705 + $0x558] sm:$0xff]
    %v2878 = vld [vmem:[%s2705 + $0x560] sm:$0xff]
    %v2879 = vld [vmem:[%s2705 + $0x568] sm:$0xff]
    %v2880 = vld [vmem:[%s2705 + $0x570] sm:$0xff]
    %v2881 = vld [vmem:[%s2705 + $0x578] sm:$0xff]
    %v2882 = vld [vmem:[%s2705 + $0x580] sm:$0xff]
    %v2883 = vld [vmem:[%s2705 + $0x588] sm:$0xff]
    %v2884 = vld [vmem:[%s2705 + $0x590] sm:$0xff]
    %v2885 = vld [vmem:[%s2705 + $0x598] sm:$0xff]
    %v2886 = vld [vmem:[%s2705 + $0x5a0] sm:$0xff]
    %v2887 = vld [vmem:[%s2705 + $0x5a8] sm:$0xff]
    %v2888 = vld [vmem:[%s2705 + $0x5b0] sm:$0xff]
    %v2889 = vld [vmem:[%s2705 + $0x5b8] sm:$0xff]
    %v2890 = vld [vmem:[%s2705 + $0x5c0] sm:$0xff]
    %v2891 = vld [vmem:[%s2705 + $0x5c8] sm:$0xff]
    %v2892 = vld [vmem:[%s2705 + $0x5d0] sm:$0xff]
    %v2893 = vld [vmem:[%s2705 + $0x5d8] sm:$0xff]
    %v2894 = vld [vmem:[%s2705 + $0x5e0] sm:$0xff]
    %v2895 = vld [vmem:[%s2705 + $0x5e8] sm:$0xff]
    %v2896 = vld [vmem:[%s2705 + $0x5f0] sm:$0xff]
    %v2897 = vld [vmem:[%s2705 + $0x5f8] sm:$0xff]
    %v2898 = vld [vmem:[%s2705 + $0x600] sm:$0xff]
    %v2899 = vld [vmem:[%s2705 + $0x608] sm:$0xff]
    %v2900 = vld [vmem:[%s2705 + $0x610] sm:$0xff]
    %v2901 = vld [vmem:[%s2705 + $0x618] sm:$0xff]
    %v2902 = vld [vmem:[%s2705 + $0x620] sm:$0xff]
    %v2903 = vld [vmem:[%s2705 + $0x628] sm:$0xff]
    %v2904 = vld [vmem:[%s2705 + $0x630] sm:$0xff]
    %v2905 = vld [vmem:[%s2705 + $0x638] sm:$0xff]
    %v2906 = vld [vmem:[%s2705 + $0x640] sm:$0xff]
    %v2907 = vld [vmem:[%s2705 + $0x648] sm:$0xff]
    %v2908 = vld [vmem:[%s2705 + $0x650] sm:$0xff]
    %v2909 = vld [vmem:[%s2705 + $0x658] sm:$0xff]
    %v2910 = vld [vmem:[%s2705 + $0x660] sm:$0xff]
    %v2911 = vld [vmem:[%s2705 + $0x668] sm:$0xff]
    %v2912 = vld [vmem:[%s2705 + $0x670] sm:$0xff]
    %v2913 = vld [vmem:[%s2705 + $0x678] sm:$0xff]
    %v2914 = vld [vmem:[%s2705 + $0x680] sm:$0xff]
    %v2915 = vld [vmem:[%s2705 + $0x688] sm:$0xff]
    %v2916 = vld [vmem:[%s2705 + $0x690] sm:$0xff]
    %v2917 = vld [vmem:[%s2705 + $0x698] sm:$0xff]
    %v2918 = vld [vmem:[%s2705 + $0x6a0] sm:$0xff]
    %v2919 = vld [vmem:[%s2705 + $0x6a8] sm:$0xff]
    %v2920 = vld [vmem:[%s2705 + $0x6b0] sm:$0xff]
    %v2921 = vld [vmem:[%s2705 + $0x6b8] sm:$0xff]
    %v2922 = vld [vmem:[%s2705 + $0x6c0] sm:$0xff]
    %v2923 = vld [vmem:[%s2705 + $0x6c8] sm:$0xff]
    %v2924 = vld [vmem:[%s2705 + $0x6d0] sm:$0xff]
    %v2925 = vld [vmem:[%s2705 + $0x6d8] sm:$0xff]
    %v2926 = vld [vmem:[%s2705 + $0x6e0] sm:$0xff]
    %v2927 = vld [vmem:[%s2705 + $0x6e8] sm:$0xff]
    %v2928 = vld [vmem:[%s2705 + $0x6f0] sm:$0xff]
    %v2929 = vld [vmem:[%s2705 + $0x6f8] sm:$0xff]
    %v2930 = vld [vmem:[%s2705 + $0x700] sm:$0xff]
    %v2931 = vld [vmem:[%s2705 + $0x708] sm:$0xff]
    %v2932 = vld [vmem:[%s2705 + $0x710] sm:$0xff]
    %v2933 = vld [vmem:[%s2705 + $0x718] sm:$0xff]
    %v2934 = vld [vmem:[%s2705 + $0x720] sm:$0xff]
    %v2935 = vld [vmem:[%s2705 + $0x728] sm:$0xff]
    %v2936 = vld [vmem:[%s2705 + $0x730] sm:$0xff]
    %v2937 = vld [vmem:[%s2705 + $0x738] sm:$0xff]
    %v2938 = vld [vmem:[%s2705 + $0x740] sm:$0xff]
    %v2939 = vld [vmem:[%s2705 + $0x748] sm:$0xff]
    %v2940 = vld [vmem:[%s2705 + $0x750] sm:$0xff]
    %v2941 = vld [vmem:[%s2705 + $0x758] sm:$0xff]
    %v2942 = vld [vmem:[%s2705 + $0x760] sm:$0xff]
    %v2943 = vld [vmem:[%s2705 + $0x768] sm:$0xff]
    %v2944 = vld [vmem:[%s2705 + $0x770] sm:$0xff]
    %v2945 = vld [vmem:[%s2705 + $0x778] sm:$0xff]
    %v2946 = vld [vmem:[%s2705 + $0x780] sm:$0xff]
    %v2947 = vld [vmem:[%s2705 + $0x788] sm:$0xff]
    %v2948 = vld [vmem:[%s2705 + $0x790] sm:$0xff]
    %v2949 = vld [vmem:[%s2705 + $0x798] sm:$0xff]
    %v2950 = vld [vmem:[%s2705 + $0x7a0] sm:$0xff]
    %v2951 = vld [vmem:[%s2705 + $0x7a8] sm:$0xff]
    %v2952 = vld [vmem:[%s2705 + $0x7b0] sm:$0xff]
    %v2953 = vld [vmem:[%s2705 + $0x7b8] sm:$0xff]
    %v2954 = vld [vmem:[%s2705 + $0x7c0] sm:$0xff]
    %v2955 = vld [vmem:[%s2705 + $0x7c8] sm:$0xff]
    %v2956 = vld [vmem:[%s2705 + $0x7d0] sm:$0xff]
    %v2957 = vld [vmem:[%s2705 + $0x7d8] sm:$0xff]
    %v2958 = vld [vmem:[%s2705 + $0x7e0] sm:$0xff]
    %v2959 = vld [vmem:[%s2705 + $0x7e8] sm:$0xff]
    %v2960 = vld [vmem:[%s2705 + $0x7f0] sm:$0xff]
    %v2961 = vld [vmem:[%s2705 + $0x7f8] sm:$0xff]
    %v2962 = vld [vmem:[%s2705 + $0x800] sm:$0xff]
    %v2963 = vld [vmem:[%s2705 + $0x808] sm:$0xff]
    %v2964 = vld [vmem:[%s2705 + $0x810] sm:$0xff]
    %v2965 = vld [vmem:[%s2705 + $0x818] sm:$0xff]
    %v2966 = vld [vmem:[%s2705 + $0x820] sm:$0xff]
    %v2967 = vld [vmem:[%s2705 + $0x828] sm:$0xff]
    %v2968 = vld [vmem:[%s2705 + $0x830] sm:$0xff]
    %v2969 = vld [vmem:[%s2705 + $0x838] sm:$0xff]
    %v2970 = vld [vmem:[%s2705 + $0x840] sm:$0xff]
    %v2971 = vld [vmem:[%s2705 + $0x848] sm:$0xff]
    %v2972 = vld [vmem:[%s2705 + $0x850] sm:$0xff]
    %v2973 = vld [vmem:[%s2705 + $0x858] sm:$0xff]
    %v2974 = vld [vmem:[%s2705 + $0x860] sm:$0xff]
    %v2975 = vld [vmem:[%s2705 + $0x868] sm:$0xff]
    %v2976 = vld [vmem:[%s2705 + $0x870] sm:$0xff]
    %v2977 = vld [vmem:[%s2705 + $0x878] sm:$0xff]
    %v2978 = vld [vmem:[%s2705 + $0x880] sm:$0xff]
    %v2979 = vld [vmem:[%s2705 + $0x888] sm:$0xff]
    %v2980 = vld [vmem:[%s2705 + $0x890] sm:$0xff]
    %v2981 = vld [vmem:[%s2705 + $0x898] sm:$0xff]
    %v2982 = vld [vmem:[%s2705 + $0x8a0] sm:$0xff]
    %v2983 = vld [vmem:[%s2705 + $0x8a8] sm:$0xff]
    %v2984 = vld [vmem:[%s2705 + $0x8b0] sm:$0xff]
    %v2985 = vld [vmem:[%s2705 + $0x8b8] sm:$0xff]
    %v2986 = vld [vmem:[%s2705 + $0x8c0] sm:$0xff]
    %v2987 = vld [vmem:[%s2705 + $0x8c8] sm:$0xff]
    %v2988 = vld [vmem:[%s2705 + $0x8d0] sm:$0xff]
    %v2989 = vld [vmem:[%s2705 + $0x8d8] sm:$0xff]
    %v2990 = vld [vmem:[%s2705 + $0x8e0] sm:$0xff]
    %v2991 = vld [vmem:[%s2705 + $0x8e8] sm:$0xff]
    %v2992 = vld [vmem:[%s2705 + $0x8f0] sm:$0xff]
    %v2993 = vld [vmem:[%s2705 + $0x8f8] sm:$0xff]
    %v2994 = vld [vmem:[%s2705 + $0x900] sm:$0xff]
    %v2995 = vld [vmem:[%s2705 + $0x908] sm:$0xff]
    %v2996 = vld [vmem:[%s2705 + $0x910] sm:$0xff]
    %v2997 = vld [vmem:[%s2705 + $0x918] sm:$0xff]
    %v2998 = vld [vmem:[%s2705 + $0x920] sm:$0xff]
    %v2999 = vld [vmem:[%s2705 + $0x928] sm:$0xff]
    %v3000 = vld [vmem:[%s2705 + $0x930] sm:$0xff]
    %v3001 = vld [vmem:[%s2705 + $0x938] sm:$0xff]
    %v3002 = vld [vmem:[%s2705 + $0x940] sm:$0xff]
    %v3003 = vld [vmem:[%s2705 + $0x948] sm:$0xff]
    %v3004 = vld [vmem:[%s2705 + $0x950] sm:$0xff]
    %v3005 = vld [vmem:[%s2705 + $0x958] sm:$0xff]
    %v3006 = vld [vmem:[%s2705 + $0x960] sm:$0xff]
    %v3007 = vld [vmem:[%s2705 + $0x968] sm:$0xff]
    %v3008 = vld [vmem:[%s2705 + $0x970] sm:$0xff]
    %v3009 = vld [vmem:[%s2705 + $0x978] sm:$0xff]
    %v3010 = vld [vmem:[%s2705 + $0x980] sm:$0xff]
    %v3011 = vld [vmem:[%s2705 + $0x988] sm:$0xff]
    %v3012 = vld [vmem:[%s2705 + $0x990] sm:$0xff]
    %v3013 = vld [vmem:[%s2705 + $0x998] sm:$0xff]
    %v3014 = vld [vmem:[%s2705 + $0x9a0] sm:$0xff]
    %v3015 = vld [vmem:[%s2705 + $0x9a8] sm:$0xff]
    %v3016 = vld [vmem:[%s2705 + $0x9b0] sm:$0xff]
    %v3017 = vld [vmem:[%s2705 + $0x9b8] sm:$0xff]
    %v3018 = vld [vmem:[%s2705 + $0x9c0] sm:$0xff]
    %v3019 = vld [vmem:[%s2705 + $0x9c8] sm:$0xff]
    %v3020 = vld [vmem:[%s2705 + $0x9d0] sm:$0xff]
    %v3021 = vld [vmem:[%s2705 + $0x9d8] sm:$0xff]
    %v3022 = vld [vmem:[%s2705 + $0x9e0] sm:$0xff]
    %v3023 = vld [vmem:[%s2705 + $0x9e8] sm:$0xff]
    %v3024 = vld [vmem:[%s2705 + $0x9f0] sm:$0xff]
    %v3025 = vld [vmem:[%s2705 + $0x9f8] sm:$0xff]
    %v3026 = vld [vmem:[%s2705 + $0xa00] sm:$0xff]
    %v3027 = vld [vmem:[%s2705 + $0xa08] sm:$0xff]
    %v3028 = vld [vmem:[%s2705 + $0xa10] sm:$0xff]
    %v3029 = vld [vmem:[%s2705 + $0xa18] sm:$0xff]
    %v3030 = vld [vmem:[%s2705 + $0xa20] sm:$0xff]
    %v3031 = vld [vmem:[%s2705 + $0xa28] sm:$0xff]
    %v3032 = vld [vmem:[%s2705 + $0xa30] sm:$0xff]
    %v3033 = vld [vmem:[%s2705 + $0xa38] sm:$0xff]
    %v3034 = vld [vmem:[%s2705 + $0xa40] sm:$0xff]
    %v3035 = vld [vmem:[%s2705 + $0xa48] sm:$0xff]
    %v3036 = vld [vmem:[%s2705 + $0xa50] sm:$0xff]
    %v3037 = vld [vmem:[%s2705 + $0xa58] sm:$0xff]
    %v3038 = vld [vmem:[%s2705 + $0xa60] sm:$0xff]
    %v3039 = vld [vmem:[%s2705 + $0xa68] sm:$0xff]
    %v3040 = vld [vmem:[%s2705 + $0xa70] sm:$0xff]
    %v3041 = vld [vmem:[%s2705 + $0xa78] sm:$0xff]
    %v3042 = vld [vmem:[%s2705 + $0xa80] sm:$0xff]
    %v3043 = vld [vmem:[%s2705 + $0xa88] sm:$0xff]
    %v3044 = vld [vmem:[%s2705 + $0xa90] sm:$0xff]
    %v3045 = vld [vmem:[%s2705 + $0xa98] sm:$0xff]
    %v3046 = vld [vmem:[%s2705 + $0xaa0] sm:$0xff]
    %v3047 = vld [vmem:[%s2705 + $0xaa8] sm:$0xff]
    %v3048 = vld [vmem:[%s2705 + $0xab0] sm:$0xff]
    %v3049 = vld [vmem:[%s2705 + $0xab8] sm:$0xff]
    %v3050 = vld [vmem:[%s2705 + $0xac0] sm:$0xff]
    %v3051 = vld [vmem:[%s2705 + $0xac8] sm:$0xff]
    %v3052 = vld [vmem:[%s2705 + $0xad0] sm:$0xff]
    %v3053 = vld [vmem:[%s2705 + $0xad8] sm:$0xff]
    %v3054 = vld [vmem:[%s2705 + $0xae0] sm:$0xff]
    %v3055 = vld [vmem:[%s2705 + $0xae8] sm:$0xff]
    %v3056 = vld [vmem:[%s2705 + $0xaf0] sm:$0xff]
    %v3057 = vld [vmem:[%s2705 + $0xaf8] sm:$0xff]
    %v3058 = vld [vmem:[%s2705 + $0xb00] sm:$0xff]
    %v3059 = vld [vmem:[%s2705 + $0xb08] sm:$0xff]
    %v3060 = vld [vmem:[%s2705 + $0xb10] sm:$0xff]
    %v3061 = vld [vmem:[%s2705 + $0xb18] sm:$0xff]
    %v3062 = vld [vmem:[%s2705 + $0xb20] sm:$0xff]
    %v3063 = vld [vmem:[%s2705 + $0xb28] sm:$0xff]
    %v3064 = vld [vmem:[%s2705 + $0xb30] sm:$0xff]
    %v3065 = vld [vmem:[%s2705 + $0xb38] sm:$0xff]
    %v3066 = vld [vmem:[%s2705 + $0xb40] sm:$0xff]
    %v3067 = vld [vmem:[%s2705 + $0xb48] sm:$0xff]
    %v3068 = vld [vmem:[%s2705 + $0xb50] sm:$0xff]
    %v3069 = vld [vmem:[%s2705 + $0xb58] sm:$0xff]
    %v3070 = vld [vmem:[%s2705 + $0xb60] sm:$0xff]
    %v3071 = vld [vmem:[%s2705 + $0xb68] sm:$0xff]
    %v3072 = vld [vmem:[%s2705 + $0xb70] sm:$0xff]
    %v3073 = vld [vmem:[%s2705 + $0xb78] sm:$0xff]
    %v3074 = vld [vmem:[%s2705 + $0xb80] sm:$0xff]
    %v3075 = vld [vmem:[%s2705 + $0xb88] sm:$0xff]
    %v3076 = vld [vmem:[%s2705 + $0xb90] sm:$0xff]
    %v3077 = vld [vmem:[%s2705 + $0xb98] sm:$0xff]
    %v3078 = vld [vmem:[%s2705 + $0xba0] sm:$0xff]
    %v3079 = vld [vmem:[%s2705 + $0xba8] sm:$0xff]
    %v3080 = vld [vmem:[%s2705 + $0xbb0] sm:$0xff]
    %v3081 = vld [vmem:[%s2705 + $0xbb8] sm:$0xff]
    %v3082 = vld [vmem:[%s2705 + $0xbc0] sm:$0xff]
    %v3083 = vld [vmem:[%s2705 + $0xbc8] sm:$0xff]
    %v3084 = vld [vmem:[%s2705 + $0xbd0] sm:$0xff]
    %v3085 = vld [vmem:[%s2705 + $0xbd8] sm:$0xff]
    %v3086 = vld [vmem:[%s2705 + $0xbe0] sm:$0xff]
    %v3087 = vld [vmem:[%s2705 + $0xbe8] sm:$0xff]
    %v3088 = vld [vmem:[%s2705 + $0xbf0] sm:$0xff]
    %v3089 = vld [vmem:[%s2705 + $0xbf8] sm:$0xff]
    %v3090 = vld [vmem:[%s2705 + $0xc00] sm:$0xff]
    %v3091 = vld [vmem:[%s2705 + $0xc08] sm:$0xff]
    %v3092 = vld [vmem:[%s2705 + $0xc10] sm:$0xff]
    %v3093 = vld [vmem:[%s2705 + $0xc18] sm:$0xff]
    %v3094 = vld [vmem:[%s2705 + $0xc20] sm:$0xff]
    %v3095 = vld [vmem:[%s2705 + $0xc28] sm:$0xff]
    %v3096 = vld [vmem:[%s2705 + $0xc30] sm:$0xff]
    %v3097 = vld [vmem:[%s2705 + $0xc38] sm:$0xff]
    %v3098 = vld [vmem:[%s2705 + $0xc40] sm:$0xff]
    %v3099 = vld [vmem:[%s2705 + $0xc48] sm:$0xff]
    %v3100 = vld [vmem:[%s2705 + $0xc50] sm:$0xff]
    %v3101 = vld [vmem:[%s2705 + $0xc58] sm:$0xff]
    %v3102 = vld [vmem:[%s2705 + $0xc60] sm:$0xff]
    %v3103 = vld [vmem:[%s2705 + $0xc68] sm:$0xff]
    %v3104 = vld [vmem:[%s2705 + $0xc70] sm:$0xff]
    %v3105 = vld [vmem:[%s2705 + $0xc78] sm:$0xff]
    %v3106 = vld [vmem:[%s2705 + $0xc80] sm:$0xff]
    %v3107 = vld [vmem:[%s2705 + $0xc88] sm:$0xff]
    %v3108 = vld [vmem:[%s2705 + $0xc90] sm:$0xff]
    %v3109 = vld [vmem:[%s2705 + $0xc98] sm:$0xff]
    %v3110 = vld [vmem:[%s2705 + $0xca0] sm:$0xff]
    %v3111 = vld [vmem:[%s2705 + $0xca8] sm:$0xff]
    %v3112 = vld [vmem:[%s2705 + $0xcb0] sm:$0xff]
    %v3113 = vld [vmem:[%s2705 + $0xcb8] sm:$0xff]
    %v3114 = vld [vmem:[%s2705 + $0xcc0] sm:$0xff]
    %v3115 = vld [vmem:[%s2705 + $0xcc8] sm:$0xff]
    %v3116 = vld [vmem:[%s2705 + $0xcd0] sm:$0xff]
    %v3117 = vld [vmem:[%s2705 + $0xcd8] sm:$0xff]
    %v3118 = vld [vmem:[%s2705 + $0xce0] sm:$0xff]
    %v3119 = vld [vmem:[%s2705 + $0xce8] sm:$0xff]
    %v3120 = vld [vmem:[%s2705 + $0xcf0] sm:$0xff]
    %v3121 = vld [vmem:[%s2705 + $0xcf8] sm:$0xff]
    %v3122 = vld [vmem:[%s2705 + $0xd00] sm:$0xff]
    %v3123 = vld [vmem:[%s2705 + $0xd08] sm:$0xff]
    %v3124 = vld [vmem:[%s2705 + $0xd10] sm:$0xff]
    %v3125 = vld [vmem:[%s2705 + $0xd18] sm:$0xff]
    %v3126 = vld [vmem:[%s2705 + $0xd20] sm:$0xff]
    %v3127 = vld [vmem:[%s2705 + $0xd28] sm:$0xff]
    %v3128 = vld [vmem:[%s2705 + $0xd30] sm:$0xff]
    %v3129 = vld [vmem:[%s2705 + $0xd38] sm:$0xff]
    %v3130 = vld [vmem:[%s2705 + $0xd40] sm:$0xff]
    %v3131 = vld [vmem:[%s2705 + $0xd48] sm:$0xff]
    %v3132 = vld [vmem:[%s2705 + $0xd50] sm:$0xff]
    %v3133 = vld [vmem:[%s2705 + $0xd58] sm:$0xff]
    %v3134 = vld [vmem:[%s2705 + $0xd60] sm:$0xff]
    %v3135 = vld [vmem:[%s2705 + $0xd68] sm:$0xff]
    %v3136 = vld [vmem:[%s2705 + $0xd70] sm:$0xff]
    %v3137 = vld [vmem:[%s2705 + $0xd78] sm:$0xff]
    %v3138 = vld [vmem:[%s2705 + $0xd80] sm:$0xff]
    %v3139 = vld [vmem:[%s2705 + $0xd88] sm:$0xff]
    %v3140 = vld [vmem:[%s2705 + $0xd90] sm:$0xff]
    %v3141 = vld [vmem:[%s2705 + $0xd98] sm:$0xff]
    %v3142 = vld [vmem:[%s2705 + $0xda0] sm:$0xff]
    %v3143 = vld [vmem:[%s2705 + $0xda8] sm:$0xff]
    %v3144 = vld [vmem:[%s2705 + $0xdb0] sm:$0xff]
    %v3145 = vld [vmem:[%s2705 + $0xdb8] sm:$0xff]
    %v3146 = vld [vmem:[%s2705 + $0xdc0] sm:$0xff]
    %v3147 = vld [vmem:[%s2705 + $0xdc8] sm:$0xff]
    %v3148 = vld [vmem:[%s2705 + $0xdd0] sm:$0xff]
    %v3149 = vld [vmem:[%s2705 + $0xdd8] sm:$0xff]
    %v3150 = vld [vmem:[%s2705 + $0xde0] sm:$0xff]
    %v3151 = vld [vmem:[%s2705 + $0xde8] sm:$0xff]
    %v3152 = vld [vmem:[%s2705 + $0xdf0] sm:$0xff]
    %v3153 = vld [vmem:[%s2705 + $0xdf8] sm:$0xff]
    %v3154 = vld [vmem:[%s2705 + $0xe00] sm:$0xff]
    %v3155 = vld [vmem:[%s2705 + $0xe08] sm:$0xff]
    %v3156 = vld [vmem:[%s2705 + $0xe10] sm:$0xff]
    %v3157 = vld [vmem:[%s2705 + $0xe18] sm:$0xff]
    %v3158 = vld [vmem:[%s2705 + $0xe20] sm:$0xff]
    %v3159 = vld [vmem:[%s2705 + $0xe28] sm:$0xff]
    %v3160 = vld [vmem:[%s2705 + $0xe30] sm:$0xff]
    %v3161 = vld [vmem:[%s2705 + $0xe38] sm:$0xff]
    %v3162 = vld [vmem:[%s2705 + $0xe40] sm:$0xff]
    %v3163 = vld [vmem:[%s2705 + $0xe48] sm:$0xff]
    %v3164 = vld [vmem:[%s2705 + $0xe50] sm:$0xff]
    %v3165 = vld [vmem:[%s2705 + $0xe58] sm:$0xff]
    %v3166 = vld [vmem:[%s2705 + $0xe60] sm:$0xff]
    %v3167 = vld [vmem:[%s2705 + $0xe68] sm:$0xff]
    %v3168 = vld [vmem:[%s2705 + $0xe70] sm:$0xff]
    %v3169 = vld [vmem:[%s2705 + $0xe78] sm:$0xff]
    %v3170 = vld [vmem:[%s2705 + $0xe80] sm:$0xff]
    %v3171 = vld [vmem:[%s2705 + $0xe88] sm:$0xff]
    %v3172 = vld [vmem:[%s2705 + $0xe90] sm:$0xff]
    %v3173 = vld [vmem:[%s2705 + $0xe98] sm:$0xff]
    %v3174 = vld [vmem:[%s2705 + $0xea0] sm:$0xff]
    %v3175 = vld [vmem:[%s2705 + $0xea8] sm:$0xff]
    %v3176 = vld [vmem:[%s2705 + $0xeb0] sm:$0xff]
    %v3177 = vld [vmem:[%s2705 + $0xeb8] sm:$0xff]
    %v3178 = vld [vmem:[%s2705 + $0xec0] sm:$0xff]
    %v3179 = vld [vmem:[%s2705 + $0xec8] sm:$0xff]
    %v3180 = vld [vmem:[%s2705 + $0xed0] sm:$0xff]
    %v3181 = vld [vmem:[%s2705 + $0xed8] sm:$0xff]
    %v3182 = vld [vmem:[%s2705 + $0xee0] sm:$0xff]
    %v3183 = vld [vmem:[%s2705 + $0xee8] sm:$0xff]
    %v3184 = vld [vmem:[%s2705 + $0xef0] sm:$0xff]
    %v3185 = vld [vmem:[%s2705 + $0xef8] sm:$0xff]
    %v3186 = vld [vmem:[%s2705 + $0xf00] sm:$0xff]
    %v3187 = vld [vmem:[%s2705 + $0xf08] sm:$0xff]
    %v3188 = vld [vmem:[%s2705 + $0xf10] sm:$0xff]
    %v3189 = vld [vmem:[%s2705 + $0xf18] sm:$0xff]
    %v3190 = vld [vmem:[%s2705 + $0xf20] sm:$0xff]
    %v3191 = vld [vmem:[%s2705 + $0xf28] sm:$0xff]
    %v3192 = vld [vmem:[%s2705 + $0xf30] sm:$0xff]
    %v3193 = vld [vmem:[%s2705 + $0xf38] sm:$0xff]
    %v3194 = vld [vmem:[%s2705 + $0xf40] sm:$0xff]
    %v3195 = vld [vmem:[%s2705 + $0xf48] sm:$0xff]
    %v3196 = vld [vmem:[%s2705 + $0xf50] sm:$0xff]
    %v3197 = vld [vmem:[%s2705 + $0xf58] sm:$0xff]
    %v3198 = vld [vmem:[%s2705 + $0xf60] sm:$0xff]
    %v3199 = vld [vmem:[%s2705 + $0xf68] sm:$0xff]
    %v3200 = vld [vmem:[%s2705 + $0xf70] sm:$0xff]
    %v3201 = vld [vmem:[%s2705 + $0xf78] sm:$0xff]
    %v3202 = vld [vmem:[%s2705 + $0xf80] sm:$0xff]
    %v3203 = vld [vmem:[%s2705 + $0xf88] sm:$0xff]
    %v3204 = vld [vmem:[%s2705 + $0xf90] sm:$0xff]
    %v3205 = vld [vmem:[%s2705 + $0xf98] sm:$0xff]
    %v3206 = vld [vmem:[%s2705 + $0xfa0] sm:$0xff]
    %v3207 = vld [vmem:[%s2705 + $0xfa8] sm:$0xff]
    %v3208 = vld [vmem:[%s2705 + $0xfb0] sm:$0xff]
    %v3209 = vld [vmem:[%s2705 + $0xfb8] sm:$0xff]
    %v3210 = vld [vmem:[%s2705 + $0xfc0] sm:$0xff]
    %v3211 = vld [vmem:[%s2705 + $0xfc8] sm:$0xff]
    %v3212 = vld [vmem:[%s2705 + $0xfd0] sm:$0xff]
    %v3213 = vld [vmem:[%s2705 + $0xfd8] sm:$0xff]
    %v3214 = vld [vmem:[%s2705 + $0xfe0] sm:$0xff]
    %v3215 = vld [vmem:[%s2705 + $0xfe8] sm:$0xff]
    %v3216 = vld [vmem:[%s2705 + $0xff0] sm:$0xff]
    %v3217 = vld [vmem:[%s2705 + $0xff8] sm:$0xff]
    %v3218 = vld [vmem:[%s2705 + $0x1000] sm:$0xff]
    %v3219 = vld [vmem:[%s2705 + $0x1008] sm:$0xff]
    %v3220 = vld [vmem:[%s2705 + $0x1010] sm:$0xff]
    %v3221 = vld [vmem:[%s2705 + $0x1018] sm:$0xff]
    %v3222 = vld [vmem:[%s2705 + $0x1020] sm:$0xff]
    %v3223 = vld [vmem:[%s2705 + $0x1028] sm:$0xff]
    %v3224 = vld [vmem:[%s2705 + $0x1030] sm:$0xff]
    %v3225 = vld [vmem:[%s2705 + $0x1038] sm:$0xff]
    %v3226 = vld [vmem:[%s2705 + $0x1040] sm:$0xff]
    %v3227 = vld [vmem:[%s2705 + $0x1048] sm:$0xff]
    %v3228 = vld [vmem:[%s2705 + $0x1050] sm:$0xff]
    %v3229 = vld [vmem:[%s2705 + $0x1058] sm:$0xff]
    %v3230 = vld [vmem:[%s2705 + $0x1060] sm:$0xff]
    %v3231 = vld [vmem:[%s2705 + $0x1068] sm:$0xff]
    %v3232 = vld [vmem:[%s2705 + $0x1070] sm:$0xff]
    %v3233 = vld [vmem:[%s2705 + $0x1078] sm:$0xff]
    %v3234 = vld [vmem:[%s2705 + $0x1080] sm:$0xff]
    %v3235 = vld [vmem:[%s2705 + $0x1088] sm:$0xff]
    %v3236 = vld [vmem:[%s2705 + $0x1090] sm:$0xff]
    %v3237 = vld [vmem:[%s2705 + $0x1098] sm:$0xff]
    %v3238 = vld [vmem:[%s2705 + $0x10a0] sm:$0xff]
    %v3239 = vld [vmem:[%s2705 + $0x10a8] sm:$0xff]
    %v3240 = vld [vmem:[%s2705 + $0x10b0] sm:$0xff]
    %v3241 = vld [vmem:[%s2705 + $0x10b8] sm:$0xff]
    %v3242 = vld [vmem:[%s2705 + $0x10c0] sm:$0xff]
    %v3243 = vld [vmem:[%s2705 + $0x10c8] sm:$0xff]
    %v3244 = vld [vmem:[%s2705 + $0x10d0] sm:$0xff]
    %v3245 = vld [vmem:[%s2705 + $0x10d8] sm:$0xff]
    %v3246 = vld [vmem:[%s2705 + $0x10e0] sm:$0xff]
    %v3247 = vld [vmem:[%s2705 + $0x10e8] sm:$0xff]
    %v3248 = vld [vmem:[%s2705 + $0x10f0] sm:$0xff]
    %v3249 = vld [vmem:[%s2705 + $0x10f8] sm:$0xff]
    %v3250 = vld [vmem:[%s2705 + $0x1100] sm:$0xff]
    %v3251 = vld [vmem:[%s2705 + $0x1108] sm:$0xff]
    %v3252 = vld [vmem:[%s2705 + $0x1110] sm:$0xff]
    %v3253 = vld [vmem:[%s2705 + $0x1118] sm:$0xff]
    %v3254 = vld [vmem:[%s2705 + $0x1120] sm:$0xff]
    %v3255 = vld [vmem:[%s2705 + $0x1128] sm:$0xff]
    %v3256 = vld [vmem:[%s2705 + $0x1130] sm:$0xff]
    %v3257 = vld [vmem:[%s2705 + $0x1138] sm:$0xff]
    %v3258 = vld [vmem:[%s2705 + $0x1140] sm:$0xff]
    %v3259 = vld [vmem:[%s2705 + $0x1148] sm:$0xff]
    %v3260 = vld [vmem:[%s2705 + $0x1150] sm:$0xff]
    %v3261 = vld [vmem:[%s2705 + $0x1158] sm:$0xff]
    %v3262 = vld [vmem:[%s2705 + $0x1160] sm:$0xff]
    %v3263 = vld [vmem:[%s2705 + $0x1168] sm:$0xff]
    %v3264 = vld [vmem:[%s2705 + $0x1170] sm:$0xff]
    %v3265 = vld [vmem:[%s2705 + $0x1178] sm:$0xff]
    %v3266 = vld [vmem:[%s2705 + $0x1180] sm:$0xff]
    %v3267 = vld [vmem:[%s2705 + $0x1188] sm:$0xff]
    %v3268 = vld [vmem:[%s2705 + $0x1190] sm:$0xff]
    %v3269 = vld [vmem:[%s2705 + $0x1198] sm:$0xff]
    %v3270 = vld [vmem:[%s2705 + $0x11a0] sm:$0xff]
    %v3271 = vld [vmem:[%s2705 + $0x11a8] sm:$0xff]
    %v3272 = vld [vmem:[%s2705 + $0x11b0] sm:$0xff]
    %v3273 = vld [vmem:[%s2705 + $0x11b8] sm:$0xff]
    %v3274 = vld [vmem:[%s2705 + $0x11c0] sm:$0xff]
    %v3275 = vld [vmem:[%s2705 + $0x11c8] sm:$0xff]
    %v3276 = vld [vmem:[%s2705 + $0x11d0] sm:$0xff]
    %v3277 = vld [vmem:[%s2705 + $0x11d8] sm:$0xff]
    %v3278 = vld [vmem:[%s2705 + $0x11e0] sm:$0xff]
    %v3279 = vld [vmem:[%s2705 + $0x11e8] sm:$0xff]
    %v3280 = vld [vmem:[%s2705 + $0x11f0] sm:$0xff]
    %v3281 = vld [vmem:[%s2705 + $0x11f8] sm:$0xff]
    %v3282 = vld [vmem:[%s2705 + $0x1200] sm:$0xff]
    %v3283 = vld [vmem:[%s2705 + $0x1208] sm:$0xff]
    %v3284 = vld [vmem:[%s2705 + $0x1210] sm:$0xff]
    %v3285 = vld [vmem:[%s2705 + $0x1218] sm:$0xff]
    %v3286 = vld [vmem:[%s2705 + $0x1220] sm:$0xff]
    %v3287 = vld [vmem:[%s2705 + $0x1228] sm:$0xff]
    %v3288 = vld [vmem:[%s2705 + $0x1230] sm:$0xff]
    %v3289 = vld [vmem:[%s2705 + $0x1238] sm:$0xff]
    %v3290 = vld [vmem:[%s2705 + $0x1240] sm:$0xff]
    %v3291 = vld [vmem:[%s2705 + $0x1248] sm:$0xff]
    %v3292 = vld [vmem:[%s2705 + $0x1250] sm:$0xff]
    %v3293 = vld [vmem:[%s2705 + $0x1258] sm:$0xff]
    %v3294 = vld [vmem:[%s2705 + $0x1260] sm:$0xff]
    %v3295 = vld [vmem:[%s2705 + $0x1268] sm:$0xff]
    %v3296 = vld [vmem:[%s2705 + $0x1270] sm:$0xff]
    %v3297 = vld [vmem:[%s2705 + $0x1278] sm:$0xff]
    %v3298 = vld [vmem:[%s2705 + $0x1280] sm:$0xff]
    %v3299 = vld [vmem:[%s2705 + $0x1288] sm:$0xff]
    %v3300 = vld [vmem:[%s2705 + $0x1290] sm:$0xff]
    %v3301 = vld [vmem:[%s2705 + $0x1298] sm:$0xff]
    %v3302 = vld [vmem:[%s2705 + $0x12a0] sm:$0xff]
    %v3303 = vld [vmem:[%s2705 + $0x12a8] sm:$0xff]
    %v3304 = vld [vmem:[%s2705 + $0x12b0] sm:$0xff]
    %v3305 = vld [vmem:[%s2705 + $0x12b8] sm:$0xff]
    %v3306 = vld [vmem:[%s2705 + $0x12c0] sm:$0xff]
    %v3307 = vld [vmem:[%s2705 + $0x12c8] sm:$0xff]
    %v3308 = vld [vmem:[%s2705 + $0x12d0] sm:$0xff]
    %v3309 = vld [vmem:[%s2705 + $0x12d8] sm:$0xff]
    %v3310 = vld [vmem:[%s2705 + $0x12e0] sm:$0xff]
    %v3311 = vld [vmem:[%s2705 + $0x12e8] sm:$0xff]
    %v3312 = vld [vmem:[%s2705 + $0x12f0] sm:$0xff]
    %v3313 = vld [vmem:[%s2705 + $0x12f8] sm:$0xff]
    %v3314 = vld [vmem:[%s2705 + $0x1300] sm:$0xff]
    %v3315 = vld [vmem:[%s2705 + $0x1308] sm:$0xff]
    %v3316 = vld [vmem:[%s2705 + $0x1310] sm:$0xff]
    %v3317 = vld [vmem:[%s2705 + $0x1318] sm:$0xff]
    %v3318 = vld [vmem:[%s2705 + $0x1320] sm:$0xff]
    %v3319 = vld [vmem:[%s2705 + $0x1328] sm:$0xff]
    %v3320 = vld [vmem:[%s2705 + $0x1330] sm:$0xff]
    %v3321 = vld [vmem:[%s2705 + $0x1338] sm:$0xff]
    %v3322 = vld [vmem:[%s2705 + $0x1340] sm:$0xff]
    %v3323 = vld [vmem:[%s2705 + $0x1348] sm:$0xff]
    %v3324 = vld [vmem:[%s2705 + $0x1350] sm:$0xff]
    %v3325 = vld [vmem:[%s2705 + $0x1358] sm:$0xff]
    %v3326 = vld [vmem:[%s2705 + $0x1360] sm:$0xff]
    %v3327 = vld [vmem:[%s2705 + $0x1368] sm:$0xff]
    %v3328 = vld [vmem:[%s2705 + $0x1370] sm:$0xff]
    %v3329 = vld [vmem:[%s2705 + $0x1378] sm:$0xff]
    %v3330 = vld [vmem:[%s2705 + $0x1380] sm:$0xff]
    %v3331 = vld [vmem:[%s2705 + $0x1388] sm:$0xff]
    %v3332 = vld [vmem:[%s2705 + $0x1390] sm:$0xff]
    %v3333 = vld [vmem:[%s2705 + $0x1398] sm:$0xff]
    %v3334 = vld [vmem:[%s2705 + $0x13a0] sm:$0xff]
    %v3335 = vld [vmem:[%s2705 + $0x13a8] sm:$0xff]
    %v3336 = vld [vmem:[%s2705 + $0x13b0] sm:$0xff]
    %v3337 = vld [vmem:[%s2705 + $0x13b8] sm:$0xff]
    %v3338 = vld [vmem:[%s2705 + $0x13c0] sm:$0xff]
    %v3339 = vld [vmem:[%s2705 + $0x13c8] sm:$0xff]
    %v3340 = vld [vmem:[%s2705 + $0x13d0] sm:$0xff]
    %v3341 = vld [vmem:[%s2705 + $0x13d8] sm:$0xff]
    %v3342 = vld [vmem:[%s2705 + $0x13e0] sm:$0xff]
    %v3343 = vld [vmem:[%s2705 + $0x13e8] sm:$0xff]
    %v3344 = vld [vmem:[%s2705 + $0x13f0] sm:$0xff]
    %v3345 = vld [vmem:[%s2705 + $0x13f8] sm:$0xff]
    %v3346 = vld [vmem:[%s2705 + $0x1400] sm:$0xff]
    %v3347 = vld [vmem:[%s2705 + $0x1408] sm:$0xff]
    %v3348 = vld [vmem:[%s2705 + $0x1410] sm:$0xff]
    %v3349 = vld [vmem:[%s2705 + $0x1418] sm:$0xff]
    %v3350 = vld [vmem:[%s2705 + $0x1420] sm:$0xff]
    %v3351 = vld [vmem:[%s2705 + $0x1428] sm:$0xff]
    %v3352 = vld [vmem:[%s2705 + $0x1430] sm:$0xff]
    %v3353 = vld [vmem:[%s2705 + $0x1438] sm:$0xff]
    %v3354 = vld [vmem:[%s2705 + $0x1440] sm:$0xff]
    %v3355 = vld [vmem:[%s2705 + $0x1448] sm:$0xff]
    %v3356 = vld [vmem:[%s2705 + $0x1450] sm:$0xff]
    %v3357 = vld [vmem:[%s2705 + $0x1458] sm:$0xff]
    %v3358 = vld [vmem:[%s2705 + $0x1460] sm:$0xff]
    %v3359 = vld [vmem:[%s2705 + $0x1468] sm:$0xff]
    %v3360 = vld [vmem:[%s2705 + $0x1470] sm:$0xff]
    %v3361 = vld [vmem:[%s2705 + $0x1478] sm:$0xff]
    %v3362 = vld [vmem:[%s2705 + $0x1480] sm:$0xff]
    %v3363 = vld [vmem:[%s2705 + $0x1488] sm:$0xff]
    %v3364 = vld [vmem:[%s2705 + $0x1490] sm:$0xff]
    %v3365 = vld [vmem:[%s2705 + $0x1498] sm:$0xff]
    %v3366 = vld [vmem:[%s2705 + $0x14a0] sm:$0xff]
    %v3367 = vld [vmem:[%s2705 + $0x14a8] sm:$0xff]
    %v3368 = vld [vmem:[%s2705 + $0x14b0] sm:$0xff]
    %v3369 = vld [vmem:[%s2705 + $0x14b8] sm:$0xff]
    %v3370 = vld [vmem:[%s2705 + $0x14c0] sm:$0xff]
    %v3371 = vld [vmem:[%s2705 + $0x14c8] sm:$0xff]
    %v3372 = vld [vmem:[%s2705 + $0x14d0] sm:$0xff]
    %v3373 = vld [vmem:[%s2705 + $0x14d8] sm:$0xff]
    %v3374 = vld [vmem:[%s2705 + $0x14e0] sm:$0xff]
    %v3375 = vld [vmem:[%s2705 + $0x14e8] sm:$0xff]
    %v3376 = vld [vmem:[%s2705 + $0x14f0] sm:$0xff]
    %v3377 = vld [vmem:[%s2705 + $0x14f8] sm:$0xff]
    %v3378 = vld [vmem:[%s2705 + $0x1500] sm:$0xff]
    %v3379 = vld [vmem:[%s2705 + $0x1508] sm:$0xff]
    %v3380 = vld [vmem:[%s2705 + $0x1510] sm:$0xff]
    %v3381 = vld [vmem:[%s2705 + $0x1518] sm:$0xff]
    %v3382 = vld [vmem:[%s2705 + $0x1520] sm:$0xff]
    %v3383 = vld [vmem:[%s2705 + $0x1528] sm:$0xff]
    %v3384 = vld [vmem:[%s2705 + $0x1530] sm:$0xff]
    %v3385 = vld [vmem:[%s2705 + $0x1538] sm:$0xff]
    %v3386 = vld [vmem:[%s2705 + $0x1540] sm:$0xff]
    %v3387 = vld [vmem:[%s2705 + $0x1548] sm:$0xff]
    %v3388 = vld [vmem:[%s2705 + $0x1550] sm:$0xff]
    %v3389 = vld [vmem:[%s2705 + $0x1558] sm:$0xff]
    %v3390 = vld [vmem:[%s2705 + $0x1560] sm:$0xff]
    %v3391 = vld [vmem:[%s2705 + $0x1568] sm:$0xff]
    %v3392 = vld [vmem:[%s2705 + $0x1570] sm:$0xff]
    %v3393 = vld [vmem:[%s2705 + $0x1578] sm:$0xff]
    %v3394 = vld [vmem:[%s2705 + $0x1580] sm:$0xff]
    %v3395 = vld [vmem:[%s2705 + $0x1588] sm:$0xff]
    %v3396 = vld [vmem:[%s2705 + $0x1590] sm:$0xff]
    %v3397 = vld [vmem:[%s2705 + $0x1598] sm:$0xff]
    %v3398 = vld [vmem:[%s2705 + $0x15a0] sm:$0xff]
    %v3399 = vld [vmem:[%s2705 + $0x15a8] sm:$0xff]
    %v3400 = vld [vmem:[%s2705 + $0x15b0] sm:$0xff]
    %v3401 = vld [vmem:[%s2705 + $0x15b8] sm:$0xff]
    %v3402 = vld [vmem:[%s2705 + $0x15c0] sm:$0xff]
    %v3403 = vld [vmem:[%s2705 + $0x15c8] sm:$0xff]
    %v3404 = vld [vmem:[%s2705 + $0x15d0] sm:$0xff]
    %v3405 = vld [vmem:[%s2705 + $0x15d8] sm:$0xff]
    %v3406 = vld [vmem:[%s2705 + $0x15e0] sm:$0xff]
    %v3407 = vld [vmem:[%s2705 + $0x15e8] sm:$0xff]
    %v3408 = vld [vmem:[%s2705 + $0x15f0] sm:$0xff]
    %v3409 = vld [vmem:[%s2705 + $0x15f8] sm:$0xff]
    %v3410 = vld [vmem:[%s2705 + $0x1600] sm:$0xff]
    %v3411 = vld [vmem:[%s2705 + $0x1608] sm:$0xff]
    %v3412 = vld [vmem:[%s2705 + $0x1610] sm:$0xff]
    %v3413 = vld [vmem:[%s2705 + $0x1618] sm:$0xff]
    %v3414 = vld [vmem:[%s2705 + $0x1620] sm:$0xff]
    %v3415 = vld [vmem:[%s2705 + $0x1628] sm:$0xff]
    %v3416 = vld [vmem:[%s2705 + $0x1630] sm:$0xff]
    %v3417 = vld [vmem:[%s2705 + $0x1638] sm:$0xff]
    %v3418 = vld [vmem:[%s2705 + $0x1640] sm:$0xff]
    %v3419 = vld [vmem:[%s2705 + $0x1648] sm:$0xff]
    %v3420 = vld [vmem:[%s2705 + $0x1650] sm:$0xff]
    %v3421 = vld [vmem:[%s2705 + $0x1658] sm:$0xff]
    %v3422 = vld [vmem:[%s2705 + $0x1660] sm:$0xff]
    %v3423 = vld [vmem:[%s2705 + $0x1668] sm:$0xff]
    %v3424 = vld [vmem:[%s2705 + $0x1670] sm:$0xff]
    %v3425 = vld [vmem:[%s2705 + $0x1678] sm:$0xff]
    %v3426 = vld [vmem:[%s2705 + $0x1680] sm:$0xff]
    %v3427 = vld [vmem:[%s2705 + $0x1688] sm:$0xff]
    %v3428 = vld [vmem:[%s2705 + $0x1690] sm:$0xff]
    %v3429 = vld [vmem:[%s2705 + $0x1698] sm:$0xff]
    %v3430 = vld [vmem:[%s2705 + $0x16a0] sm:$0xff]
    %v3431 = vld [vmem:[%s2705 + $0x16a8] sm:$0xff]
    %v3432 = vld [vmem:[%s2705 + $0x16b0] sm:$0xff]
    %v3433 = vld [vmem:[%s2705 + $0x16b8] sm:$0xff]
    %v3434 = vld [vmem:[%s2705 + $0x16c0] sm:$0xff]
    %v3435 = vld [vmem:[%s2705 + $0x16c8] sm:$0xff]
    %v3436 = vld [vmem:[%s2705 + $0x16d0] sm:$0xff]
    %v3437 = vld [vmem:[%s2705 + $0x16d8] sm:$0xff]
    %v3438 = vld [vmem:[%s2705 + $0x16e0] sm:$0xff]
    %v3439 = vld [vmem:[%s2705 + $0x16e8] sm:$0xff]
    %v3440 = vld [vmem:[%s2705 + $0x16f0] sm:$0xff]
    %v3441 = vld [vmem:[%s2705 + $0x16f8] sm:$0xff]
    %v3442 = vld [vmem:[%s2705 + $0x1700] sm:$0xff]
    %v3443 = vld [vmem:[%s2705 + $0x1708] sm:$0xff]
    %v3444 = vld [vmem:[%s2705 + $0x1710] sm:$0xff]
    %v3445 = vld [vmem:[%s2705 + $0x1718] sm:$0xff]
    %v3446 = vld [vmem:[%s2705 + $0x1720] sm:$0xff]
    %v3447 = vld [vmem:[%s2705 + $0x1728] sm:$0xff]
    %v3448 = vld [vmem:[%s2705 + $0x1730] sm:$0xff]
    %v3449 = vld [vmem:[%s2705 + $0x1738] sm:$0xff]
    %v3450 = vld [vmem:[%s2705 + $0x1740] sm:$0xff]
    %v3451 = vld [vmem:[%s2705 + $0x1748] sm:$0xff]
    %v3452 = vld [vmem:[%s2705 + $0x1750] sm:$0xff]
    %v3453 = vld [vmem:[%s2705 + $0x1758] sm:$0xff]
    %v3454 = vld [vmem:[%s2705 + $0x1760] sm:$0xff]
    %v3455 = vld [vmem:[%s2705 + $0x1768] sm:$0xff]
    %v3456 = vld [vmem:[%s2705 + $0x1770] sm:$0xff]
    %v3457 = vld [vmem:[%s2705 + $0x1778] sm:$0xff]
    %v3458 = vld [vmem:[%s2705 + $0x1780] sm:$0xff]
    %v3459 = vld [vmem:[%s2705 + $0x1788] sm:$0xff]
    %v3460 = vld [vmem:[%s2705 + $0x1790] sm:$0xff]
    %v3461 = vld [vmem:[%s2705 + $0x1798] sm:$0xff]
    %v3462 = vld [vmem:[%s2705 + $0x17a0] sm:$0xff]
    %v3463 = vld [vmem:[%s2705 + $0x17a8] sm:$0xff]
    %v3464 = vld [vmem:[%s2705 + $0x17b0] sm:$0xff]
    %v3465 = vld [vmem:[%s2705 + $0x17b8] sm:$0xff]
    %v3466 = vld [vmem:[%s2705 + $0x17c0] sm:$0xff]
    %v3467 = vld [vmem:[%s2705 + $0x17c8] sm:$0xff]
    %v3468 = vld [vmem:[%s2705 + $0x17d0] sm:$0xff]
    %v3469 = vld [vmem:[%s2705 + $0x17d8] sm:$0xff]
    %v3470 = vld [vmem:[%s2705 + $0x17e0] sm:$0xff]
    %v3471 = vld [vmem:[%s2705 + $0x17e8] sm:$0xff]
    %v3472 = vld [vmem:[%s2705 + $0x17f0] sm:$0xff]
    %v3473 = vld [vmem:[%s2705 + $0x17f8] sm:$0xff]
    %v3474 = vld [vmem:[%s2705 + $0x1800] sm:$0xff]
    %v3475 = vld [vmem:[%s2705 + $0x1808] sm:$0xff]
    %v3476 = vld [vmem:[%s2705 + $0x1810] sm:$0xff]
    %v3477 = vld [vmem:[%s2705 + $0x1818] sm:$0xff]
    %v3478 = vld [vmem:[%s2705 + $0x1820] sm:$0xff]
    %v3479 = vld [vmem:[%s2705 + $0x1828] sm:$0xff]
    %v3480 = vld [vmem:[%s2705 + $0x1830] sm:$0xff]
    %v3481 = vld [vmem:[%s2705 + $0x1838] sm:$0xff]
    %v3482 = vld [vmem:[%s2705 + $0x1840] sm:$0xff]
    %v3483 = vld [vmem:[%s2705 + $0x1848] sm:$0xff]
    %v3484 = vld [vmem:[%s2705 + $0x1850] sm:$0xff]
    %v3485 = vld [vmem:[%s2705 + $0x1858] sm:$0xff]
    %v3486 = vld [vmem:[%s2705 + $0x1860] sm:$0xff]
    %v3487 = vld [vmem:[%s2705 + $0x1868] sm:$0xff]
    %v3488 = vld [vmem:[%s2705 + $0x1870] sm:$0xff]
    %v3489 = vld [vmem:[%s2705 + $0x1878] sm:$0xff]
    %v3490 = vld [vmem:[%s2705 + $0x1880] sm:$0xff]
    %v3491 = vld [vmem:[%s2705 + $0x1888] sm:$0xff]
    %v3492 = vld [vmem:[%s2705 + $0x1890] sm:$0xff]
    %v3493 = vld [vmem:[%s2705 + $0x1898] sm:$0xff]
    %v3494 = vld [vmem:[%s2705 + $0x18a0] sm:$0xff]
    %v3495 = vld [vmem:[%s2705 + $0x18a8] sm:$0xff]
    %v3496 = vld [vmem:[%s2705 + $0x18b0] sm:$0xff]
    %v3497 = vld [vmem:[%s2705 + $0x18b8] sm:$0xff]
    %v3498 = vld [vmem:[%s2705 + $0x18c0] sm:$0xff]
    %v3499 = vld [vmem:[%s2705 + $0x18c8] sm:$0xff]
    %v3500 = vld [vmem:[%s2705 + $0x18d0] sm:$0xff]
    %v3501 = vld [vmem:[%s2705 + $0x18d8] sm:$0xff]
    %v3502 = vld [vmem:[%s2705 + $0x18e0] sm:$0xff]
    %v3503 = vld [vmem:[%s2705 + $0x18e8] sm:$0xff]
    %v3504 = vld [vmem:[%s2705 + $0x18f0] sm:$0xff]
    %v3505 = vld [vmem:[%s2705 + $0x18f8] sm:$0xff]
    %v3506 = vld [vmem:[%s2705 + $0x1900] sm:$0xff]
    %v3507 = vld [vmem:[%s2705 + $0x1908] sm:$0xff]
    %v3508 = vld [vmem:[%s2705 + $0x1910] sm:$0xff]
    %v3509 = vld [vmem:[%s2705 + $0x1918] sm:$0xff]
    %v3510 = vld [vmem:[%s2705 + $0x1920] sm:$0xff]
    %v3511 = vld [vmem:[%s2705 + $0x1928] sm:$0xff]
    %v3512 = vld [vmem:[%s2705 + $0x1930] sm:$0xff]
    %v3513 = vld [vmem:[%s2705 + $0x1938] sm:$0xff]
    %v3514 = vld [vmem:[%s2705 + $0x1940] sm:$0xff]
    %v3515 = vld [vmem:[%s2705 + $0x1948] sm:$0xff]
    %v3516 = vld [vmem:[%s2705 + $0x1950] sm:$0xff]
    %v3517 = vld [vmem:[%s2705 + $0x1958] sm:$0xff]
    %v3518 = vld [vmem:[%s2705 + $0x1960] sm:$0xff]
    %v3519 = vld [vmem:[%s2705 + $0x1968] sm:$0xff]
    %v3520 = vld [vmem:[%s2705 + $0x1970] sm:$0xff]
    %v3521 = vld [vmem:[%s2705 + $0x1978] sm:$0xff]
    %v3522 = vld [vmem:[%s2705 + $0x1980] sm:$0xff]
    %v3523 = vld [vmem:[%s2705 + $0x1988] sm:$0xff]
    %v3524 = vld [vmem:[%s2705 + $0x1990] sm:$0xff]
    %v3525 = vld [vmem:[%s2705 + $0x1998] sm:$0xff]
    %v3526 = vld [vmem:[%s2705 + $0x19a0] sm:$0xff]
    %v3527 = vld [vmem:[%s2705 + $0x19a8] sm:$0xff]
    %v3528 = vld [vmem:[%s2705 + $0x19b0] sm:$0xff]
    %v3529 = vld [vmem:[%s2705 + $0x19b8] sm:$0xff]
    %v3530 = vld [vmem:[%s2705 + $0x19c0] sm:$0xff]
    %v3531 = vld [vmem:[%s2705 + $0x19c8] sm:$0xff]
    %v3532 = vld [vmem:[%s2705 + $0x19d0] sm:$0xff]
    %v3533 = vld [vmem:[%s2705 + $0x19d8] sm:$0xff]
    %v3534 = vld [vmem:[%s2705 + $0x19e0] sm:$0xff]
    %v3535 = vld [vmem:[%s2705 + $0x19e8] sm:$0xff]
    %v3536 = vld [vmem:[%s2705 + $0x19f0] sm:$0xff]
    %v3537 = vld [vmem:[%s2705 + $0x19f8] sm:$0xff]
    %v3538 = vld [vmem:[%s2705 + $0x1a00] sm:$0xff]
    %v3539 = vld [vmem:[%s2705 + $0x1a08] sm:$0xff]
    %v3540 = vld [vmem:[%s2705 + $0x1a10] sm:$0xff]
    %v3541 = vld [vmem:[%s2705 + $0x1a18] sm:$0xff]
    %v3542 = vld [vmem:[%s2705 + $0x1a20] sm:$0xff]
    %v3543 = vld [vmem:[%s2705 + $0x1a28] sm:$0xff]
    %v3544 = vld [vmem:[%s2705 + $0x1a30] sm:$0xff]
    %v3545 = vld [vmem:[%s2705 + $0x1a38] sm:$0xff]
    %v3546 = vld [vmem:[%s2705 + $0x1a40] sm:$0xff]
    %v3547 = vld [vmem:[%s2705 + $0x1a48] sm:$0xff]
    %v3548 = vld [vmem:[%s2705 + $0x1a50] sm:$0xff]
    %v3549 = vld [vmem:[%s2705 + $0x1a58] sm:$0xff]
    %v3550 = vld [vmem:[%s2705 + $0x1a60] sm:$0xff]
    %v3551 = vld [vmem:[%s2705 + $0x1a68] sm:$0xff]
    %v3552 = vld [vmem:[%s2705 + $0x1a70] sm:$0xff]
    %v3553 = vld [vmem:[%s2705 + $0x1a78] sm:$0xff]
    %v3554 = vld [vmem:[%s2705 + $0x1a80] sm:$0xff]
    %v3555 = vld [vmem:[%s2705 + $0x1a88] sm:$0xff]
    %v3556 = vld [vmem:[%s2705 + $0x1a90] sm:$0xff]
    %v3557 = vld [vmem:[%s2705 + $0x1a98] sm:$0xff]
    %v3558 = vld [vmem:[%s2705 + $0x1aa0] sm:$0xff]
    %v3559 = vld [vmem:[%s2705 + $0x1aa8] sm:$0xff]
    %v3560 = vld [vmem:[%s2705 + $0x1ab0] sm:$0xff]
    %v3561 = vld [vmem:[%s2705 + $0x1ab8] sm:$0xff]
    %v3562 = vld [vmem:[%s2705 + $0x1ac0] sm:$0xff]
    %v3563 = vld [vmem:[%s2705 + $0x1ac8] sm:$0xff]
    %v3564 = vld [vmem:[%s2705 + $0x1ad0] sm:$0xff]
    %v3565 = vld [vmem:[%s2705 + $0x1ad8] sm:$0xff]
    %v3566 = vld [vmem:[%s2705 + $0x1ae0] sm:$0xff]
    %v3567 = vld [vmem:[%s2705 + $0x1ae8] sm:$0xff]
    %v3568 = vld [vmem:[%s2705 + $0x1af0] sm:$0xff]
    %v3569 = vld [vmem:[%s2705 + $0x1af8] sm:$0xff]
    %v3570 = vld [vmem:[%s2705 + $0x1b00] sm:$0xff]
    %v3571 = vld [vmem:[%s2705 + $0x1b08] sm:$0xff]
    %v3572 = vld [vmem:[%s2705 + $0x1b10] sm:$0xff]
    %v3573 = vld [vmem:[%s2705 + $0x1b18] sm:$0xff]
    %v3574 = vld [vmem:[%s2705 + $0x1b20] sm:$0xff]
    %v3575 = vld [vmem:[%s2705 + $0x1b28] sm:$0xff]
    %v3576 = vld [vmem:[%s2705 + $0x1b30] sm:$0xff]
    %v3577 = vld [vmem:[%s2705 + $0x1b38] sm:$0xff]
    %v3578 = vld [vmem:[%s2705 + $0x1b40] sm:$0xff]
    %v3579 = vld [vmem:[%s2705 + $0x1b48] sm:$0xff]
    %v3580 = vld [vmem:[%s2705 + $0x1b50] sm:$0xff]
    %v3581 = vld [vmem:[%s2705 + $0x1b58] sm:$0xff]
    %v3582 = vld [vmem:[%s2705 + $0x1b60] sm:$0xff]
    %v3583 = vld [vmem:[%s2705 + $0x1b68] sm:$0xff]
    %v3584 = vld [vmem:[%s2705 + $0x1b70] sm:$0xff]
    %v3585 = vld [vmem:[%s2705 + $0x1b78] sm:$0xff]
    %v3586 = vld [vmem:[%s2705 + $0x1b80] sm:$0xff]
    %v3587 = vld [vmem:[%s2705 + $0x1b88] sm:$0xff]
    %v3588 = vld [vmem:[%s2705 + $0x1b90] sm:$0xff]
    %v3589 = vld [vmem:[%s2705 + $0x1b98] sm:$0xff]
    %v3590 = vld [vmem:[%s2705 + $0x1ba0] sm:$0xff]
    %v3591 = vld [vmem:[%s2705 + $0x1ba8] sm:$0xff]
    %v3592 = vld [vmem:[%s2705 + $0x1bb0] sm:$0xff]
    %v3593 = vld [vmem:[%s2705 + $0x1bb8] sm:$0xff]
    %v3594 = vld [vmem:[%s2705 + $0x1bc0] sm:$0xff]
    %v3595 = vld [vmem:[%s2705 + $0x1bc8] sm:$0xff]
    %v3596 = vld [vmem:[%s2705 + $0x1bd0] sm:$0xff]
    %v3597 = vld [vmem:[%s2705 + $0x1bd8] sm:$0xff]
    %v3598 = vld [vmem:[%s2705 + $0x1be0] sm:$0xff]
    %v3599 = vld [vmem:[%s2705 + $0x1be8] sm:$0xff]
    %v3600 = vld [vmem:[%s2705 + $0x1bf0] sm:$0xff]
    %v3601 = vld [vmem:[%s2705 + $0x1bf8] sm:$0xff]
    %v3602 = vld [vmem:[%s2705 + $0x1c00] sm:$0xff]
    %v3603 = vld [vmem:[%s2705 + $0x1c08] sm:$0xff]
    %v3604 = vld [vmem:[%s2705 + $0x1c10] sm:$0xff]
    %v3605 = vld [vmem:[%s2705 + $0x1c18] sm:$0xff]
    %v3606 = vld [vmem:[%s2705 + $0x1c20] sm:$0xff]
    %v3607 = vld [vmem:[%s2705 + $0x1c28] sm:$0xff]
    %v3608 = vld [vmem:[%s2705 + $0x1c30] sm:$0xff]
    %v3609 = vld [vmem:[%s2705 + $0x1c38] sm:$0xff]
    %v3610 = vld [vmem:[%s2705 + $0x1c40] sm:$0xff]
    %v3611 = vld [vmem:[%s2705 + $0x1c48] sm:$0xff]
    %v3612 = vld [vmem:[%s2705 + $0x1c50] sm:$0xff]
    %v3613 = vld [vmem:[%s2705 + $0x1c58] sm:$0xff]
    %v3614 = vld [vmem:[%s2705 + $0x1c60] sm:$0xff]
    %v3615 = vld [vmem:[%s2705 + $0x1c68] sm:$0xff]
    %v3616 = vld [vmem:[%s2705 + $0x1c70] sm:$0xff]
    %v3617 = vld [vmem:[%s2705 + $0x1c78] sm:$0xff]
    %v3618 = vld [vmem:[%s2705 + $0x1c80] sm:$0xff]
    %v3619 = vld [vmem:[%s2705 + $0x1c88] sm:$0xff]
    %v3620 = vld [vmem:[%s2705 + $0x1c90] sm:$0xff]
    %v3621 = vld [vmem:[%s2705 + $0x1c98] sm:$0xff]
    %v3622 = vld [vmem:[%s2705 + $0x1ca0] sm:$0xff]
    %v3623 = vld [vmem:[%s2705 + $0x1ca8] sm:$0xff]
    %v3624 = vld [vmem:[%s2705 + $0x1cb0] sm:$0xff]
    %v3625 = vld [vmem:[%s2705 + $0x1cb8] sm:$0xff]
    %v3626 = vld [vmem:[%s2705 + $0x1cc0] sm:$0xff]
    %v3627 = vld [vmem:[%s2705 + $0x1cc8] sm:$0xff]
    %v3628 = vld [vmem:[%s2705 + $0x1cd0] sm:$0xff]
    %v3629 = vld [vmem:[%s2705 + $0x1cd8] sm:$0xff]
    %v3630 = vld [vmem:[%s2705 + $0x1ce0] sm:$0xff]
    %v3631 = vld [vmem:[%s2705 + $0x1ce8] sm:$0xff]
    %v3632 = vld [vmem:[%s2705 + $0x1cf0] sm:$0xff]
    %v3633 = vld [vmem:[%s2705 + $0x1cf8] sm:$0xff]
    %v3634 = vld [vmem:[%s2705 + $0x1d00] sm:$0xff]
    %v3635 = vld [vmem:[%s2705 + $0x1d08] sm:$0xff]
    %v3636 = vld [vmem:[%s2705 + $0x1d10] sm:$0xff]
    %v3637 = vld [vmem:[%s2705 + $0x1d18] sm:$0xff]
    %v3638 = vld [vmem:[%s2705 + $0x1d20] sm:$0xff]
    %v3639 = vld [vmem:[%s2705 + $0x1d28] sm:$0xff]
    %v3640 = vld [vmem:[%s2705 + $0x1d30] sm:$0xff]
    %v3641 = vld [vmem:[%s2705 + $0x1d38] sm:$0xff]
    %v3642 = vld [vmem:[%s2705 + $0x1d40] sm:$0xff]
    %v3643 = vld [vmem:[%s2705 + $0x1d48] sm:$0xff]
    %v3644 = vld [vmem:[%s2705 + $0x1d50] sm:$0xff]
    %v3645 = vld [vmem:[%s2705 + $0x1d58] sm:$0xff]
    %v3646 = vld [vmem:[%s2705 + $0x1d60] sm:$0xff]
    %v3647 = vld [vmem:[%s2705 + $0x1d68] sm:$0xff]
    %v3648 = vld [vmem:[%s2705 + $0x1d70] sm:$0xff]
    %v3649 = vld [vmem:[%s2705 + $0x1d78] sm:$0xff]
    %v3650 = vld [vmem:[%s2705 + $0x1d80] sm:$0xff]
    %v3651 = vld [vmem:[%s2705 + $0x1d88] sm:$0xff]
    %v3652 = vld [vmem:[%s2705 + $0x1d90] sm:$0xff]
    %v3653 = vld [vmem:[%s2705 + $0x1d98] sm:$0xff]
    %v3654 = vld [vmem:[%s2705 + $0x1da0] sm:$0xff]
    %v3655 = vld [vmem:[%s2705 + $0x1da8] sm:$0xff]
    %v3656 = vld [vmem:[%s2705 + $0x1db0] sm:$0xff]
    %v3657 = vld [vmem:[%s2705 + $0x1db8] sm:$0xff]
    %v3658 = vld [vmem:[%s2705 + $0x1dc0] sm:$0xff]
    %v3659 = vld [vmem:[%s2705 + $0x1dc8] sm:$0xff]
    %v3660 = vld [vmem:[%s2705 + $0x1dd0] sm:$0xff]
    %v3661 = vld [vmem:[%s2705 + $0x1dd8] sm:$0xff]
    %v3662 = vld [vmem:[%s2705 + $0x1de0] sm:$0xff]
    %v3663 = vld [vmem:[%s2705 + $0x1de8] sm:$0xff]
    %v3664 = vld [vmem:[%s2705 + $0x1df0] sm:$0xff]
    %v3665 = vld [vmem:[%s2705 + $0x1df8] sm:$0xff]
    %v3666 = vld [vmem:[%s2705 + $0x1e00] sm:$0xff]
    %v3667 = vld [vmem:[%s2705 + $0x1e08] sm:$0xff]
    %v3668 = vld [vmem:[%s2705 + $0x1e10] sm:$0xff]
    %v3669 = vld [vmem:[%s2705 + $0x1e18] sm:$0xff]
    %v3670 = vld [vmem:[%s2705 + $0x1e20] sm:$0xff]
    %v3671 = vld [vmem:[%s2705 + $0x1e28] sm:$0xff]
    %v3672 = vld [vmem:[%s2705 + $0x1e30] sm:$0xff]
    %v3673 = vld [vmem:[%s2705 + $0x1e38] sm:$0xff]
    %v3674 = vld [vmem:[%s2705 + $0x1e40] sm:$0xff]
    %v3675 = vld [vmem:[%s2705 + $0x1e48] sm:$0xff]
    %v3676 = vld [vmem:[%s2705 + $0x1e50] sm:$0xff]
    %v3677 = vld [vmem:[%s2705 + $0x1e58] sm:$0xff]
    %v3678 = vld [vmem:[%s2705 + $0x1e60] sm:$0xff]
    %v3679 = vld [vmem:[%s2705 + $0x1e68] sm:$0xff]
    %v3680 = vld [vmem:[%s2705 + $0x1e70] sm:$0xff]
    %v3681 = vld [vmem:[%s2705 + $0x1e78] sm:$0xff]
    %v3682 = vld [vmem:[%s2705 + $0x1e80] sm:$0xff]
    %v3683 = vld [vmem:[%s2705 + $0x1e88] sm:$0xff]
    %v3684 = vld [vmem:[%s2705 + $0x1e90] sm:$0xff]
    %v3685 = vld [vmem:[%s2705 + $0x1e98] sm:$0xff]
    %v3686 = vld [vmem:[%s2705 + $0x1ea0] sm:$0xff]
    %v3687 = vld [vmem:[%s2705 + $0x1ea8] sm:$0xff]
    %v3688 = vld [vmem:[%s2705 + $0x1eb0] sm:$0xff]
    %v3689 = vld [vmem:[%s2705 + $0x1eb8] sm:$0xff]
    %v3690 = vld [vmem:[%s2705 + $0x1ec0] sm:$0xff]
    %v3691 = vld [vmem:[%s2705 + $0x1ec8] sm:$0xff]
    %v3692 = vld [vmem:[%s2705 + $0x1ed0] sm:$0xff]
    %v3693 = vld [vmem:[%s2705 + $0x1ed8] sm:$0xff]
    %v3694 = vld [vmem:[%s2705 + $0x1ee0] sm:$0xff]
    %v3695 = vld [vmem:[%s2705 + $0x1ee8] sm:$0xff]
    %v3696 = vld [vmem:[%s2705 + $0x1ef0] sm:$0xff]
    %v3697 = vld [vmem:[%s2705 + $0x1ef8] sm:$0xff]
    %v3698 = vld [vmem:[%s2705 + $0x1f00] sm:$0xff]
    %v3699 = vld [vmem:[%s2705 + $0x1f08] sm:$0xff]
    %v3700 = vld [vmem:[%s2705 + $0x1f10] sm:$0xff]
    %v3701 = vld [vmem:[%s2705 + $0x1f18] sm:$0xff]
    %v3702 = vld [vmem:[%s2705 + $0x1f20] sm:$0xff]
    %v3703 = vld [vmem:[%s2705 + $0x1f28] sm:$0xff]
    %v3704 = vld [vmem:[%s2705 + $0x1f30] sm:$0xff]
    %v3705 = vld [vmem:[%s2705 + $0x1f38] sm:$0xff]
    %v3706 = vld [vmem:[%s2705 + $0x1f40] sm:$0xff]
    %v3707 = vld [vmem:[%s2705 + $0x1f48] sm:$0xff]
    %v3708 = vld [vmem:[%s2705 + $0x1f50] sm:$0xff]
    %v3709 = vld [vmem:[%s2705 + $0x1f58] sm:$0xff]
    %v3710 = vld [vmem:[%s2705 + $0x1f60] sm:$0xff]
    %v3711 = vld [vmem:[%s2705 + $0x1f68] sm:$0xff]
    %v3712 = vld [vmem:[%s2705 + $0x1f70] sm:$0xff]
    %v3713 = vld [vmem:[%s2705 + $0x1f78] sm:$0xff]
    %v3714 = vld [vmem:[%s2705 + $0x1f80] sm:$0xff]
    %v3715 = vld [vmem:[%s2705 + $0x1f88] sm:$0xff]
    %v3716 = vld [vmem:[%s2705 + $0x1f90] sm:$0xff]
    %v3717 = vld [vmem:[%s2705 + $0x1f98] sm:$0xff]
    %v3718 = vld [vmem:[%s2705 + $0x1fa0] sm:$0xff]
    %v3719 = vld [vmem:[%s2705 + $0x1fa8] sm:$0xff]
    %v3720 = vld [vmem:[%s2705 + $0x1fb0] sm:$0xff]
    %v3721 = vld [vmem:[%s2705 + $0x1fb8] sm:$0xff]
    %v3722 = vld [vmem:[%s2705 + $0x1fc0] sm:$0xff]
    %v3723 = vld [vmem:[%s2705 + $0x1fc8] sm:$0xff]
    %v3724 = vld [vmem:[%s2705 + $0x1fd0] sm:$0xff]
    %v3725 = vld [vmem:[%s2705 + $0x1fd8] sm:$0xff]
    %v3726 = vld [vmem:[%s2705 + $0x1fe0] sm:$0xff]
    %v3727 = vld [vmem:[%s2705 + $0x1fe8] sm:$0xff]
    %v3728 = vld [vmem:[%s2705 + $0x1ff0] sm:$0xff]
    %v3729 = vld [vmem:[%s2705 + $0x1ff8] sm:$0xff]
    %s3730 = scalar_lea.vmem [#allocation10], 8
    %v3731 = vld [vmem:[%s3730] sm:$0xff]
    %v3733 = vlaneseq
    %v3734 = vshrl.u32 %v3733, 7
    %v3735 = vsub.s32 0, %v3734
    %v3736 = vrot.slane %v3731, %v3735
    %v3737 = vlaneseq
    %v3738 = vshrl.u32 %v3737, 7
    %v3739 = vsub.s32 1, %v3738
    %v3740 = vrot.slane %v3731, %v3739
    %v3741 = vlaneseq
    %v3742 = vshrl.u32 %v3741, 7
    %v3743 = vsub.s32 2, %v3742
    %v3744 = vrot.slane %v3731, %v3743
    %v3745 = vlaneseq
    %v3746 = vshrl.u32 %v3745, 7
    %v3747 = vsub.s32 3, %v3746
    %v3748 = vrot.slane %v3731, %v3747
    %v3749 = vlaneseq
    %v3750 = vshrl.u32 %v3749, 7
    %v3751 = vsub.s32 4, %v3750
    %v3752 = vrot.slane %v3731, %v3751
    %v3753 = vlaneseq
    %v3754 = vshrl.u32 %v3753, 7
    %v3755 = vsub.s32 5, %v3754
    %v3756 = vrot.slane %v3731, %v3755
    %v3757 = vlaneseq
    %v3758 = vshrl.u32 %v3757, 7
    %v3759 = vsub.s32 6, %v3758
    %v3760 = vrot.slane %v3731, %v3759
    %v3761 = vlaneseq
    %v3762 = vshrl.u32 %v3761, 7
    %v3763 = vsub.s32 7, %v3762
    %v3764 = vrot.slane %v3731, %v3763
    %3773 = vmatprep.subr.mxu0 %v2827
    %3774 = vmatpush1.msra.mxu0 %v2826
    %3775 = vmatprep.subr.mxu0 %v2819
    %3776 = vmatpush1.msra.mxu0 %v2818
    %3777 = vmatprep.subr.mxu0 %v2811
    %3778 = vmatpush1.msra.mxu0 %v2810
    %3779 = vmatprep.subr.mxu0 %v2803
    %3780 = vmatpush1.msra.mxu0 %v2802
    %3781 = vmatprep.subr.mxu0 %v2795
    %3782 = vmatpush1.msra.mxu0 %v2794
    %3783 = vmatprep.subr.mxu0 %v2787
    %3784 = vmatpush1.msra.mxu0 %v2786
    %3785 = vmatprep.subr.mxu0 %v2779
    %3786 = vmatpush1.msra.mxu0 %v2778
    %3787 = vmatprep.subr.mxu0 %v2771
    %3788 = vmatpush1.msra.mxu0 %v2770
    %3789 = vmatprep.subr.mxu0 %v2763
    %3790 = vmatpush1.msra.mxu0 %v2762
    %3791 = vmatprep.subr.mxu0 %v2755
    %3792 = vmatpush1.msra.mxu0 %v2754
    %3793 = vmatprep.subr.mxu0 %v2747
    %3794 = vmatpush1.msra.mxu0 %v2746
    %3795 = vmatprep.subr.mxu0 %v2739
    %3796 = vmatpush1.msra.mxu0 %v2738
    %3797 = vmatprep.subr.mxu0 %v2731
    %3798 = vmatpush1.msra.mxu0 %v2730
    %3799 = vmatprep.subr.mxu0 %v2723
    %3800 = vmatpush1.msra.mxu0 %v2722
    %3801 = vmatprep.subr.mxu0 %v2715
    %3802 = vmatpush1.msra.mxu0 %v2714
    %3803 = vmatprep.subr.mxu0 %v2707
    %3804 = vmatpush1.msra.mxu0 %v2706
    %3805 = vmatprep.subr.mxu0 %v2955
    %3806 = vmatpush2.msra.mxu0 %v2954
    %3807 = vmatprep.subr.mxu0 %v2947
    %3808 = vmatpush2.msra.mxu0 %v2946
    %3809 = vmatprep.subr.mxu0 %v2939
    %3810 = vmatpush2.msra.mxu0 %v2938
    %3811 = vmatprep.subr.mxu0 %v2931
    %3812 = vmatpush2.msra.mxu0 %v2930
    %3813 = vmatprep.subr.mxu0 %v2923
    %3814 = vmatpush2.msra.mxu0 %v2922
    %3815 = vmatprep.subr.mxu0 %v2915
    %3816 = vmatpush2.msra.mxu0 %v2914
    %3817 = vmatprep.subr.mxu0 %v2907
    %3818 = vmatpush2.msra.mxu0 %v2906
    %3819 = vmatprep.subr.mxu0 %v2899
    %3820 = vmatpush2.msra.mxu0 %v2898
    %3821 = vmatprep.subr.mxu0 %v2891
    %3822 = vmatpush2.msra.mxu0 %v2890
    %3823 = vmatprep.subr.mxu0 %v2883
    %3824 = vmatpush2.msra.mxu0 %v2882
    %3825 = vmatprep.subr.mxu0 %v2875
    %3826 = vmatpush2.msra.mxu0 %v2874
    %3827 = vmatprep.subr.mxu0 %v2867
    %3828 = vmatpush2.msra.mxu0 %v2866
    %3829 = vmatprep.subr.mxu0 %v2859
    %3830 = vmatpush2.msra.mxu0 %v2858
    %3831 = vmatprep.subr.mxu0 %v2851
    %3832 = vmatpush2.msra.mxu0 %v2850
    %3833 = vmatprep.subr.mxu0 %v2843
    %3834 = vmatpush2.msra.mxu0 %v2842
    %3835 = vmatprep.subr.mxu0 %v2835
    %3836 = vmatpush2.msra.mxu0 %v2834
    %3837 = vmatprep.mubr.f32.mxu0 %v2698
    %3838 = vmatmul.mubr.f32.gmra.mxu0 %v2697
    %v3839 = vpop.f32.mrf.mxu0
    %v3840 = vadd.f32 %v3736, %v3839
    %v3841 = vpop.f32.mrf.mxu0
    %v3842 = vadd.f32 %v3740, %v3841
    %3843 = vdwg.mxu0
    %3844 = vmatprep.subr.mxu0 %v3083
    %3845 = vmatpush1.msra.mxu0 %v3082
    %3846 = vmatprep.subr.mxu0 %v3075
    %3847 = vmatpush1.msra.mxu0 %v3074
    %3848 = vmatprep.subr.mxu0 %v3067
    %3849 = vmatpush1.msra.mxu0 %v3066
    %3850 = vmatprep.subr.mxu0 %v3059
    %3851 = vmatpush1.msra.mxu0 %v3058
    %3852 = vmatprep.subr.mxu0 %v3051
    %3853 = vmatpush1.msra.mxu0 %v3050
    %3854 = vmatprep.subr.mxu0 %v3043
    %3855 = vmatpush1.msra.mxu0 %v3042
    %3856 = vmatprep.subr.mxu0 %v3035
    %3857 = vmatpush1.msra.mxu0 %v3034
    %3858 = vmatprep.subr.mxu0 %v3027
    %3859 = vmatpush1.msra.mxu0 %v3026
    %3860 = vmatprep.subr.mxu0 %v3019
    %3861 = vmatpush1.msra.mxu0 %v3018
    %3862 = vmatprep.subr.mxu0 %v3011
    %3863 = vmatpush1.msra.mxu0 %v3010
    %3864 = vmatprep.subr.mxu0 %v3003
    %3865 = vmatpush1.msra.mxu0 %v3002
    %3866 = vmatprep.subr.mxu0 %v2995
    %3867 = vmatpush1.msra.mxu0 %v2994
    %3868 = vmatprep.subr.mxu0 %v2987
    %3869 = vmatpush1.msra.mxu0 %v2986
    %3870 = vmatprep.subr.mxu0 %v2979
    %3871 = vmatpush1.msra.mxu0 %v2978
    %3872 = vmatprep.subr.mxu0 %v2971
    %3873 = vmatpush1.msra.mxu0 %v2970
    %3874 = vmatprep.subr.mxu0 %v2963
    %3875 = vmatpush1.msra.mxu0 %v2962
    %3876 = vmatprep.subr.mxu0 %v3211
    %3877 = vmatpush2.msra.mxu0 %v3210
    %3878 = vmatprep.subr.mxu0 %v3203
    %3879 = vmatpush2.msra.mxu0 %v3202
    %3880 = vmatprep.subr.mxu0 %v3195
    %3881 = vmatpush2.msra.mxu0 %v3194
    %3882 = vmatprep.subr.mxu0 %v3187
    %3883 = vmatpush2.msra.mxu0 %v3186
    %3884 = vmatprep.subr.mxu0 %v3179
    %3885 = vmatpush2.msra.mxu0 %v3178
    %3886 = vmatprep.subr.mxu0 %v3171
    %3887 = vmatpush2.msra.mxu0 %v3170
    %3888 = vmatprep.subr.mxu0 %v3163
    %3889 = vmatpush2.msra.mxu0 %v3162
    %3890 = vmatprep.subr.mxu0 %v3155
    %3891 = vmatpush2.msra.mxu0 %v3154
    %3892 = vmatprep.subr.mxu0 %v3147
    %3893 = vmatpush2.msra.mxu0 %v3146
    %3894 = vmatprep.subr.mxu0 %v3139
    %3895 = vmatpush2.msra.mxu0 %v3138
    %3896 = vmatprep.subr.mxu0 %v3131
    %3897 = vmatpush2.msra.mxu0 %v3130
    %3898 = vmatprep.subr.mxu0 %v3123
    %3899 = vmatpush2.msra.mxu0 %v3122
    %3900 = vmatprep.subr.mxu0 %v3115
    %3901 = vmatpush2.msra.mxu0 %v3114
    %3902 = vmatprep.subr.mxu0 %v3107
    %3903 = vmatpush2.msra.mxu0 %v3106
    %3904 = vmatprep.subr.mxu0 %v3099
    %3905 = vmatpush2.msra.mxu0 %v3098
    %3906 = vmatprep.subr.mxu0 %v3091
    %3907 = vmatpush2.msra.mxu0 %v3090
    %3908 = vmatprep.mubr.f32.mxu0 %v2700
    %3909 = vmatmul.mubr.f32.gmra.mxu0 %v2699
    %v3910 = vpop.f32.mrf.mxu0
    %v3911 = vadd.f32 %v3840, %v3910
    %v3912 = vpop.f32.mrf.mxu0
    %v3913 = vadd.f32 %v3842, %v3912
    %3914 = vdwg.mxu0
    %3915 = vmatprep.subr.mxu0 %v3339
    %3916 = vmatpush1.msra.mxu0 %v3338
    %3917 = vmatprep.subr.mxu0 %v3331
    %3918 = vmatpush1.msra.mxu0 %v3330
    %3919 = vmatprep.subr.mxu0 %v3323
    %3920 = vmatpush1.msra.mxu0 %v3322
    %3921 = vmatprep.subr.mxu0 %v3315
    %3922 = vmatpush1.msra.mxu0 %v3314
    %3923 = vmatprep.subr.mxu0 %v3307
    %3924 = vmatpush1.msra.mxu0 %v3306
    %3925 = vmatprep.subr.mxu0 %v3299
    %3926 = vmatpush1.msra.mxu0 %v3298
    %3927 = vmatprep.subr.mxu0 %v3291
    %3928 = vmatpush1.msra.mxu0 %v3290
    %3929 = vmatprep.subr.mxu0 %v3283
    %3930 = vmatpush1.msra.mxu0 %v3282
    %3931 = vmatprep.subr.mxu0 %v3275
    %3932 = vmatpush1.msra.mxu0 %v3274
    %3933 = vmatprep.subr.mxu0 %v3267
    %3934 = vmatpush1.msra.mxu0 %v3266
    %3935 = vmatprep.subr.mxu0 %v3259
    %3936 = vmatpush1.msra.mxu0 %v3258
    %3937 = vmatprep.subr.mxu0 %v3251
    %3938 = vmatpush1.msra.mxu0 %v3250
    %3939 = vmatprep.subr.mxu0 %v3243
    %3940 = vmatpush1.msra.mxu0 %v3242
    %3941 = vmatprep.subr.mxu0 %v3235
    %3942 = vmatpush1.msra.mxu0 %v3234
    %3943 = vmatprep.subr.mxu0 %v3227
    %3944 = vmatpush1.msra.mxu0 %v3226
    %3945 = vmatprep.subr.mxu0 %v3219
    %3946 = vmatpush1.msra.mxu0 %v3218
    %3947 = vmatprep.subr.mxu0 %v3467
    %3948 = vmatpush2.msra.mxu0 %v3466
    %3949 = vmatprep.subr.mxu0 %v3459
    %3950 = vmatpush2.msra.mxu0 %v3458
    %3951 = vmatprep.subr.mxu0 %v3451
    %3952 = vmatpush2.msra.mxu0 %v3450
    %3953 = vmatprep.subr.mxu0 %v3443
    %3954 = vmatpush2.msra.mxu0 %v3442
    %3955 = vmatprep.subr.mxu0 %v3435
    %3956 = vmatpush2.msra.mxu0 %v3434
    %3957 = vmatprep.subr.mxu0 %v3427
    %3958 = vmatpush2.msra.mxu0 %v3426
    %3959 = vmatprep.subr.mxu0 %v3419
    %3960 = vmatpush2.msra.mxu0 %v3418
    %3961 = vmatprep.subr.mxu0 %v3411
    %3962 = vmatpush2.msra.mxu0 %v3410
    %3963 = vmatprep.subr.mxu0 %v3403
    %3964 = vmatpush2.msra.mxu0 %v3402
    %3965 = vmatprep.subr.mxu0 %v3395
    %3966 = vmatpush2.msra.mxu0 %v3394
    %3967 = vmatprep.subr.mxu0 %v3387
    %3968 = vmatpush2.msra.mxu0 %v3386
    %3969 = vmatprep.subr.mxu0 %v3379
    %3970 = vmatpush2.msra.mxu0 %v3378
    %3971 = vmatprep.subr.mxu0 %v3371
    %3972 = vmatpush2.msra.mxu0 %v3370
    %3973 = vmatprep.subr.mxu0 %v3363
    %3974 = vmatpush2.msra.mxu0 %v3362
    %3975 = vmatprep.subr.mxu0 %v3355
    %3976 = vmatpush2.msra.mxu0 %v3354
    %3977 = vmatprep.subr.mxu0 %v3347
    %3978 = vmatpush2.msra.mxu0 %v3346
    %3979 = vmatprep.mubr.f32.mxu0 %v2702
    %3980 = vmatmul.mubr.f32.gmra.mxu0 %v2701
    %v3981 = vpop.f32.mrf.mxu0
    %v3982 = vadd.f32 %v3911, %v3981
    %v3983 = vpop.f32.mrf.mxu0
    %v3984 = vadd.f32 %v3913, %v3983
    %3985 = vdwg.mxu0
    %3986 = vmatprep.subr.mxu0 %v3595
    %3987 = vmatpush1.msra.mxu0 %v3594
    %3988 = vmatprep.subr.mxu0 %v3587
    %3989 = vmatpush1.msra.mxu0 %v3586
    %3990 = vmatprep.subr.mxu0 %v3579
    %3991 = vmatpush1.msra.mxu0 %v3578
    %3992 = vmatprep.subr.mxu0 %v3571
    %3993 = vmatpush1.msra.mxu0 %v3570
    %3994 = vmatprep.subr.mxu0 %v3563
    %3995 = vmatpush1.msra.mxu0 %v3562
    %3996 = vmatprep.subr.mxu0 %v3555
    %3997 = vmatpush1.msra.mxu0 %v3554
    %3998 = vmatprep.subr.mxu0 %v3547
    %3999 = vmatpush1.msra.mxu0 %v3546
    %4000 = vmatprep.subr.mxu0 %v3539
    %4001 = vmatpush1.msra.mxu0 %v3538
    %4002 = vmatprep.subr.mxu0 %v3531
    %4003 = vmatpush1.msra.mxu0 %v3530
    %4004 = vmatprep.subr.mxu0 %v3523
    %4005 = vmatpush1.msra.mxu0 %v3522
    %4006 = vmatprep.subr.mxu0 %v3515
    %4007 = vmatpush1.msra.mxu0 %v3514
    %4008 = vmatprep.subr.mxu0 %v3507
    %4009 = vmatpush1.msra.mxu0 %v3506
    %4010 = vmatprep.subr.mxu0 %v3499
    %4011 = vmatpush1.msra.mxu0 %v3498
    %4012 = vmatprep.subr.mxu0 %v3491
    %4013 = vmatpush1.msra.mxu0 %v3490
    %4014 = vmatprep.subr.mxu0 %v3483
    %4015 = vmatpush1.msra.mxu0 %v3482
    %4016 = vmatprep.subr.mxu0 %v3475
    %4017 = vmatpush1.msra.mxu0 %v3474
    %4018 = vmatprep.subr.mxu0 %v3723
    %4019 = vmatpush2.msra.mxu0 %v3722
    %4020 = vmatprep.subr.mxu0 %v3715
    %4021 = vmatpush2.msra.mxu0 %v3714
    %4022 = vmatprep.subr.mxu0 %v3707
    %4023 = vmatpush2.msra.mxu0 %v3706
    %4024 = vmatprep.subr.mxu0 %v3699
    %4025 = vmatpush2.msra.mxu0 %v3698
    %4026 = vmatprep.subr.mxu0 %v3691
    %4027 = vmatpush2.msra.mxu0 %v3690
    %4028 = vmatprep.subr.mxu0 %v3683
    %4029 = vmatpush2.msra.mxu0 %v3682
    %4030 = vmatprep.subr.mxu0 %v3675
    %4031 = vmatpush2.msra.mxu0 %v3674
    %4032 = vmatprep.subr.mxu0 %v3667
    %4033 = vmatpush2.msra.mxu0 %v3666
    %4034 = vmatprep.subr.mxu0 %v3659
    %4035 = vmatpush2.msra.mxu0 %v3658
    %4036 = vmatprep.subr.mxu0 %v3651
    %4037 = vmatpush2.msra.mxu0 %v3650
    %4038 = vmatprep.subr.mxu0 %v3643
    %4039 = vmatpush2.msra.mxu0 %v3642
    %4040 = vmatprep.subr.mxu0 %v3635
    %4041 = vmatpush2.msra.mxu0 %v3634
    %4042 = vmatprep.subr.mxu0 %v3627
    %4043 = vmatpush2.msra.mxu0 %v3626
    %4044 = vmatprep.subr.mxu0 %v3619
    %4045 = vmatpush2.msra.mxu0 %v3618
    %4046 = vmatprep.subr.mxu0 %v3611
    %4047 = vmatpush2.msra.mxu0 %v3610
    %4048 = vmatprep.subr.mxu0 %v3603
    %4049 = vmatpush2.msra.mxu0 %v3602
    %4050 = vmatprep.mubr.f32.mxu0 %v2704
    %4051 = vmatmul.mubr.f32.gmra.mxu0 %v2703
    %v4052 = vpop.f32.mrf.mxu0
    %v4053 = vadd.f32 %v3982, %v4052
    %v4054 = vpop.f32.mrf.mxu0
    %v4055 = vadd.f32 %v3984, %v4054
    %4056 = vdwg.mxu0
    %4057 = vmatprep.subr.mxu0 %v2829
    %4058 = vmatpush1.msra.mxu0 %v2828
    %4059 = vmatprep.subr.mxu0 %v2821
    %4060 = vmatpush1.msra.mxu0 %v2820
    %4061 = vmatprep.subr.mxu0 %v2813
    %4062 = vmatpush1.msra.mxu0 %v2812
    %4063 = vmatprep.subr.mxu0 %v2805
    %4064 = vmatpush1.msra.mxu0 %v2804
    %4065 = vmatprep.subr.mxu0 %v2797
    %4066 = vmatpush1.msra.mxu0 %v2796
    %4067 = vmatprep.subr.mxu0 %v2789
    %4068 = vmatpush1.msra.mxu0 %v2788
    %4069 = vmatprep.subr.mxu0 %v2781
    %4070 = vmatpush1.msra.mxu0 %v2780
    %4071 = vmatprep.subr.mxu0 %v2773
    %4072 = vmatpush1.msra.mxu0 %v2772
    %4073 = vmatprep.subr.mxu0 %v2765
    %4074 = vmatpush1.msra.mxu0 %v2764
    %4075 = vmatprep.subr.mxu0 %v2757
    %4076 = vmatpush1.msra.mxu0 %v2756
    %4077 = vmatprep.subr.mxu0 %v2749
    %4078 = vmatpush1.msra.mxu0 %v2748
    %4079 = vmatprep.subr.mxu0 %v2741
    %4080 = vmatpush1.msra.mxu0 %v2740
    %4081 = vmatprep.subr.mxu0 %v2733
    %4082 = vmatpush1.msra.mxu0 %v2732
    %4083 = vmatprep.subr.mxu0 %v2725
    %4084 = vmatpush1.msra.mxu0 %v2724
    %4085 = vmatprep.subr.mxu0 %v2717
    %4086 = vmatpush1.msra.mxu0 %v2716
    %4087 = vmatprep.subr.mxu0 %v2709
    %4088 = vmatpush1.msra.mxu0 %v2708
    %4089 = vmatprep.subr.mxu0 %v2957
    %4090 = vmatpush2.msra.mxu0 %v2956
    %4091 = vmatprep.subr.mxu0 %v2949
    %4092 = vmatpush2.msra.mxu0 %v2948
    %4093 = vmatprep.subr.mxu0 %v2941
    %4094 = vmatpush2.msra.mxu0 %v2940
    %4095 = vmatprep.subr.mxu0 %v2933
    %4096 = vmatpush2.msra.mxu0 %v2932
    %4097 = vmatprep.subr.mxu0 %v2925
    %4098 = vmatpush2.msra.mxu0 %v2924
    %4099 = vmatprep.subr.mxu0 %v2917
    %4100 = vmatpush2.msra.mxu0 %v2916
    %4101 = vmatprep.subr.mxu0 %v2909
    %4102 = vmatpush2.msra.mxu0 %v2908
    %4103 = vmatprep.subr.mxu0 %v2901
    %4104 = vmatpush2.msra.mxu0 %v2900
    %4105 = vmatprep.subr.mxu0 %v2893
    %4106 = vmatpush2.msra.mxu0 %v2892
    %4107 = vmatprep.subr.mxu0 %v2885
    %4108 = vmatpush2.msra.mxu0 %v2884
    %4109 = vmatprep.subr.mxu0 %v2877
    %4110 = vmatpush2.msra.mxu0 %v2876
    %4111 = vmatprep.subr.mxu0 %v2869
    %4112 = vmatpush2.msra.mxu0 %v2868
    %4113 = vmatprep.subr.mxu0 %v2861
    %4114 = vmatpush2.msra.mxu0 %v2860
    %4115 = vmatprep.subr.mxu0 %v2853
    %4116 = vmatpush2.msra.mxu0 %v2852
    %4117 = vmatprep.subr.mxu0 %v2845
    %4118 = vmatpush2.msra.mxu0 %v2844
    %4119 = vmatprep.subr.mxu0 %v2837
    %4120 = vmatpush2.msra.mxu0 %v2836
    %4121 = vmatprep.mubr.f32.mxu0 %v2698
    %4122 = vmatmul.mubr.f32.gmra.mxu0 %v2697
    %v4123 = vpop.f32.mrf.mxu0
    %v4124 = vadd.f32 %v3744, %v4123
    %v4125 = vpop.f32.mrf.mxu0
    %v4126 = vadd.f32 %v3748, %v4125
    %4127 = vdwg.mxu0
    %4128 = vmatprep.subr.mxu0 %v3085
    %4129 = vmatpush1.msra.mxu0 %v3084
    %4130 = vmatprep.subr.mxu0 %v3077
    %4131 = vmatpush1.msra.mxu0 %v3076
    %4132 = vmatprep.subr.mxu0 %v3069
    %4133 = vmatpush1.msra.mxu0 %v3068
    %4134 = vmatprep.subr.mxu0 %v3061
    %4135 = vmatpush1.msra.mxu0 %v3060
    %4136 = vmatprep.subr.mxu0 %v3053
    %4137 = vmatpush1.msra.mxu0 %v3052
    %4138 = vmatprep.subr.mxu0 %v3045
    %4139 = vmatpush1.msra.mxu0 %v3044
    %4140 = vmatprep.subr.mxu0 %v3037
    %4141 = vmatpush1.msra.mxu0 %v3036
    %4142 = vmatprep.subr.mxu0 %v3029
    %4143 = vmatpush1.msra.mxu0 %v3028
    %4144 = vmatprep.subr.mxu0 %v3021
    %4145 = vmatpush1.msra.mxu0 %v3020
    %4146 = vmatprep.subr.mxu0 %v3013
    %4147 = vmatpush1.msra.mxu0 %v3012
    %4148 = vmatprep.subr.mxu0 %v3005
    %4149 = vmatpush1.msra.mxu0 %v3004
    %4150 = vmatprep.subr.mxu0 %v2997
    %4151 = vmatpush1.msra.mxu0 %v2996
    %4152 = vmatprep.subr.mxu0 %v2989
    %4153 = vmatpush1.msra.mxu0 %v2988
    %4154 = vmatprep.subr.mxu0 %v2981
    %4155 = vmatpush1.msra.mxu0 %v2980
    %4156 = vmatprep.subr.mxu0 %v2973
    %4157 = vmatpush1.msra.mxu0 %v2972
    %4158 = vmatprep.subr.mxu0 %v2965
    %4159 = vmatpush1.msra.mxu0 %v2964
    %4160 = vmatprep.subr.mxu0 %v3213
    %4161 = vmatpush2.msra.mxu0 %v3212
    %4162 = vmatprep.subr.mxu0 %v3205
    %4163 = vmatpush2.msra.mxu0 %v3204
    %4164 = vmatprep.subr.mxu0 %v3197
    %4165 = vmatpush2.msra.mxu0 %v3196
    %4166 = vmatprep.subr.mxu0 %v3189
    %4167 = vmatpush2.msra.mxu0 %v3188
    %4168 = vmatprep.subr.mxu0 %v3181
    %4169 = vmatpush2.msra.mxu0 %v3180
    %4170 = vmatprep.subr.mxu0 %v3173
    %4171 = vmatpush2.msra.mxu0 %v3172
    %4172 = vmatprep.subr.mxu0 %v3165
    %4173 = vmatpush2.msra.mxu0 %v3164
    %4174 = vmatprep.subr.mxu0 %v3157
    %4175 = vmatpush2.msra.mxu0 %v3156
    %4176 = vmatprep.subr.mxu0 %v3149
    %4177 = vmatpush2.msra.mxu0 %v3148
    %4178 = vmatprep.subr.mxu0 %v3141
    %4179 = vmatpush2.msra.mxu0 %v3140
    %4180 = vmatprep.subr.mxu0 %v3133
    %4181 = vmatpush2.msra.mxu0 %v3132
    %4182 = vmatprep.subr.mxu0 %v3125
    %4183 = vmatpush2.msra.mxu0 %v3124
    %4184 = vmatprep.subr.mxu0 %v3117
    %4185 = vmatpush2.msra.mxu0 %v3116
    %4186 = vmatprep.subr.mxu0 %v3109
    %4187 = vmatpush2.msra.mxu0 %v3108
    %4188 = vmatprep.subr.mxu0 %v3101
    %4189 = vmatpush2.msra.mxu0 %v3100
    %4190 = vmatprep.subr.mxu0 %v3093
    %4191 = vmatpush2.msra.mxu0 %v3092
    %4192 = vmatprep.mubr.f32.mxu0 %v2700
    %4193 = vmatmul.mubr.f32.gmra.mxu0 %v2699
    %v4194 = vpop.f32.mrf.mxu0
    %v4195 = vadd.f32 %v4124, %v4194
    %v4196 = vpop.f32.mrf.mxu0
    %v4197 = vadd.f32 %v4126, %v4196
    %4198 = vdwg.mxu0
    %4199 = vmatprep.subr.mxu0 %v3341
    %4200 = vmatpush1.msra.mxu0 %v3340
    %4201 = vmatprep.subr.mxu0 %v3333
    %4202 = vmatpush1.msra.mxu0 %v3332
    %4203 = vmatprep.subr.mxu0 %v3325
    %4204 = vmatpush1.msra.mxu0 %v3324
    %4205 = vmatprep.subr.mxu0 %v3317
    %4206 = vmatpush1.msra.mxu0 %v3316
    %4207 = vmatprep.subr.mxu0 %v3309
    %4208 = vmatpush1.msra.mxu0 %v3308
    %4209 = vmatprep.subr.mxu0 %v3301
    %4210 = vmatpush1.msra.mxu0 %v3300
    %4211 = vmatprep.subr.mxu0 %v3293
    %4212 = vmatpush1.msra.mxu0 %v3292
    %4213 = vmatprep.subr.mxu0 %v3285
    %4214 = vmatpush1.msra.mxu0 %v3284
    %4215 = vmatprep.subr.mxu0 %v3277
    %4216 = vmatpush1.msra.mxu0 %v3276
    %4217 = vmatprep.subr.mxu0 %v3269
    %4218 = vmatpush1.msra.mxu0 %v3268
    %4219 = vmatprep.subr.mxu0 %v3261
    %4220 = vmatpush1.msra.mxu0 %v3260
    %4221 = vmatprep.subr.mxu0 %v3253
    %4222 = vmatpush1.msra.mxu0 %v3252
    %4223 = vmatprep.subr.mxu0 %v3245
    %4224 = vmatpush1.msra.mxu0 %v3244
    %4225 = vmatprep.subr.mxu0 %v3237
    %4226 = vmatpush1.msra.mxu0 %v3236
    %4227 = vmatprep.subr.mxu0 %v3229
    %4228 = vmatpush1.msra.mxu0 %v3228
    %4229 = vmatprep.subr.mxu0 %v3221
    %4230 = vmatpush1.msra.mxu0 %v3220
    %4231 = vmatprep.subr.mxu0 %v3469
    %4232 = vmatpush2.msra.mxu0 %v3468
    %4233 = vmatprep.subr.mxu0 %v3461
    %4234 = vmatpush2.msra.mxu0 %v3460
    %4235 = vmatprep.subr.mxu0 %v3453
    %4236 = vmatpush2.msra.mxu0 %v3452
    %4237 = vmatprep.subr.mxu0 %v3445
    %4238 = vmatpush2.msra.mxu0 %v3444
    %4239 = vmatprep.subr.mxu0 %v3437
    %4240 = vmatpush2.msra.mxu0 %v3436
    %4241 = vmatprep.subr.mxu0 %v3429
    %4242 = vmatpush2.msra.mxu0 %v3428
    %4243 = vmatprep.subr.mxu0 %v3421
    %4244 = vmatpush2.msra.mxu0 %v3420
    %4245 = vmatprep.subr.mxu0 %v3413
    %4246 = vmatpush2.msra.mxu0 %v3412
    %4247 = vmatprep.subr.mxu0 %v3405
    %4248 = vmatpush2.msra.mxu0 %v3404
    %4249 = vmatprep.subr.mxu0 %v3397
    %4250 = vmatpush2.msra.mxu0 %v3396
    %4251 = vmatprep.subr.mxu0 %v3389
    %4252 = vmatpush2.msra.mxu0 %v3388
    %4253 = vmatprep.subr.mxu0 %v3381
    %4254 = vmatpush2.msra.mxu0 %v3380
    %4255 = vmatprep.subr.mxu0 %v3373
    %4256 = vmatpush2.msra.mxu0 %v3372
    %4257 = vmatprep.subr.mxu0 %v3365
    %4258 = vmatpush2.msra.mxu0 %v3364
    %4259 = vmatprep.subr.mxu0 %v3357
    %4260 = vmatpush2.msra.mxu0 %v3356
    %4261 = vmatprep.subr.mxu0 %v3349
    %4262 = vmatpush2.msra.mxu0 %v3348
    %4263 = vmatprep.mubr.f32.mxu0 %v2702
    %4264 = vmatmul.mubr.f32.gmra.mxu0 %v2701
    %v4265 = vpop.f32.mrf.mxu0
    %v4266 = vadd.f32 %v4195, %v4265
    %v4267 = vpop.f32.mrf.mxu0
    %v4268 = vadd.f32 %v4197, %v4267
    %4269 = vdwg.mxu0
    %4270 = vmatprep.subr.mxu0 %v3597
    %4271 = vmatpush1.msra.mxu0 %v3596
    %4272 = vmatprep.subr.mxu0 %v3589
    %4273 = vmatpush1.msra.mxu0 %v3588
    %4274 = vmatprep.subr.mxu0 %v3581
    %4275 = vmatpush1.msra.mxu0 %v3580
    %4276 = vmatprep.subr.mxu0 %v3573
    %4277 = vmatpush1.msra.mxu0 %v3572
    %4278 = vmatprep.subr.mxu0 %v3565
    %4279 = vmatpush1.msra.mxu0 %v3564
    %4280 = vmatprep.subr.mxu0 %v3557
    %4281 = vmatpush1.msra.mxu0 %v3556
    %4282 = vmatprep.subr.mxu0 %v3549
    %4283 = vmatpush1.msra.mxu0 %v3548
    %4284 = vmatprep.subr.mxu0 %v3541
    %4285 = vmatpush1.msra.mxu0 %v3540
    %4286 = vmatprep.subr.mxu0 %v3533
    %4287 = vmatpush1.msra.mxu0 %v3532
    %4288 = vmatprep.subr.mxu0 %v3525
    %4289 = vmatpush1.msra.mxu0 %v3524
    %4290 = vmatprep.subr.mxu0 %v3517
    %4291 = vmatpush1.msra.mxu0 %v3516
    %4292 = vmatprep.subr.mxu0 %v3509
    %4293 = vmatpush1.msra.mxu0 %v3508
    %4294 = vmatprep.subr.mxu0 %v3501
    %4295 = vmatpush1.msra.mxu0 %v3500
    %4296 = vmatprep.subr.mxu0 %v3493
    %4297 = vmatpush1.msra.mxu0 %v3492
    %4298 = vmatprep.subr.mxu0 %v3485
    %4299 = vmatpush1.msra.mxu0 %v3484
    %4300 = vmatprep.subr.mxu0 %v3477
    %4301 = vmatpush1.msra.mxu0 %v3476
    %4302 = vmatprep.subr.mxu0 %v3725
    %4303 = vmatpush2.msra.mxu0 %v3724
    %4304 = vmatprep.subr.mxu0 %v3717
    %4305 = vmatpush2.msra.mxu0 %v3716
    %4306 = vmatprep.subr.mxu0 %v3709
    %4307 = vmatpush2.msra.mxu0 %v3708
    %4308 = vmatprep.subr.mxu0 %v3701
    %4309 = vmatpush2.msra.mxu0 %v3700
    %4310 = vmatprep.subr.mxu0 %v3693
    %4311 = vmatpush2.msra.mxu0 %v3692
    %4312 = vmatprep.subr.mxu0 %v3685
    %4313 = vmatpush2.msra.mxu0 %v3684
    %4314 = vmatprep.subr.mxu0 %v3677
    %4315 = vmatpush2.msra.mxu0 %v3676
    %4316 = vmatprep.subr.mxu0 %v3669
    %4317 = vmatpush2.msra.mxu0 %v3668
    %4318 = vmatprep.subr.mxu0 %v3661
    %4319 = vmatpush2.msra.mxu0 %v3660
    %4320 = vmatprep.subr.mxu0 %v3653
    %4321 = vmatpush2.msra.mxu0 %v3652
    %4322 = vmatprep.subr.mxu0 %v3645
    %4323 = vmatpush2.msra.mxu0 %v3644
    %4324 = vmatprep.subr.mxu0 %v3637
    %4325 = vmatpush2.msra.mxu0 %v3636
    %4326 = vmatprep.subr.mxu0 %v3629
    %4327 = vmatpush2.msra.mxu0 %v3628
    %4328 = vmatprep.subr.mxu0 %v3621
    %4329 = vmatpush2.msra.mxu0 %v3620
    %4330 = vmatprep.subr.mxu0 %v3613
    %4331 = vmatpush2.msra.mxu0 %v3612
    %4332 = vmatprep.subr.mxu0 %v3605
    %4333 = vmatpush2.msra.mxu0 %v3604
    %4334 = vmatprep.mubr.f32.mxu0 %v2704
    %4335 = vmatmul.mubr.f32.gmra.mxu0 %v2703
    %v4336 = vpop.f32.mrf.mxu0
    %v4337 = vadd.f32 %v4266, %v4336
    %v4338 = vpop.f32.mrf.mxu0
    %v4339 = vadd.f32 %v4268, %v4338
    %4340 = vdwg.mxu0
    %4341 = vmatprep.subr.mxu0 %v2831
    %4342 = vmatpush1.msra.mxu0 %v2830
    %4343 = vmatprep.subr.mxu0 %v2823
    %4344 = vmatpush1.msra.mxu0 %v2822
    %4345 = vmatprep.subr.mxu0 %v2815
    %4346 = vmatpush1.msra.mxu0 %v2814
    %4347 = vmatprep.subr.mxu0 %v2807
    %4348 = vmatpush1.msra.mxu0 %v2806
    %4349 = vmatprep.subr.mxu0 %v2799
    %4350 = vmatpush1.msra.mxu0 %v2798
    %4351 = vmatprep.subr.mxu0 %v2791
    %4352 = vmatpush1.msra.mxu0 %v2790
    %4353 = vmatprep.subr.mxu0 %v2783
    %4354 = vmatpush1.msra.mxu0 %v2782
    %4355 = vmatprep.subr.mxu0 %v2775
    %4356 = vmatpush1.msra.mxu0 %v2774
    %4357 = vmatprep.subr.mxu0 %v2767
    %4358 = vmatpush1.msra.mxu0 %v2766
    %4359 = vmatprep.subr.mxu0 %v2759
    %4360 = vmatpush1.msra.mxu0 %v2758
    %4361 = vmatprep.subr.mxu0 %v2751
    %4362 = vmatpush1.msra.mxu0 %v2750
    %4363 = vmatprep.subr.mxu0 %v2743
    %4364 = vmatpush1.msra.mxu0 %v2742
    %4365 = vmatprep.subr.mxu0 %v2735
    %4366 = vmatpush1.msra.mxu0 %v2734
    %4367 = vmatprep.subr.mxu0 %v2727
    %4368 = vmatpush1.msra.mxu0 %v2726
    %4369 = vmatprep.subr.mxu0 %v2719
    %4370 = vmatpush1.msra.mxu0 %v2718
    %4371 = vmatprep.subr.mxu0 %v2711
    %4372 = vmatpush1.msra.mxu0 %v2710
    %4373 = vmatprep.subr.mxu0 %v2959
    %4374 = vmatpush2.msra.mxu0 %v2958
    %4375 = vmatprep.subr.mxu0 %v2951
    %4376 = vmatpush2.msra.mxu0 %v2950
    %4377 = vmatprep.subr.mxu0 %v2943
    %4378 = vmatpush2.msra.mxu0 %v2942
    %4379 = vmatprep.subr.mxu0 %v2935
    %4380 = vmatpush2.msra.mxu0 %v2934
    %4381 = vmatprep.subr.mxu0 %v2927
    %4382 = vmatpush2.msra.mxu0 %v2926
    %4383 = vmatprep.subr.mxu0 %v2919
    %4384 = vmatpush2.msra.mxu0 %v2918
    %4385 = vmatprep.subr.mxu0 %v2911
    %4386 = vmatpush2.msra.mxu0 %v2910
    %4387 = vmatprep.subr.mxu0 %v2903
    %4388 = vmatpush2.msra.mxu0 %v2902
    %4389 = vmatprep.subr.mxu0 %v2895
    %4390 = vmatpush2.msra.mxu0 %v2894
    %4391 = vmatprep.subr.mxu0 %v2887
    %4392 = vmatpush2.msra.mxu0 %v2886
    %4393 = vmatprep.subr.mxu0 %v2879
    %4394 = vmatpush2.msra.mxu0 %v2878
    %4395 = vmatprep.subr.mxu0 %v2871
    %4396 = vmatpush2.msra.mxu0 %v2870
    %4397 = vmatprep.subr.mxu0 %v2863
    %4398 = vmatpush2.msra.mxu0 %v2862
    %4399 = vmatprep.subr.mxu0 %v2855
    %4400 = vmatpush2.msra.mxu0 %v2854
    %4401 = vmatprep.subr.mxu0 %v2847
    %4402 = vmatpush2.msra.mxu0 %v2846
    %4403 = vmatprep.subr.mxu0 %v2839
    %4404 = vmatpush2.msra.mxu0 %v2838
    %4405 = vmatprep.mubr.f32.mxu0 %v2698
    %4406 = vmatmul.mubr.f32.gmra.mxu0 %v2697
    %v4407 = vpop.f32.mrf.mxu0
    %v4408 = vadd.f32 %v3752, %v4407
    %v4409 = vpop.f32.mrf.mxu0
    %v4410 = vadd.f32 %v3756, %v4409
    %4411 = vdwg.mxu0
    %4412 = vmatprep.subr.mxu0 %v3087
    %4413 = vmatpush1.msra.mxu0 %v3086
    %4414 = vmatprep.subr.mxu0 %v3079
    %4415 = vmatpush1.msra.mxu0 %v3078
    %4416 = vmatprep.subr.mxu0 %v3071
    %4417 = vmatpush1.msra.mxu0 %v3070
    %4418 = vmatprep.subr.mxu0 %v3063
    %4419 = vmatpush1.msra.mxu0 %v3062
    %4420 = vmatprep.subr.mxu0 %v3055
    %4421 = vmatpush1.msra.mxu0 %v3054
    %4422 = vmatprep.subr.mxu0 %v3047
    %4423 = vmatpush1.msra.mxu0 %v3046
    %4424 = vmatprep.subr.mxu0 %v3039
    %4425 = vmatpush1.msra.mxu0 %v3038
    %4426 = vmatprep.subr.mxu0 %v3031
    %4427 = vmatpush1.msra.mxu0 %v3030
    %4428 = vmatprep.subr.mxu0 %v3023
    %4429 = vmatpush1.msra.mxu0 %v3022
    %4430 = vmatprep.subr.mxu0 %v3015
    %4431 = vmatpush1.msra.mxu0 %v3014
    %4432 = vmatprep.subr.mxu0 %v3007
    %4433 = vmatpush1.msra.mxu0 %v3006
    %4434 = vmatprep.subr.mxu0 %v2999
    %4435 = vmatpush1.msra.mxu0 %v2998
    %4436 = vmatprep.subr.mxu0 %v2991
    %4437 = vmatpush1.msra.mxu0 %v2990
    %4438 = vmatprep.subr.mxu0 %v2983
    %4439 = vmatpush1.msra.mxu0 %v2982
    %4440 = vmatprep.subr.mxu0 %v2975
    %4441 = vmatpush1.msra.mxu0 %v2974
    %4442 = vmatprep.subr.mxu0 %v2967
    %4443 = vmatpush1.msra.mxu0 %v2966
    %4444 = vmatprep.subr.mxu0 %v3215
    %4445 = vmatpush2.msra.mxu0 %v3214
    %4446 = vmatprep.subr.mxu0 %v3207
    %4447 = vmatpush2.msra.mxu0 %v3206
    %4448 = vmatprep.subr.mxu0 %v3199
    %4449 = vmatpush2.msra.mxu0 %v3198
    %4450 = vmatprep.subr.mxu0 %v3191
    %4451 = vmatpush2.msra.mxu0 %v3190
    %4452 = vmatprep.subr.mxu0 %v3183
    %4453 = vmatpush2.msra.mxu0 %v3182
    %4454 = vmatprep.subr.mxu0 %v3175
    %4455 = vmatpush2.msra.mxu0 %v3174
    %4456 = vmatprep.subr.mxu0 %v3167
    %4457 = vmatpush2.msra.mxu0 %v3166
    %4458 = vmatprep.subr.mxu0 %v3159
    %4459 = vmatpush2.msra.mxu0 %v3158
    %4460 = vmatprep.subr.mxu0 %v3151
    %4461 = vmatpush2.msra.mxu0 %v3150
    %4462 = vmatprep.subr.mxu0 %v3143
    %4463 = vmatpush2.msra.mxu0 %v3142
    %4464 = vmatprep.subr.mxu0 %v3135
    %4465 = vmatpush2.msra.mxu0 %v3134
    %4466 = vmatprep.subr.mxu0 %v3127
    %4467 = vmatpush2.msra.mxu0 %v3126
    %4468 = vmatprep.subr.mxu0 %v3119
    %4469 = vmatpush2.msra.mxu0 %v3118
    %4470 = vmatprep.subr.mxu0 %v3111
    %4471 = vmatpush2.msra.mxu0 %v3110
    %4472 = vmatprep.subr.mxu0 %v3103
    %4473 = vmatpush2.msra.mxu0 %v3102
    %4474 = vmatprep.subr.mxu0 %v3095
    %4475 = vmatpush2.msra.mxu0 %v3094
    %4476 = vmatprep.mubr.f32.mxu0 %v2700
    %4477 = vmatmul.mubr.f32.gmra.mxu0 %v2699
    %v4478 = vpop.f32.mrf.mxu0
    %v4479 = vadd.f32 %v4408, %v4478
    %v4480 = vpop.f32.mrf.mxu0
    %v4481 = vadd.f32 %v4410, %v4480
    %4482 = vdwg.mxu0
    %4483 = vmatprep.subr.mxu0 %v3343
    %4484 = vmatpush1.msra.mxu0 %v3342
    %4485 = vmatprep.subr.mxu0 %v3335
    %4486 = vmatpush1.msra.mxu0 %v3334
    %4487 = vmatprep.subr.mxu0 %v3327
    %4488 = vmatpush1.msra.mxu0 %v3326
    %4489 = vmatprep.subr.mxu0 %v3319
    %4490 = vmatpush1.msra.mxu0 %v3318
    %4491 = vmatprep.subr.mxu0 %v3311
    %4492 = vmatpush1.msra.mxu0 %v3310
    %4493 = vmatprep.subr.mxu0 %v3303
    %4494 = vmatpush1.msra.mxu0 %v3302
    %4495 = vmatprep.subr.mxu0 %v3295
    %4496 = vmatpush1.msra.mxu0 %v3294
    %4497 = vmatprep.subr.mxu0 %v3287
    %4498 = vmatpush1.msra.mxu0 %v3286
    %4499 = vmatprep.subr.mxu0 %v3279
    %4500 = vmatpush1.msra.mxu0 %v3278
    %4501 = vmatprep.subr.mxu0 %v3271
    %4502 = vmatpush1.msra.mxu0 %v3270
    %4503 = vmatprep.subr.mxu0 %v3263
    %4504 = vmatpush1.msra.mxu0 %v3262
    %4505 = vmatprep.subr.mxu0 %v3255
    %4506 = vmatpush1.msra.mxu0 %v3254
    %4507 = vmatprep.subr.mxu0 %v3247
    %4508 = vmatpush1.msra.mxu0 %v3246
    %4509 = vmatprep.subr.mxu0 %v3239
    %4510 = vmatpush1.msra.mxu0 %v3238
    %4511 = vmatprep.subr.mxu0 %v3231
    %4512 = vmatpush1.msra.mxu0 %v3230
    %4513 = vmatprep.subr.mxu0 %v3223
    %4514 = vmatpush1.msra.mxu0 %v3222
    %4515 = vmatprep.subr.mxu0 %v3471
    %4516 = vmatpush2.msra.mxu0 %v3470
    %4517 = vmatprep.subr.mxu0 %v3463
    %4518 = vmatpush2.msra.mxu0 %v3462
    %4519 = vmatprep.subr.mxu0 %v3455
    %4520 = vmatpush2.msra.mxu0 %v3454
    %4521 = vmatprep.subr.mxu0 %v3447
    %4522 = vmatpush2.msra.mxu0 %v3446
    %4523 = vmatprep.subr.mxu0 %v3439
    %4524 = vmatpush2.msra.mxu0 %v3438
    %4525 = vmatprep.subr.mxu0 %v3431
    %4526 = vmatpush2.msra.mxu0 %v3430
    %4527 = vmatprep.subr.mxu0 %v3423
    %4528 = vmatpush2.msra.mxu0 %v3422
    %4529 = vmatprep.subr.mxu0 %v3415
    %4530 = vmatpush2.msra.mxu0 %v3414
    %4531 = vmatprep.subr.mxu0 %v3407
    %4532 = vmatpush2.msra.mxu0 %v3406
    %4533 = vmatprep.subr.mxu0 %v3399
    %4534 = vmatpush2.msra.mxu0 %v3398
    %4535 = vmatprep.subr.mxu0 %v3391
    %4536 = vmatpush2.msra.mxu0 %v3390
    %4537 = vmatprep.subr.mxu0 %v3383
    %4538 = vmatpush2.msra.mxu0 %v3382
    %4539 = vmatprep.subr.mxu0 %v3375
    %4540 = vmatpush2.msra.mxu0 %v3374
    %4541 = vmatprep.subr.mxu0 %v3367
    %4542 = vmatpush2.msra.mxu0 %v3366
    %4543 = vmatprep.subr.mxu0 %v3359
    %4544 = vmatpush2.msra.mxu0 %v3358
    %4545 = vmatprep.subr.mxu0 %v3351
    %4546 = vmatpush2.msra.mxu0 %v3350
    %4547 = vmatprep.mubr.f32.mxu0 %v2702
    %4548 = vmatmul.mubr.f32.gmra.mxu0 %v2701
    %v4549 = vpop.f32.mrf.mxu0
    %v4550 = vadd.f32 %v4479, %v4549
    %v4551 = vpop.f32.mrf.mxu0
    %v4552 = vadd.f32 %v4481, %v4551
    %4553 = vdwg.mxu0
    %4554 = vmatprep.subr.mxu0 %v3599
    %4555 = vmatpush1.msra.mxu0 %v3598
    %4556 = vmatprep.subr.mxu0 %v3591
    %4557 = vmatpush1.msra.mxu0 %v3590
    %4558 = vmatprep.subr.mxu0 %v3583
    %4559 = vmatpush1.msra.mxu0 %v3582
    %4560 = vmatprep.subr.mxu0 %v3575
    %4561 = vmatpush1.msra.mxu0 %v3574
    %4562 = vmatprep.subr.mxu0 %v3567
    %4563 = vmatpush1.msra.mxu0 %v3566
    %4564 = vmatprep.subr.mxu0 %v3559
    %4565 = vmatpush1.msra.mxu0 %v3558
    %4566 = vmatprep.subr.mxu0 %v3551
    %4567 = vmatpush1.msra.mxu0 %v3550
    %4568 = vmatprep.subr.mxu0 %v3543
    %4569 = vmatpush1.msra.mxu0 %v3542
    %4570 = vmatprep.subr.mxu0 %v3535
    %4571 = vmatpush1.msra.mxu0 %v3534
    %4572 = vmatprep.subr.mxu0 %v3527
    %4573 = vmatpush1.msra.mxu0 %v3526
    %4574 = vmatprep.subr.mxu0 %v3519
    %4575 = vmatpush1.msra.mxu0 %v3518
    %4576 = vmatprep.subr.mxu0 %v3511
    %4577 = vmatpush1.msra.mxu0 %v3510
    %4578 = vmatprep.subr.mxu0 %v3503
    %4579 = vmatpush1.msra.mxu0 %v3502
    %4580 = vmatprep.subr.mxu0 %v3495
    %4581 = vmatpush1.msra.mxu0 %v3494
    %4582 = vmatprep.subr.mxu0 %v3487
    %4583 = vmatpush1.msra.mxu0 %v3486
    %4584 = vmatprep.subr.mxu0 %v3479
    %4585 = vmatpush1.msra.mxu0 %v3478
    %4586 = vmatprep.subr.mxu0 %v3727
    %4587 = vmatpush2.msra.mxu0 %v3726
    %4588 = vmatprep.subr.mxu0 %v3719
    %4589 = vmatpush2.msra.mxu0 %v3718
    %4590 = vmatprep.subr.mxu0 %v3711
    %4591 = vmatpush2.msra.mxu0 %v3710
    %4592 = vmatprep.subr.mxu0 %v3703
    %4593 = vmatpush2.msra.mxu0 %v3702
    %4594 = vmatprep.subr.mxu0 %v3695
    %4595 = vmatpush2.msra.mxu0 %v3694
    %4596 = vmatprep.subr.mxu0 %v3687
    %4597 = vmatpush2.msra.mxu0 %v3686
    %4598 = vmatprep.subr.mxu0 %v3679
    %4599 = vmatpush2.msra.mxu0 %v3678
    %4600 = vmatprep.subr.mxu0 %v3671
    %4601 = vmatpush2.msra.mxu0 %v3670
    %4602 = vmatprep.subr.mxu0 %v3663
    %4603 = vmatpush2.msra.mxu0 %v3662
    %4604 = vmatprep.subr.mxu0 %v3655
    %4605 = vmatpush2.msra.mxu0 %v3654
    %4606 = vmatprep.subr.mxu0 %v3647
    %4607 = vmatpush2.msra.mxu0 %v3646
    %4608 = vmatprep.subr.mxu0 %v3639
    %4609 = vmatpush2.msra.mxu0 %v3638
    %4610 = vmatprep.subr.mxu0 %v3631
    %4611 = vmatpush2.msra.mxu0 %v3630
    %4612 = vmatprep.subr.mxu0 %v3623
    %4613 = vmatpush2.msra.mxu0 %v3622
    %4614 = vmatprep.subr.mxu0 %v3615
    %4615 = vmatpush2.msra.mxu0 %v3614
    %4616 = vmatprep.subr.mxu0 %v3607
    %4617 = vmatpush2.msra.mxu0 %v3606
    %4618 = vmatprep.mubr.f32.mxu0 %v2704
    %4619 = vmatmul.mubr.f32.gmra.mxu0 %v2703
    %v4620 = vpop.f32.mrf.mxu0
    %v4621 = vadd.f32 %v4550, %v4620
    %v4622 = vpop.f32.mrf.mxu0
    %v4623 = vadd.f32 %v4552, %v4622
    %4624 = vdwg.mxu0
    %4625 = vmatprep.subr.mxu0 %v2833
    %4626 = vmatpush1.msra.mxu0 %v2832
    %4627 = vmatprep.subr.mxu0 %v2825
    %4628 = vmatpush1.msra.mxu0 %v2824
    %4629 = vmatprep.subr.mxu0 %v2817
    %4630 = vmatpush1.msra.mxu0 %v2816
    %4631 = vmatprep.subr.mxu0 %v2809
    %4632 = vmatpush1.msra.mxu0 %v2808
    %4633 = vmatprep.subr.mxu0 %v2801
    %4634 = vmatpush1.msra.mxu0 %v2800
    %4635 = vmatprep.subr.mxu0 %v2793
    %4636 = vmatpush1.msra.mxu0 %v2792
    %4637 = vmatprep.subr.mxu0 %v2785
    %4638 = vmatpush1.msra.mxu0 %v2784
    %4639 = vmatprep.subr.mxu0 %v2777
    %4640 = vmatpush1.msra.mxu0 %v2776
    %4641 = vmatprep.subr.mxu0 %v2769
    %4642 = vmatpush1.msra.mxu0 %v2768
    %4643 = vmatprep.subr.mxu0 %v2761
    %4644 = vmatpush1.msra.mxu0 %v2760
    %4645 = vmatprep.subr.mxu0 %v2753
    %4646 = vmatpush1.msra.mxu0 %v2752
    %4647 = vmatprep.subr.mxu0 %v2745
    %4648 = vmatpush1.msra.mxu0 %v2744
    %4649 = vmatprep.subr.mxu0 %v2737
    %4650 = vmatpush1.msra.mxu0 %v2736
    %4651 = vmatprep.subr.mxu0 %v2729
    %4652 = vmatpush1.msra.mxu0 %v2728
    %4653 = vmatprep.subr.mxu0 %v2721
    %4654 = vmatpush1.msra.mxu0 %v2720
    %4655 = vmatprep.subr.mxu0 %v2713
    %4656 = vmatpush1.msra.mxu0 %v2712
    %4657 = vmatprep.subr.mxu0 %v2961
    %4658 = vmatpush2.msra.mxu0 %v2960
    %4659 = vmatprep.subr.mxu0 %v2953
    %4660 = vmatpush2.msra.mxu0 %v2952
    %4661 = vmatprep.subr.mxu0 %v2945
    %4662 = vmatpush2.msra.mxu0 %v2944
    %4663 = vmatprep.subr.mxu0 %v2937
    %4664 = vmatpush2.msra.mxu0 %v2936
    %4665 = vmatprep.subr.mxu0 %v2929
    %4666 = vmatpush2.msra.mxu0 %v2928
    %4667 = vmatprep.subr.mxu0 %v2921
    %4668 = vmatpush2.msra.mxu0 %v2920
    %4669 = vmatprep.subr.mxu0 %v2913
    %4670 = vmatpush2.msra.mxu0 %v2912
    %4671 = vmatprep.subr.mxu0 %v2905
    %4672 = vmatpush2.msra.mxu0 %v2904
    %4673 = vmatprep.subr.mxu0 %v2897
    %4674 = vmatpush2.msra.mxu0 %v2896
    %4675 = vmatprep.subr.mxu0 %v2889
    %4676 = vmatpush2.msra.mxu0 %v2888
    %4677 = vmatprep.subr.mxu0 %v2881
    %4678 = vmatpush2.msra.mxu0 %v2880
    %4679 = vmatprep.subr.mxu0 %v2873
    %4680 = vmatpush2.msra.mxu0 %v2872
    %4681 = vmatprep.subr.mxu0 %v2865
    %4682 = vmatpush2.msra.mxu0 %v2864
    %4683 = vmatprep.subr.mxu0 %v2857
    %4684 = vmatpush2.msra.mxu0 %v2856
    %4685 = vmatprep.subr.mxu0 %v2849
    %4686 = vmatpush2.msra.mxu0 %v2848
    %4687 = vmatprep.subr.mxu0 %v2841
    %4688 = vmatpush2.msra.mxu0 %v2840
    %4689 = vmatprep.mubr.f32.mxu0 %v2698
    %4690 = vmatmul.mubr.f32.gmra.mxu0 %v2697
    %v4691 = vpop.f32.mrf.mxu0
    %v4692 = vadd.f32 %v3760, %v4691
    %v4693 = vpop.f32.mrf.mxu0
    %v4694 = vadd.f32 %v3764, %v4693
    %4695 = vdwg.mxu0
    %4696 = vmatprep.subr.mxu0 %v3089
    %4697 = vmatpush1.msra.mxu0 %v3088
    %4698 = vmatprep.subr.mxu0 %v3081
    %4699 = vmatpush1.msra.mxu0 %v3080
    %4700 = vmatprep.subr.mxu0 %v3073
    %4701 = vmatpush1.msra.mxu0 %v3072
    %4702 = vmatprep.subr.mxu0 %v3065
    %4703 = vmatpush1.msra.mxu0 %v3064
    %4704 = vmatprep.subr.mxu0 %v3057
    %4705 = vmatpush1.msra.mxu0 %v3056
    %4706 = vmatprep.subr.mxu0 %v3049
    %4707 = vmatpush1.msra.mxu0 %v3048
    %4708 = vmatprep.subr.mxu0 %v3041
    %4709 = vmatpush1.msra.mxu0 %v3040
    %4710 = vmatprep.subr.mxu0 %v3033
    %4711 = vmatpush1.msra.mxu0 %v3032
    %4712 = vmatprep.subr.mxu0 %v3025
    %4713 = vmatpush1.msra.mxu0 %v3024
    %4714 = vmatprep.subr.mxu0 %v3017
    %4715 = vmatpush1.msra.mxu0 %v3016
    %4716 = vmatprep.subr.mxu0 %v3009
    %4717 = vmatpush1.msra.mxu0 %v3008
    %4718 = vmatprep.subr.mxu0 %v3001
    %4719 = vmatpush1.msra.mxu0 %v3000
    %4720 = vmatprep.subr.mxu0 %v2993
    %4721 = vmatpush1.msra.mxu0 %v2992
    %4722 = vmatprep.subr.mxu0 %v2985
    %4723 = vmatpush1.msra.mxu0 %v2984
    %4724 = vmatprep.subr.mxu0 %v2977
    %4725 = vmatpush1.msra.mxu0 %v2976
    %4726 = vmatprep.subr.mxu0 %v2969
    %4727 = vmatpush1.msra.mxu0 %v2968
    %4728 = vmatprep.subr.mxu0 %v3217
    %4729 = vmatpush2.msra.mxu0 %v3216
    %4730 = vmatprep.subr.mxu0 %v3209
    %4731 = vmatpush2.msra.mxu0 %v3208
    %4732 = vmatprep.subr.mxu0 %v3201
    %4733 = vmatpush2.msra.mxu0 %v3200
    %4734 = vmatprep.subr.mxu0 %v3193
    %4735 = vmatpush2.msra.mxu0 %v3192
    %4736 = vmatprep.subr.mxu0 %v3185
    %4737 = vmatpush2.msra.mxu0 %v3184
    %4738 = vmatprep.subr.mxu0 %v3177
    %4739 = vmatpush2.msra.mxu0 %v3176
    %4740 = vmatprep.subr.mxu0 %v3169
    %4741 = vmatpush2.msra.mxu0 %v3168
    %4742 = vmatprep.subr.mxu0 %v3161
    %4743 = vmatpush2.msra.mxu0 %v3160
    %4744 = vmatprep.subr.mxu0 %v3153
    %4745 = vmatpush2.msra.mxu0 %v3152
    %4746 = vmatprep.subr.mxu0 %v3145
    %4747 = vmatpush2.msra.mxu0 %v3144
    %4748 = vmatprep.subr.mxu0 %v3137
    %4749 = vmatpush2.msra.mxu0 %v3136
    %4750 = vmatprep.subr.mxu0 %v3129
    %4751 = vmatpush2.msra.mxu0 %v3128
    %4752 = vmatprep.subr.mxu0 %v3121
    %4753 = vmatpush2.msra.mxu0 %v3120
    %4754 = vmatprep.subr.mxu0 %v3113
    %4755 = vmatpush2.msra.mxu0 %v3112
    %4756 = vmatprep.subr.mxu0 %v3105
    %4757 = vmatpush2.msra.mxu0 %v3104
    %4758 = vmatprep.subr.mxu0 %v3097
    %4759 = vmatpush2.msra.mxu0 %v3096
    %4760 = vmatprep.mubr.f32.mxu0 %v2700
    %4761 = vmatmul.mubr.f32.gmra.mxu0 %v2699
    %v4762 = vpop.f32.mrf.mxu0
    %v4763 = vadd.f32 %v4692, %v4762
    %v4764 = vpop.f32.mrf.mxu0
    %v4765 = vadd.f32 %v4694, %v4764
    %4766 = vdwg.mxu0
    %4767 = vmatprep.subr.mxu0 %v3345
    %4768 = vmatpush1.msra.mxu0 %v3344
    %4769 = vmatprep.subr.mxu0 %v3337
    %4770 = vmatpush1.msra.mxu0 %v3336
    %4771 = vmatprep.subr.mxu0 %v3329
    %4772 = vmatpush1.msra.mxu0 %v3328
    %4773 = vmatprep.subr.mxu0 %v3321
    %4774 = vmatpush1.msra.mxu0 %v3320
    %4775 = vmatprep.subr.mxu0 %v3313
    %4776 = vmatpush1.msra.mxu0 %v3312
    %4777 = vmatprep.subr.mxu0 %v3305
    %4778 = vmatpush1.msra.mxu0 %v3304
    %4779 = vmatprep.subr.mxu0 %v3297
    %4780 = vmatpush1.msra.mxu0 %v3296
    %4781 = vmatprep.subr.mxu0 %v3289
    %4782 = vmatpush1.msra.mxu0 %v3288
    %4783 = vmatprep.subr.mxu0 %v3281
    %4784 = vmatpush1.msra.mxu0 %v3280
    %4785 = vmatprep.subr.mxu0 %v3273
    %4786 = vmatpush1.msra.mxu0 %v3272
    %4787 = vmatprep.subr.mxu0 %v3265
    %4788 = vmatpush1.msra.mxu0 %v3264
    %4789 = vmatprep.subr.mxu0 %v3257
    %4790 = vmatpush1.msra.mxu0 %v3256
    %4791 = vmatprep.subr.mxu0 %v3249
    %4792 = vmatpush1.msra.mxu0 %v3248
    %4793 = vmatprep.subr.mxu0 %v3241
    %4794 = vmatpush1.msra.mxu0 %v3240
    %4795 = vmatprep.subr.mxu0 %v3233
    %4796 = vmatpush1.msra.mxu0 %v3232
    %4797 = vmatprep.subr.mxu0 %v3225
    %4798 = vmatpush1.msra.mxu0 %v3224
    %4799 = vmatprep.subr.mxu0 %v3473
    %4800 = vmatpush2.msra.mxu0 %v3472
    %4801 = vmatprep.subr.mxu0 %v3465
    %4802 = vmatpush2.msra.mxu0 %v3464
    %4803 = vmatprep.subr.mxu0 %v3457
    %4804 = vmatpush2.msra.mxu0 %v3456
    %4805 = vmatprep.subr.mxu0 %v3449
    %4806 = vmatpush2.msra.mxu0 %v3448
    %4807 = vmatprep.subr.mxu0 %v3441
    %4808 = vmatpush2.msra.mxu0 %v3440
    %4809 = vmatprep.subr.mxu0 %v3433
    %4810 = vmatpush2.msra.mxu0 %v3432
    %4811 = vmatprep.subr.mxu0 %v3425
    %4812 = vmatpush2.msra.mxu0 %v3424
    %4813 = vmatprep.subr.mxu0 %v3417
    %4814 = vmatpush2.msra.mxu0 %v3416
    %4815 = vmatprep.subr.mxu0 %v3409
    %4816 = vmatpush2.msra.mxu0 %v3408
    %4817 = vmatprep.subr.mxu0 %v3401
    %4818 = vmatpush2.msra.mxu0 %v3400
    %4819 = vmatprep.subr.mxu0 %v3393
    %4820 = vmatpush2.msra.mxu0 %v3392
    %4821 = vmatprep.subr.mxu0 %v3385
    %4822 = vmatpush2.msra.mxu0 %v3384
    %4823 = vmatprep.subr.mxu0 %v3377
    %4824 = vmatpush2.msra.mxu0 %v3376
    %4825 = vmatprep.subr.mxu0 %v3369
    %4826 = vmatpush2.msra.mxu0 %v3368
    %4827 = vmatprep.subr.mxu0 %v3361
    %4828 = vmatpush2.msra.mxu0 %v3360
    %4829 = vmatprep.subr.mxu0 %v3353
    %4830 = vmatpush2.msra.mxu0 %v3352
    %4831 = vmatprep.mubr.f32.mxu0 %v2702
    %4832 = vmatmul.mubr.f32.gmra.mxu0 %v2701
    %v4833 = vpop.f32.mrf.mxu0
    %v4834 = vadd.f32 %v4763, %v4833
    %v4835 = vpop.f32.mrf.mxu0
    %v4836 = vadd.f32 %v4765, %v4835
    %4837 = vdwg.mxu0
    %4838 = vmatprep.subr.mxu0 %v3601
    %4839 = vmatpush1.msra.mxu0 %v3600
    %4840 = vmatprep.subr.mxu0 %v3593
    %4841 = vmatpush1.msra.mxu0 %v3592
    %4842 = vmatprep.subr.mxu0 %v3585
    %4843 = vmatpush1.msra.mxu0 %v3584
    %4844 = vmatprep.subr.mxu0 %v3577
    %4845 = vmatpush1.msra.mxu0 %v3576
    %4846 = vmatprep.subr.mxu0 %v3569
    %4847 = vmatpush1.msra.mxu0 %v3568
    %4848 = vmatprep.subr.mxu0 %v3561
    %4849 = vmatpush1.msra.mxu0 %v3560
    %4850 = vmatprep.subr.mxu0 %v3553
    %4851 = vmatpush1.msra.mxu0 %v3552
    %4852 = vmatprep.subr.mxu0 %v3545
    %4853 = vmatpush1.msra.mxu0 %v3544
    %4854 = vmatprep.subr.mxu0 %v3537
    %4855 = vmatpush1.msra.mxu0 %v3536
    %4856 = vmatprep.subr.mxu0 %v3529
    %4857 = vmatpush1.msra.mxu0 %v3528
    %4858 = vmatprep.subr.mxu0 %v3521
    %4859 = vmatpush1.msra.mxu0 %v3520
    %4860 = vmatprep.subr.mxu0 %v3513
    %4861 = vmatpush1.msra.mxu0 %v3512
    %4862 = vmatprep.subr.mxu0 %v3505
    %4863 = vmatpush1.msra.mxu0 %v3504
    %4864 = vmatprep.subr.mxu0 %v3497
    %4865 = vmatpush1.msra.mxu0 %v3496
    %4866 = vmatprep.subr.mxu0 %v3489
    %4867 = vmatpush1.msra.mxu0 %v3488
    %4868 = vmatprep.subr.mxu0 %v3481
    %4869 = vmatpush1.msra.mxu0 %v3480
    %4870 = vmatprep.subr.mxu0 %v3729
    %4871 = vmatpush2.msra.mxu0 %v3728
    %4872 = vmatprep.subr.mxu0 %v3721
    %4873 = vmatpush2.msra.mxu0 %v3720
    %4874 = vmatprep.subr.mxu0 %v3713
    %4875 = vmatpush2.msra.mxu0 %v3712
    %4876 = vmatprep.subr.mxu0 %v3705
    %4877 = vmatpush2.msra.mxu0 %v3704
    %4878 = vmatprep.subr.mxu0 %v3697
    %4879 = vmatpush2.msra.mxu0 %v3696
    %4880 = vmatprep.subr.mxu0 %v3689
    %4881 = vmatpush2.msra.mxu0 %v3688
    %4882 = vmatprep.subr.mxu0 %v3681
    %4883 = vmatpush2.msra.mxu0 %v3680
    %4884 = vmatprep.subr.mxu0 %v3673
    %4885 = vmatpush2.msra.mxu0 %v3672
    %4886 = vmatprep.subr.mxu0 %v3665
    %4887 = vmatpush2.msra.mxu0 %v3664
    %4888 = vmatprep.subr.mxu0 %v3657
    %4889 = vmatpush2.msra.mxu0 %v3656
    %4890 = vmatprep.subr.mxu0 %v3649
    %4891 = vmatpush2.msra.mxu0 %v3648
    %4892 = vmatprep.subr.mxu0 %v3641
    %4893 = vmatpush2.msra.mxu0 %v3640
    %4894 = vmatprep.subr.mxu0 %v3633
    %4895 = vmatpush2.msra.mxu0 %v3632
    %4896 = vmatprep.subr.mxu0 %v3625
    %4897 = vmatpush2.msra.mxu0 %v3624
    %4898 = vmatprep.subr.mxu0 %v3617
    %4899 = vmatpush2.msra.mxu0 %v3616
    %4900 = vmatprep.subr.mxu0 %v3609
    %4901 = vmatpush2.msra.mxu0 %v3608
    %4902 = vmatprep.mubr.f32.mxu0 %v2704
    %4903 = vmatmul.mubr.f32.gmra.mxu0 %v2703
    %v4904 = vpop.f32.mrf.mxu0
    %v4905 = vadd.f32 %v4834, %v4904
    %v4906 = vpop.f32.mrf.mxu0
    %v4907 = vadd.f32 %v4836, %v4906
    %4908 = vdwg.mxu0
    %v4909 = vmax.f32 %v4053, 0.0
    %v4910 = vmax.f32 %v4055, 0.0
    %v4911 = vmax.f32 %v4337, 0.0
    %v4912 = vmax.f32 %v4339, 0.0
    %v4913 = vmax.f32 %v4621, 0.0
    %v4914 = vmax.f32 %v4623, 0.0
    %v4915 = vmax.f32 %v4905, 0.0
    %v4916 = vmax.f32 %v4907, 0.0
    %v4917 = vld [vmem:[#allocation11] sm:$0xff]
    %v4918 = vld [vmem:[#allocation11 + $0x8] sm:$0xff]
    %v4919 = vld [vmem:[#allocation11 + $0x10] sm:$0xff]
    %v4920 = vld [vmem:[#allocation11 + $0x18] sm:$0xff]
    %v4921 = vld [vmem:[#allocation11 + $0x20] sm:$0xff]
    %v4922 = vld [vmem:[#allocation11 + $0x28] sm:$0xff]
    %v4923 = vld [vmem:[#allocation11 + $0x30] sm:$0xff]
    %v4924 = vld [vmem:[#allocation11 + $0x38] sm:$0xff]
    %v4925 = vld [vmem:[#allocation11 + $0x40] sm:$0xff]
    %v4926 = vld [vmem:[#allocation11 + $0x48] sm:$0xff]
    %v4927 = vld [vmem:[#allocation11 + $0x50] sm:$0xff]
    %v4928 = vld [vmem:[#allocation11 + $0x58] sm:$0xff]
    %v4929 = vld [vmem:[#allocation11 + $0x60] sm:$0xff]
    %v4930 = vld [vmem:[#allocation11 + $0x68] sm:$0xff]
    %v4931 = vld [vmem:[#allocation11 + $0x70] sm:$0xff]
    %v4932 = vld [vmem:[#allocation11 + $0x78] sm:$0xff]
    %v4933 = vld [vmem:[#allocation11 + $0x80] sm:$0xff]
    %v4934 = vld [vmem:[#allocation11 + $0x88] sm:$0xff]
    %v4935 = vld [vmem:[#allocation11 + $0x90] sm:$0xff]
    %v4936 = vld [vmem:[#allocation11 + $0x98] sm:$0xff]
    %v4937 = vld [vmem:[#allocation11 + $0xa0] sm:$0xff]
    %v4938 = vld [vmem:[#allocation11 + $0xa8] sm:$0xff]
    %v4939 = vld [vmem:[#allocation11 + $0xb0] sm:$0xff]
    %v4940 = vld [vmem:[#allocation11 + $0xb8] sm:$0xff]
    %v4941 = vld [vmem:[#allocation11 + $0xc0] sm:$0xff]
    %v4942 = vld [vmem:[#allocation11 + $0xc8] sm:$0xff]
    %v4943 = vld [vmem:[#allocation11 + $0xd0] sm:$0xff]
    %v4944 = vld [vmem:[#allocation11 + $0xd8] sm:$0xff]
    %v4945 = vld [vmem:[#allocation11 + $0xe0] sm:$0xff]
    %v4946 = vld [vmem:[#allocation11 + $0xe8] sm:$0xff]
    %v4947 = vld [vmem:[#allocation11 + $0xf0] sm:$0xff]
    %v4948 = vld [vmem:[#allocation11 + $0xf8] sm:$0xff]
    %v4949 = vld [vmem:[#allocation11 + $0x100] sm:$0xff]
    %v4950 = vld [vmem:[#allocation11 + $0x108] sm:$0xff]
    %v4951 = vld [vmem:[#allocation11 + $0x110] sm:$0xff]
    %v4952 = vld [vmem:[#allocation11 + $0x118] sm:$0xff]
    %v4953 = vld [vmem:[#allocation11 + $0x120] sm:$0xff]
    %v4954 = vld [vmem:[#allocation11 + $0x128] sm:$0xff]
    %v4955 = vld [vmem:[#allocation11 + $0x130] sm:$0xff]
    %v4956 = vld [vmem:[#allocation11 + $0x138] sm:$0xff]
    %v4957 = vld [vmem:[#allocation11 + $0x140] sm:$0xff]
    %v4958 = vld [vmem:[#allocation11 + $0x148] sm:$0xff]
    %v4959 = vld [vmem:[#allocation11 + $0x150] sm:$0xff]
    %v4960 = vld [vmem:[#allocation11 + $0x158] sm:$0xff]
    %v4961 = vld [vmem:[#allocation11 + $0x160] sm:$0xff]
    %v4962 = vld [vmem:[#allocation11 + $0x168] sm:$0xff]
    %v4963 = vld [vmem:[#allocation11 + $0x170] sm:$0xff]
    %v4964 = vld [vmem:[#allocation11 + $0x178] sm:$0xff]
    %v4965 = vld [vmem:[#allocation11 + $0x180] sm:$0xff]
    %v4966 = vld [vmem:[#allocation11 + $0x188] sm:$0xff]
    %v4967 = vld [vmem:[#allocation11 + $0x190] sm:$0xff]
    %v4968 = vld [vmem:[#allocation11 + $0x198] sm:$0xff]
    %v4969 = vld [vmem:[#allocation11 + $0x1a0] sm:$0xff]
    %v4970 = vld [vmem:[#allocation11 + $0x1a8] sm:$0xff]
    %v4971 = vld [vmem:[#allocation11 + $0x1b0] sm:$0xff]
    %v4972 = vld [vmem:[#allocation11 + $0x1b8] sm:$0xff]
    %v4973 = vld [vmem:[#allocation11 + $0x1c0] sm:$0xff]
    %v4974 = vld [vmem:[#allocation11 + $0x1c8] sm:$0xff]
    %v4975 = vld [vmem:[#allocation11 + $0x1d0] sm:$0xff]
    %v4976 = vld [vmem:[#allocation11 + $0x1d8] sm:$0xff]
    %v4977 = vld [vmem:[#allocation11 + $0x1e0] sm:$0xff]
    %v4978 = vld [vmem:[#allocation11 + $0x1e8] sm:$0xff]
    %v4979 = vld [vmem:[#allocation11 + $0x1f0] sm:$0xff]
    %v4980 = vld [vmem:[#allocation11 + $0x1f8] sm:$0xff]
    %v4981 = vld [vmem:[#allocation11 + $0x200] sm:$0xff]
    %v4982 = vld [vmem:[#allocation11 + $0x208] sm:$0xff]
    %v4983 = vld [vmem:[#allocation11 + $0x210] sm:$0xff]
    %v4984 = vld [vmem:[#allocation11 + $0x218] sm:$0xff]
    %v4985 = vld [vmem:[#allocation11 + $0x220] sm:$0xff]
    %v4986 = vld [vmem:[#allocation11 + $0x228] sm:$0xff]
    %v4987 = vld [vmem:[#allocation11 + $0x230] sm:$0xff]
    %v4988 = vld [vmem:[#allocation11 + $0x238] sm:$0xff]
    %v4989 = vld [vmem:[#allocation11 + $0x240] sm:$0xff]
    %v4990 = vld [vmem:[#allocation11 + $0x248] sm:$0xff]
    %v4991 = vld [vmem:[#allocation11 + $0x250] sm:$0xff]
    %v4992 = vld [vmem:[#allocation11 + $0x258] sm:$0xff]
    %v4993 = vld [vmem:[#allocation11 + $0x260] sm:$0xff]
    %v4994 = vld [vmem:[#allocation11 + $0x268] sm:$0xff]
    %v4995 = vld [vmem:[#allocation11 + $0x270] sm:$0xff]
    %v4996 = vld [vmem:[#allocation11 + $0x278] sm:$0xff]
    %v4997 = vld [vmem:[#allocation11 + $0x280] sm:$0xff]
    %v4998 = vld [vmem:[#allocation11 + $0x288] sm:$0xff]
    %v4999 = vld [vmem:[#allocation11 + $0x290] sm:$0xff]
    %v5000 = vld [vmem:[#allocation11 + $0x298] sm:$0xff]
    %v5001 = vld [vmem:[#allocation11 + $0x2a0] sm:$0xff]
    %v5002 = vld [vmem:[#allocation11 + $0x2a8] sm:$0xff]
    %v5003 = vld [vmem:[#allocation11 + $0x2b0] sm:$0xff]
    %v5004 = vld [vmem:[#allocation11 + $0x2b8] sm:$0xff]
    %v5005 = vld [vmem:[#allocation11 + $0x2c0] sm:$0xff]
    %v5006 = vld [vmem:[#allocation11 + $0x2c8] sm:$0xff]
    %v5007 = vld [vmem:[#allocation11 + $0x2d0] sm:$0xff]
    %v5008 = vld [vmem:[#allocation11 + $0x2d8] sm:$0xff]
    %v5009 = vld [vmem:[#allocation11 + $0x2e0] sm:$0xff]
    %v5010 = vld [vmem:[#allocation11 + $0x2e8] sm:$0xff]
    %v5011 = vld [vmem:[#allocation11 + $0x2f0] sm:$0xff]
    %v5012 = vld [vmem:[#allocation11 + $0x2f8] sm:$0xff]
    %v5013 = vld [vmem:[#allocation11 + $0x300] sm:$0xff]
    %v5014 = vld [vmem:[#allocation11 + $0x308] sm:$0xff]
    %v5015 = vld [vmem:[#allocation11 + $0x310] sm:$0xff]
    %v5016 = vld [vmem:[#allocation11 + $0x318] sm:$0xff]
    %v5017 = vld [vmem:[#allocation11 + $0x320] sm:$0xff]
    %v5018 = vld [vmem:[#allocation11 + $0x328] sm:$0xff]
    %v5019 = vld [vmem:[#allocation11 + $0x330] sm:$0xff]
    %v5020 = vld [vmem:[#allocation11 + $0x338] sm:$0xff]
    %v5021 = vld [vmem:[#allocation11 + $0x340] sm:$0xff]
    %v5022 = vld [vmem:[#allocation11 + $0x348] sm:$0xff]
    %v5023 = vld [vmem:[#allocation11 + $0x350] sm:$0xff]
    %v5024 = vld [vmem:[#allocation11 + $0x358] sm:$0xff]
    %v5025 = vld [vmem:[#allocation11 + $0x360] sm:$0xff]
    %v5026 = vld [vmem:[#allocation11 + $0x368] sm:$0xff]
    %v5027 = vld [vmem:[#allocation11 + $0x370] sm:$0xff]
    %v5028 = vld [vmem:[#allocation11 + $0x378] sm:$0xff]
    %v5029 = vld [vmem:[#allocation11 + $0x380] sm:$0xff]
    %v5030 = vld [vmem:[#allocation11 + $0x388] sm:$0xff]
    %v5031 = vld [vmem:[#allocation11 + $0x390] sm:$0xff]
    %v5032 = vld [vmem:[#allocation11 + $0x398] sm:$0xff]
    %v5033 = vld [vmem:[#allocation11 + $0x3a0] sm:$0xff]
    %v5034 = vld [vmem:[#allocation11 + $0x3a8] sm:$0xff]
    %v5035 = vld [vmem:[#allocation11 + $0x3b0] sm:$0xff]
    %v5036 = vld [vmem:[#allocation11 + $0x3b8] sm:$0xff]
    %v5037 = vld [vmem:[#allocation11 + $0x3c0] sm:$0xff]
    %v5038 = vld [vmem:[#allocation11 + $0x3c8] sm:$0xff]
    %v5039 = vld [vmem:[#allocation11 + $0x3d0] sm:$0xff]
    %v5040 = vld [vmem:[#allocation11 + $0x3d8] sm:$0xff]
    %v5041 = vld [vmem:[#allocation11 + $0x3e0] sm:$0xff]
    %v5042 = vld [vmem:[#allocation11 + $0x3e8] sm:$0xff]
    %v5043 = vld [vmem:[#allocation11 + $0x3f0] sm:$0xff]
    %v5044 = vld [vmem:[#allocation11 + $0x3f8] sm:$0xff]
    %v5045 = vld [vmem:[#allocation13] sm:$0x1]
    %v5047 = vlaneseq
    %v5048 = vshrl.u32 %v5047, 7
    %v5049 = vsub.s32 0, %v5048
    %v5050 = vrot.slane %v5045, %v5049
    %5052 = vmatprep.subr.mxu0 0.0
    %5053 = vmatpush1.msra.mxu0 %v4932
    %5054 = vmatprep.subr.mxu0 0.0
    %5055 = vmatpush1.msra.mxu0 %v4931
    %5056 = vmatprep.subr.mxu0 0.0
    %5057 = vmatpush1.msra.mxu0 %v4930
    %5058 = vmatprep.subr.mxu0 0.0
    %5059 = vmatpush1.msra.mxu0 %v4929
    %5060 = vmatprep.subr.mxu0 0.0
    %5061 = vmatpush1.msra.mxu0 %v4928
    %5062 = vmatprep.subr.mxu0 0.0
    %5063 = vmatpush1.msra.mxu0 %v4927
    %5064 = vmatprep.subr.mxu0 0.0
    %5065 = vmatpush1.msra.mxu0 %v4926
    %5066 = vmatprep.subr.mxu0 0.0
    %5067 = vmatpush1.msra.mxu0 %v4925
    %5068 = vmatprep.subr.mxu0 0.0
    %5069 = vmatpush1.msra.mxu0 %v4924
    %5070 = vmatprep.subr.mxu0 0.0
    %5071 = vmatpush1.msra.mxu0 %v4923
    %5072 = vmatprep.subr.mxu0 0.0
    %5073 = vmatpush1.msra.mxu0 %v4922
    %5074 = vmatprep.subr.mxu0 0.0
    %5075 = vmatpush1.msra.mxu0 %v4921
    %5076 = vmatprep.subr.mxu0 0.0
    %5077 = vmatpush1.msra.mxu0 %v4920
    %5078 = vmatprep.subr.mxu0 0.0
    %5079 = vmatpush1.msra.mxu0 %v4919
    %5080 = vmatprep.subr.mxu0 0.0
    %5081 = vmatpush1.msra.mxu0 %v4918
    %5082 = vmatprep.subr.mxu0 0.0
    %5083 = vmatpush1.msra.mxu0 %v4917
    %5084 = vmatprep.subr.mxu0 0.0
    %5085 = vmatpush2.msra.mxu0 %v4948
    %5086 = vmatprep.subr.mxu0 0.0
    %5087 = vmatpush2.msra.mxu0 %v4947
    %5088 = vmatprep.subr.mxu0 0.0
    %5089 = vmatpush2.msra.mxu0 %v4946
    %5090 = vmatprep.subr.mxu0 0.0
    %5091 = vmatpush2.msra.mxu0 %v4945
    %5092 = vmatprep.subr.mxu0 0.0
    %5093 = vmatpush2.msra.mxu0 %v4944
    %5094 = vmatprep.subr.mxu0 0.0
    %5095 = vmatpush2.msra.mxu0 %v4943
    %5096 = vmatprep.subr.mxu0 0.0
    %5097 = vmatpush2.msra.mxu0 %v4942
    %5098 = vmatprep.subr.mxu0 0.0
    %5099 = vmatpush2.msra.mxu0 %v4941
    %5100 = vmatprep.subr.mxu0 0.0
    %5101 = vmatpush2.msra.mxu0 %v4940
    %5102 = vmatprep.subr.mxu0 0.0
    %5103 = vmatpush2.msra.mxu0 %v4939
    %5104 = vmatprep.subr.mxu0 0.0
    %5105 = vmatpush2.msra.mxu0 %v4938
    %5106 = vmatprep.subr.mxu0 0.0
    %5107 = vmatpush2.msra.mxu0 %v4937
    %5108 = vmatprep.subr.mxu0 0.0
    %5109 = vmatpush2.msra.mxu0 %v4936
    %5110 = vmatprep.subr.mxu0 0.0
    %5111 = vmatpush2.msra.mxu0 %v4935
    %5112 = vmatprep.subr.mxu0 0.0
    %5113 = vmatpush2.msra.mxu0 %v4934
    %5114 = vmatprep.subr.mxu0 0.0
    %5115 = vmatpush2.msra.mxu0 %v4933
    %5116 = vmatprep.mubr.f32.mxu0 %v4910
    %5117 = vmatmul.mubr.f32.gmra.mxu0 %v4909
    %v5118 = vpop.f32.mrf.mxu0
    %v5119 = vadd.f32 %v5050, %v5118
    %v5120 = vpop.f32.mrf.mxu0
    %5121 = vdwg.mxu0
    %5122 = vmatprep.subr.mxu0 0.0
    %5123 = vmatpush1.msra.mxu0 %v4964
    %5124 = vmatprep.subr.mxu0 0.0
    %5125 = vmatpush1.msra.mxu0 %v4963
    %5126 = vmatprep.subr.mxu0 0.0
    %5127 = vmatpush1.msra.mxu0 %v4962
    %5128 = vmatprep.subr.mxu0 0.0
    %5129 = vmatpush1.msra.mxu0 %v4961
    %5130 = vmatprep.subr.mxu0 0.0
    %5131 = vmatpush1.msra.mxu0 %v4960
    %5132 = vmatprep.subr.mxu0 0.0
    %5133 = vmatpush1.msra.mxu0 %v4959
    %5134 = vmatprep.subr.mxu0 0.0
    %5135 = vmatpush1.msra.mxu0 %v4958
    %5136 = vmatprep.subr.mxu0 0.0
    %5137 = vmatpush1.msra.mxu0 %v4957
    %5138 = vmatprep.subr.mxu0 0.0
    %5139 = vmatpush1.msra.mxu0 %v4956
    %5140 = vmatprep.subr.mxu0 0.0
    %5141 = vmatpush1.msra.mxu0 %v4955
    %5142 = vmatprep.subr.mxu0 0.0
    %5143 = vmatpush1.msra.mxu0 %v4954
    %5144 = vmatprep.subr.mxu0 0.0
    %5145 = vmatpush1.msra.mxu0 %v4953
    %5146 = vmatprep.subr.mxu0 0.0
    %5147 = vmatpush1.msra.mxu0 %v4952
    %5148 = vmatprep.subr.mxu0 0.0
    %5149 = vmatpush1.msra.mxu0 %v4951
    %5150 = vmatprep.subr.mxu0 0.0
    %5151 = vmatpush1.msra.mxu0 %v4950
    %5152 = vmatprep.subr.mxu0 0.0
    %5153 = vmatpush1.msra.mxu0 %v4949
    %5154 = vmatprep.subr.mxu0 0.0
    %5155 = vmatpush2.msra.mxu0 %v4980
    %5156 = vmatprep.subr.mxu0 0.0
    %5157 = vmatpush2.msra.mxu0 %v4979
    %5158 = vmatprep.subr.mxu0 0.0
    %5159 = vmatpush2.msra.mxu0 %v4978
    %5160 = vmatprep.subr.mxu0 0.0
    %5161 = vmatpush2.msra.mxu0 %v4977
    %5162 = vmatprep.subr.mxu0 0.0
    %5163 = vmatpush2.msra.mxu0 %v4976
    %5164 = vmatprep.subr.mxu0 0.0
    %5165 = vmatpush2.msra.mxu0 %v4975
    %5166 = vmatprep.subr.mxu0 0.0
    %5167 = vmatpush2.msra.mxu0 %v4974
    %5168 = vmatprep.subr.mxu0 0.0
    %5169 = vmatpush2.msra.mxu0 %v4973
    %5170 = vmatprep.subr.mxu0 0.0
    %5171 = vmatpush2.msra.mxu0 %v4972
    %5172 = vmatprep.subr.mxu0 0.0
    %5173 = vmatpush2.msra.mxu0 %v4971
    %5174 = vmatprep.subr.mxu0 0.0
    %5175 = vmatpush2.msra.mxu0 %v4970
    %5176 = vmatprep.subr.mxu0 0.0
    %5177 = vmatpush2.msra.mxu0 %v4969
    %5178 = vmatprep.subr.mxu0 0.0
    %5179 = vmatpush2.msra.mxu0 %v4968
    %5180 = vmatprep.subr.mxu0 0.0
    %5181 = vmatpush2.msra.mxu0 %v4967
    %5182 = vmatprep.subr.mxu0 0.0
    %5183 = vmatpush2.msra.mxu0 %v4966
    %5184 = vmatprep.subr.mxu0 0.0
    %5185 = vmatpush2.msra.mxu0 %v4965
    %5186 = vmatprep.mubr.f32.mxu0 %v4912
    %5187 = vmatmul.mubr.f32.gmra.mxu0 %v4911
    %v5188 = vpop.f32.mrf.mxu0
    %v5189 = vadd.f32 %v5119, %v5188
    %v5190 = vpop.f32.mrf.mxu0
    %5191 = vdwg.mxu0
    %5192 = vmatprep.subr.mxu0 0.0
    %5193 = vmatpush1.msra.mxu0 %v4996
    %5194 = vmatprep.subr.mxu0 0.0
    %5195 = vmatpush1.msra.mxu0 %v4995
    %5196 = vmatprep.subr.mxu0 0.0
    %5197 = vmatpush1.msra.mxu0 %v4994
    %5198 = vmatprep.subr.mxu0 0.0
    %5199 = vmatpush1.msra.mxu0 %v4993
    %5200 = vmatprep.subr.mxu0 0.0
    %5201 = vmatpush1.msra.mxu0 %v4992
    %5202 = vmatprep.subr.mxu0 0.0
    %5203 = vmatpush1.msra.mxu0 %v4991
    %5204 = vmatprep.subr.mxu0 0.0
    %5205 = vmatpush1.msra.mxu0 %v4990
    %5206 = vmatprep.subr.mxu0 0.0
    %5207 = vmatpush1.msra.mxu0 %v4989
    %5208 = vmatprep.subr.mxu0 0.0
    %5209 = vmatpush1.msra.mxu0 %v4988
    %5210 = vmatprep.subr.mxu0 0.0
    %5211 = vmatpush1.msra.mxu0 %v4987
    %5212 = vmatprep.subr.mxu0 0.0
    %5213 = vmatpush1.msra.mxu0 %v4986
    %5214 = vmatprep.subr.mxu0 0.0
    %5215 = vmatpush1.msra.mxu0 %v4985
    %5216 = vmatprep.subr.mxu0 0.0
    %5217 = vmatpush1.msra.mxu0 %v4984
    %5218 = vmatprep.subr.mxu0 0.0
    %5219 = vmatpush1.msra.mxu0 %v4983
    %5220 = vmatprep.subr.mxu0 0.0
    %5221 = vmatpush1.msra.mxu0 %v4982
    %5222 = vmatprep.subr.mxu0 0.0
    %5223 = vmatpush1.msra.mxu0 %v4981
    %5224 = vmatprep.subr.mxu0 0.0
    %5225 = vmatpush2.msra.mxu0 %v5012
    %5226 = vmatprep.subr.mxu0 0.0
    %5227 = vmatpush2.msra.mxu0 %v5011
    %5228 = vmatprep.subr.mxu0 0.0
    %5229 = vmatpush2.msra.mxu0 %v5010
    %5230 = vmatprep.subr.mxu0 0.0
    %5231 = vmatpush2.msra.mxu0 %v5009
    %5232 = vmatprep.subr.mxu0 0.0
    %5233 = vmatpush2.msra.mxu0 %v5008
    %5234 = vmatprep.subr.mxu0 0.0
    %5235 = vmatpush2.msra.mxu0 %v5007
    %5236 = vmatprep.subr.mxu0 0.0
    %5237 = vmatpush2.msra.mxu0 %v5006
    %5238 = vmatprep.subr.mxu0 0.0
    %5239 = vmatpush2.msra.mxu0 %v5005
    %5240 = vmatprep.subr.mxu0 0.0
    %5241 = vmatpush2.msra.mxu0 %v5004
    %5242 = vmatprep.subr.mxu0 0.0
    %5243 = vmatpush2.msra.mxu0 %v5003
    %5244 = vmatprep.subr.mxu0 0.0
    %5245 = vmatpush2.msra.mxu0 %v5002
    %5246 = vmatprep.subr.mxu0 0.0
    %5247 = vmatpush2.msra.mxu0 %v5001
    %5248 = vmatprep.subr.mxu0 0.0
    %5249 = vmatpush2.msra.mxu0 %v5000
    %5250 = vmatprep.subr.mxu0 0.0
    %5251 = vmatpush2.msra.mxu0 %v4999
    %5252 = vmatprep.subr.mxu0 0.0
    %5253 = vmatpush2.msra.mxu0 %v4998
    %5254 = vmatprep.subr.mxu0 0.0
    %5255 = vmatpush2.msra.mxu0 %v4997
    %5256 = vmatprep.mubr.f32.mxu0 %v4914
    %5257 = vmatmul.mubr.f32.gmra.mxu0 %v4913
    %v5258 = vpop.f32.mrf.mxu0
    %v5259 = vadd.f32 %v5189, %v5258
    %v5260 = vpop.f32.mrf.mxu0
    %5261 = vdwg.mxu0
    %5262 = vmatprep.subr.mxu0 0.0
    %5263 = vmatpush1.msra.mxu0 %v5028
    %5264 = vmatprep.subr.mxu0 0.0
    %5265 = vmatpush1.msra.mxu0 %v5027
    %5266 = vmatprep.subr.mxu0 0.0
    %5267 = vmatpush1.msra.mxu0 %v5026
    %5268 = vmatprep.subr.mxu0 0.0
    %5269 = vmatpush1.msra.mxu0 %v5025
    %5270 = vmatprep.subr.mxu0 0.0
    %5271 = vmatpush1.msra.mxu0 %v5024
    %5272 = vmatprep.subr.mxu0 0.0
    %5273 = vmatpush1.msra.mxu0 %v5023
    %5274 = vmatprep.subr.mxu0 0.0
    %5275 = vmatpush1.msra.mxu0 %v5022
    %5276 = vmatprep.subr.mxu0 0.0
    %5277 = vmatpush1.msra.mxu0 %v5021
    %5278 = vmatprep.subr.mxu0 0.0
    %5279 = vmatpush1.msra.mxu0 %v5020
    %5280 = vmatprep.subr.mxu0 0.0
    %5281 = vmatpush1.msra.mxu0 %v5019
    %5282 = vmatprep.subr.mxu0 0.0
    %5283 = vmatpush1.msra.mxu0 %v5018
    %5284 = vmatprep.subr.mxu0 0.0
    %5285 = vmatpush1.msra.mxu0 %v5017
    %5286 = vmatprep.subr.mxu0 0.0
    %5287 = vmatpush1.msra.mxu0 %v5016
    %5288 = vmatprep.subr.mxu0 0.0
    %5289 = vmatpush1.msra.mxu0 %v5015
    %5290 = vmatprep.subr.mxu0 0.0
    %5291 = vmatpush1.msra.mxu0 %v5014
    %5292 = vmatprep.subr.mxu0 0.0
    %5293 = vmatpush1.msra.mxu0 %v5013
    %5294 = vmatprep.subr.mxu0 0.0
    %5295 = vmatpush2.msra.mxu0 %v5044
    %5296 = vmatprep.subr.mxu0 0.0
    %5297 = vmatpush2.msra.mxu0 %v5043
    %5298 = vmatprep.subr.mxu0 0.0
    %5299 = vmatpush2.msra.mxu0 %v5042
    %5300 = vmatprep.subr.mxu0 0.0
    %5301 = vmatpush2.msra.mxu0 %v5041
    %5302 = vmatprep.subr.mxu0 0.0
    %5303 = vmatpush2.msra.mxu0 %v5040
    %5304 = vmatprep.subr.mxu0 0.0
    %5305 = vmatpush2.msra.mxu0 %v5039
    %5306 = vmatprep.subr.mxu0 0.0
    %5307 = vmatpush2.msra.mxu0 %v5038
    %5308 = vmatprep.subr.mxu0 0.0
    %5309 = vmatpush2.msra.mxu0 %v5037
    %5310 = vmatprep.subr.mxu0 0.0
    %5311 = vmatpush2.msra.mxu0 %v5036
    %5312 = vmatprep.subr.mxu0 0.0
    %5313 = vmatpush2.msra.mxu0 %v5035
    %5314 = vmatprep.subr.mxu0 0.0
    %5315 = vmatpush2.msra.mxu0 %v5034
    %5316 = vmatprep.subr.mxu0 0.0
    %5317 = vmatpush2.msra.mxu0 %v5033
    %5318 = vmatprep.subr.mxu0 0.0
    %5319 = vmatpush2.msra.mxu0 %v5032
    %5320 = vmatprep.subr.mxu0 0.0
    %5321 = vmatpush2.msra.mxu0 %v5031
    %5322 = vmatprep.subr.mxu0 0.0
    %5323 = vmatpush2.msra.mxu0 %v5030
    %5324 = vmatprep.subr.mxu0 0.0
    %5325 = vmatpush2.msra.mxu0 %v5029
    %5326 = vmatprep.mubr.f32.mxu0 %v4916
    %5327 = vmatmul.mubr.f32.gmra.mxu0 %v4915
    %v5328 = vpop.f32.mrf.mxu0
    %v5329 = vadd.f32 %v5259, %v5328
    %v5330 = vpop.f32.mrf.mxu0
    %5331 = vdwg.mxu0
    %5332 = vst [vmem:[#allocation14] sm:$0x3] %v5329
    // Predicated region
    $region58: #{tpu_custom_call.1} parent=1 // pred_check
      _
    $region59: #{tpu_custom_call.1} parent=1 // pred_check_branch
      %5334 = sbr.rel (0) target = $region61
    $region60: #{tpu_custom_call.1} parent=1 // pred_region
      %s5336 = ssub.s32 32, 32
      %5337 = vsyncadd [#allocation4], %s5336
      %s5339 = sshll.u32 [#allocation14], 4
      %s5340 = int_to_ptr.vmem [resolvable:$true] %s5339
      %5342 = dma.vmem_to_hbm [thread:$0]  %s5340, 32, %s7, [#allocation4]
    $region61: #{tpu_custom_call.1} parent=1 // pred_fallthru
      _
    // Predicated region
    $region62: #{tpu_custom_call.1} parent=1 // pred_check
      _
    $region63: #{tpu_custom_call.1} parent=1 // pred_check_branch
      %5344 = sbr.rel (0) target = $region65
    $region64: #{tpu_custom_call.1} parent=1 // pred_region
      %5345 = dma.done [#allocation4], 32
    $region65: #{tpu_custom_call.1} parent=1 // pred_fallthru
      _
    %5346 = vsyncpa [#allocation3], 1
    %5347 = vsyncpa [#allocation6], 1
    %5348 = vsyncpa [#allocation9], 1
    %5349 = vsyncpa [#allocation12], 1
    %5350 = vsyncpa [#allocation4], 1

</llo_original>
